<compile_context>
chip_gen: v6e
topology: v6e:2x2x1
jax: 0.10.0
libtpu: 0.0.40
codegen_flags: <defaults>
</compile_context>

<pallas_src>
import functools
import math

import jax
import jax.numpy as jnp
from jax.experimental import pallas as pl
from jax.experimental.pallas import tpu as pltpu


# ----------------------------- Pallas kernels -----------------------------

def _epilogue(y, b_ref, extra_refs, *, act, eps, out_dtype):
    """Fused bias + activation epilogue. `y` is the f32 matmul result (tm, tn)."""
    y = y + b_ref[...]
    if act == "relu":
        y = jnp.maximum(y, 0.0)
    elif act == "log_softmax":
        # Requires tn == N so the full row is resident in this tile.
        m = jnp.max(y, axis=-1, keepdims=True)
        z = y - m
        y = z - jnp.log(jnp.sum(jnp.exp(z), axis=-1, keepdims=True))
    elif act == "add_layernorm":
        # Residual add + LayerNorm over the full (lane) row; f32 math.
        res_ref, g_ref, bt_ref = extra_refs
        y = y + res_ref[...].astype(jnp.float32)
        mu = jnp.mean(y, axis=-1, keepdims=True)
        yc = y - mu
        var = jnp.mean(yc * yc, axis=-1, keepdims=True)
        y = yc * jax.lax.rsqrt(var + eps) * g_ref[...] + bt_ref[...]
    return y.astype(out_dtype)


def _matmul_kernel(*refs, act, eps, n_extra, multi_k):
    """Tiled matmul with fused bias/act/residual-LN epilogue.

    refs = (x, w, b, [res, gamma, beta,] out, [acc]).
    x: (tm, tk) bf16, w: (tk, tn) bf16, b: (1, tn) f32.
    multi_k=False (the common case here): no accumulator scratch, no pl.when.
    """
    x_ref, w_ref, b_ref = refs[:3]
    extra_refs = refs[3:3 + n_extra]
    o_ref = refs[3 + n_extra]

    if multi_k:
        acc_ref = refs[4 + n_extra]

        @pl.when(pl.program_id(2) == 0)
        def _init():
            acc_ref[...] = jnp.zeros_like(acc_ref)

        acc_ref[...] += jnp.dot(x_ref[...], w_ref[...],
                                preferred_element_type=jnp.float32)

        @pl.when(pl.program_id(2) == pl.num_programs(2) - 1)
        def _finalize():
            o_ref[...] = _epilogue(acc_ref[...], b_ref, extra_refs,
                                   act=act, eps=eps, out_dtype=o_ref.dtype)
    else:
        y = jnp.dot(x_ref[...], w_ref[...], preferred_element_type=jnp.float32)
        o_ref[...] = _epilogue(y, b_ref, extra_refs,
                               act=act, eps=eps, out_dtype=o_ref.dtype)


def _attn_kernel(qkv_ref, o_ref, *, nhead, d_model, scale):
    """Causal multi-head attention for one batch.

    qkv_ref: (S, 3*D) bf16 tile (lanes = [Q | K | V], each D wide, heads are
    contiguous D/H-lane chunks).  Scores/softmax/PV stay in VMEM; the causal
    mask is generated with iota (never materialized in HBM).  Output is one
    lane-dense (S, D) tile.
    """
    s_len = qkv_ref.shape[0]
    dh = d_model // nhead
    qkv = qkv_ref[...]                                         # (S, 3D) bf16
    row = jax.lax.broadcasted_iota(jnp.int32, (s_len, s_len), 0)
    col = jax.lax.broadcasted_iota(jnp.int32, (s_len, s_len), 1)
    causal = row >= col
    outs = []
    for h in range(nhead):
        q = qkv[:, h * dh:(h + 1) * dh]                        # (S, dh) bf16
        k = qkv[:, d_model + h * dh:d_model + (h + 1) * dh]    # (S, dh) bf16
        v = qkv[:, 2 * d_model + h * dh:2 * d_model + (h + 1) * dh]
        # bf16 operands, f32 accumulation (native MXU path).
        s = jax.lax.dot_general(q, k, (((1,), (1,)), ((), ())),
                                preferred_element_type=jnp.float32) * scale
        s = jnp.where(causal, s, -1e30)                        # additive causal mask
        m = jnp.max(s, axis=-1, keepdims=True)
        p = jnp.exp(s - m)
        l = jnp.sum(p, axis=-1, keepdims=True)
        o = jnp.dot(p.astype(v.dtype), v, preferred_element_type=jnp.float32)
        outs.append(o * pl.reciprocal(l, approx=True))
    o_ref[...] = jnp.concatenate(outs, axis=-1).astype(o_ref.dtype)


# ------------------------------- wrappers ----------------------------------

def matmul_fused(x, w_kn, b_1n, *, act="none", residual=None, gamma=None,
                 beta=None, out_dtype=jnp.bfloat16, eps=1e-5):
    """y = act(x @ w + b [, residual, gamma, beta]).

    x: (M, K); w: (K, N) bf16 (pre-transposed); b: (1, N) f32.
    act in {"none", "relu", "log_softmax", "add_layernorm"}.
    """
    M, K = x.shape
    Kw, N = w_kn.shape
    assert K == Kw and b_1n.shape == (1, N)
    # >=2 parallel M points so both v7x TensorCores get work.
    tm = 32 if (M % 32 == 0 and M > 32) else M
    tn = N                      # full row per tile (N <= 512 here): fills the
    tk = K if K <= 512 else 512  # 256-wide MXU and keeps LN/log_softmax legal.
    assert M % 8 == 0 and M % tm == 0 and K % tk == 0 and N % 128 == 0
    multi_k = (K // tk) > 1
    if act in ("log_softmax", "add_layernorm"):
        assert tn == N, "epilogue needs the full row in one tile"

    x = x if x.dtype == jnp.bfloat16 else x.astype(jnp.bfloat16)
    w = w_kn if w_kn.dtype == jnp.bfloat16 else w_kn.astype(jnp.bfloat16)

    in_specs = [
        pl.BlockSpec((tm, tk), lambda i, j, k: (i, k)),
        pl.BlockSpec((tk, tn), lambda i, j, k: (k, j)),
        pl.BlockSpec((1, tn), lambda i, j, k: (0, j)),  # k-invariant: no refetch
    ]
    operands = [x, w, b_1n]
    n_extra = 0
    if act == "add_layernorm":
        assert residual is not None and residual.shape == (M, N)
        res = residual if residual.dtype == jnp.bfloat16 else residual.astype(jnp.bfloat16)
        in_specs += [
            pl.BlockSpec((tm, tn), lambda i, j, k: (i, j)),   # residual, like output
            pl.BlockSpec((1, tn), lambda i, j, k: (0, j)),    # gamma
            pl.BlockSpec((1, tn), lambda i, j, k: (0, j)),    # beta
        ]
        operands += [res, gamma, beta]
        n_extra = 3

    kernel = functools.partial(_matmul_kernel, act=act, eps=eps,
                               n_extra=n_extra, multi_k=multi_k)
    return pl.pallas_call(
        kernel,
        out_shape=jax.ShapeDtypeStruct((M, N), out_dtype),
        grid_spec=pltpu.PrefetchScalarGridSpec(
            num_scalar_prefetch=0,
            grid=(M // tm, N // tn, K // tk),
            in_specs=in_specs,
            out_specs=pl.BlockSpec((tm, tn), lambda i, j, k: (i, j)),
            scratch_shapes=([pltpu.VMEM((tm, tn), jnp.float32)] if multi_k else []),
        ),
        compiler_params=pltpu.CompilerParams(
            dimension_semantics=("parallel", "parallel", "arbitrary")),
    )(*operands)


def causal_attention(qkv, *, S, B, H):
    """qkv: (B*S, 3*D) bf16, batch-major rows.  Returns (B*S, D) bf16."""
    M, three_d = qkv.shape
    D = three_d // 3
    assert M == B * S and three_d == 3 * D and D % H == 0 and S % 8 == 0
    # TODO(synk): the full (S, S) score matrix per head lives in VMEM; switch
    # to a flash-style KV-tiled loop if S grows past ~1k (v7x 64 MiB VMEM).
    kernel = functools.partial(_attn_kernel, nhead=H, d_model=D,
                               scale=1.0 / math.sqrt(D // H))
    return pl.pallas_call(
        kernel,
        out_shape=jax.ShapeDtypeStruct((M, D), jnp.bfloat16),
        grid_spec=pltpu.PrefetchScalarGridSpec(
            num_scalar_prefetch=0,
            grid=(B,),
            in_specs=[pl.BlockSpec((S, three_d), lambda b: (b, 0))],
            out_specs=pl.BlockSpec((S, D), lambda b: (b, 0)),
        ),
        compiler_params=pltpu.CompilerParams(dimension_semantics=("parallel",)),
    )(qkv)


# ---------------------------- model components ------------------------------

def _encoder_layer(x, lp, *, S, B, H):
    """One post-norm TransformerEncoderLayer (PyTorch semantics, eval mode).

    x: (B*S, D) bf16, batch-major rows. 5 pallas_calls, no XLA transposes.
    """
    # --- multi-head self attention ---
    qkv = matmul_fused(x, lp["w_in"], lp["b_in"])                  # (M, 3D) bf16
    a = causal_attention(qkv, S=S, B=B, H=H)                       # (M, D) bf16
    # out-proj + residual(x) + LayerNorm1 fused into the matmul epilogue
    x = matmul_fused(a, lp["w_out"], lp["b_out"], act="add_layernorm",
                     residual=x, gamma=lp["ln1_g"], beta=lp["ln1_b"])
    # --- feed-forward ---
    f = matmul_fused(x, lp["w_ff1"], lp["b_ff1"], act="relu")      # linear1 + relu
    # linear2 + residual(x) + LayerNorm2 fused
    x = matmul_fused(f, lp["w_ff2"], lp["b_ff2"], act="add_layernorm",
                     residual=x, gamma=lp["ln2_g"], beta=lp["ln2_b"])
    return x


def transformer_forward(src, params, *, nhead):
    """src: (S, B) int32 token ids -> (S, B, ntoken) log-probabilities."""
    S, B = src.shape
    D = params["emb"].shape[1]
    # TODO(synk): embedding gather + positional-encoding add stay in plain JAX
    # (data-dependent gather; negligible next to the matmul kernels).
    # Dropout layers are identity (inference mode).
    # Batch-major (B, S, D) layout keeps each batch's rows contiguous so the
    # attention kernel reads lane-dense (S, 3D) tiles with zero transposes.
    x = jnp.take(params["emb"], src.T, axis=0) * math.sqrt(D)       # (B, S, D)
    x = x + params["pe"][:S][None, :, :]
    x = x.reshape(B * S, D).astype(jnp.bfloat16)
    for lp in params["layers"]:
        x = _encoder_layer(x, lp, S=S, B=B, H=nhead)
    ntoken = params["w_dec"].shape[1]
    out = matmul_fused(x, params["w_dec"], params["b_dec"],
                       act="log_softmax", out_dtype=jnp.float32)    # (B*S, V) f32
    return out.reshape(B, S, ntoken).transpose(1, 0, 2)             # (S, B, V)


# --------------------------- parameter creation -----------------------------

def make_params(key, ntoken, ninp, nhead, nhid, nlayers, max_len=512):
    D = ninp
    keys = jax.random.split(key, 2 + nlayers)

    # nn.Embedding weight ~ U(-0.1, 0.1) (init_weights)
    emb = jax.random.uniform(keys[0], (ntoken, D), jnp.float32, -0.1, 0.1)

    # Sinusoidal positional-encoding table (PositionalEncoding buffer)
    pos = jnp.arange(max_len, dtype=jnp.float32)[:, None]
    div = jnp.exp(jnp.arange(0, D, 2, dtype=jnp.float32) * (-math.log(10000.0) / D))
    pe = jnp.zeros((max_len, D), jnp.float32)
    pe = pe.at[:, 0::2].set(jnp.sin(pos * div))
    pe = pe.at[:, 1::2].set(jnp.cos(pos * div))

    def linear_w(k, fan_in, fan_out):
        # stored pre-transposed (K, N) and pre-cast to bf16 (MXU layout)
        w = jax.random.normal(k, (fan_in, fan_out), jnp.float32) / math.sqrt(fan_in)
        return w.astype(jnp.bfloat16)

    layers = []
    for l in range(nlayers):
        lk = jax.random.split(keys[2 + l], 6)
        layers.append({
            "w_in":  linear_w(lk[0], D, 3 * D),
            "b_in":  jnp.zeros((1, 3 * D), jnp.float32),
            "w_out": linear_w(lk[1], D, D),
            "b_out": jnp.zeros((1, D), jnp.float32),
            "w_ff1": linear_w(lk[2], D, nhid),
            "b_ff1": 0.01 * jax.random.normal(lk[3], (1, nhid), jnp.float32),
            "w_ff2": linear_w(lk[4], nhid, D),
            "b_ff2": 0.01 * jax.random.normal(lk[5], (1, D), jnp.float32),
            "ln1_g": jnp.ones((1, D), jnp.float32),
            "ln1_b": jnp.zeros((1, D), jnp.float32),
            "ln2_g": jnp.ones((1, D), jnp.float32),
            "ln2_b": jnp.zeros((1, D), jnp.float32),
        })

    # decoder Linear: weight ~ U(-0.1, 0.1), bias = 0 (init_weights)
    w_dec = jax.random.uniform(keys[1], (D, ntoken), jnp.float32,
                               -0.1, 0.1).astype(jnp.bfloat16)
    return {"emb": emb, "pe": pe, "layers": layers,
            "w_dec": w_dec, "b_dec": jnp.zeros((1, ntoken), jnp.float32)}


# ----------------------------------- main ------------------------------------

if __name__ == "__main__":
    NTOKEN, NINP, NHEAD, NHID, NLAYERS = 256, 128, 4, 256, 2
    S, B = 16, 4

    key = jax.random.PRNGKey(0)
    kp, kx = jax.random.split(key)
    params = make_params(kp, NTOKEN, NINP, NHEAD, NHID, NLAYERS)
    src = jax.random.randint(kx, (S, B), 0, NTOKEN, dtype=jnp.int32)

    fwd = jax.jit(functools.partial(transformer_forward, nhead=NHEAD))
    out = jax.block_until_ready(fwd(src, params))

    assert out.shape == (S, B, NTOKEN), out.shape
    assert out.dtype == jnp.float32
    assert bool(jnp.all(jnp.isfinite(out)))
    # log_softmax rows must log-normalize to ~0 and all log-probs are <= 0
    lse = jax.scipy.special.logsumexp(out, axis=-1)
    assert bool(jnp.max(jnp.abs(lse)) < 1e-3), float(jnp.max(jnp.abs(lse)))
    assert bool(jnp.all(out <= 1e-4))
    print("KERNEL_OK")
</pallas_src>

<mosaic_0001>
module attributes {stable_mosaic.version = 11 : i64} {
  func.func @_matmul_kernel(%arg0: i32, %arg1: i32, %arg2: i32, %arg3: memref<32x128xbf16, #tpu.memory_space<vmem>>, %arg4: memref<128x384xbf16, #tpu.memory_space<vmem>>, %arg5: memref<1x384xf32, #tpu.memory_space<vmem>>, %arg6: memref<32x384xbf16, #tpu.memory_space<vmem>>) attributes {dimension_semantics = [#tpu.dimension_semantics<parallel>, #tpu.dimension_semantics<parallel>, #tpu.dimension_semantics<arbitrary>], iteration_bounds = array<i64: 2, 1, 1>, scalar_prefetch = 0 : i64, scratch_operands = 0 : i64, tpu.core_type = #tpu.core_type<tc>, window_params = [{transform_indices = @transform_0, window_bounds = array<i64: 32, 128>}, {transform_indices = @transform_1, window_bounds = array<i64: 128, 384>}, {transform_indices = @transform_2, window_bounds = array<i64: 1, 384>}, {transform_indices = @transform_3, window_bounds = array<i64: 32, 384>}]} {
    %c0 = arith.constant 0 : index
    %c0_0 = arith.constant 0 : index
    %0 = vector.load %arg3[%c0, %c0_0] : memref<32x128xbf16, #tpu.memory_space<vmem>>, vector<32x128xbf16>
    %c0_1 = arith.constant 0 : index
    %c0_2 = arith.constant 0 : index
    %1 = vector.load %arg4[%c0_1, %c0_2] : memref<128x384xbf16, #tpu.memory_space<vmem>>, vector<128x384xbf16>
    %cst = arith.constant dense<0.000000e+00> : vector<32x384xf32>
    %2 = tpu.matmul %0, %1, %cst {dimension_numbers = #tpu.dot_dimension_numbers<[1], [0], [0], [1], [0, 0, 1, 1], [], []>} : vector<32x128xbf16>, vector<128x384xbf16>, vector<32x384xf32> -> vector<32x384xf32>
    %c0_3 = arith.constant 0 : index
    %c0_4 = arith.constant 0 : index
    %3 = vector.load %arg5[%c0_3, %c0_4] : memref<1x384xf32, #tpu.memory_space<vmem>>, vector<1x384xf32>
    %4 = vector.broadcast %3 : vector<1x384xf32> to vector<32x384xf32>
    %5 = arith.addf %2, %4 : vector<32x384xf32>
    %6 = arith.truncf %5 : vector<32x384xf32> to vector<32x384xbf16>
    %c0_5 = arith.constant 0 : index
    %c0_6 = arith.constant 0 : index
    %7 = vector.load %arg6[%c0_5, %c0_6] : memref<32x384xbf16, #tpu.memory_space<vmem>>, vector<32x384xbf16>
    tpu.vector_store %arg6[%c0_5, %c0_6], %6 {strides = array<i32>} : memref<32x384xbf16, #tpu.memory_space<vmem>>, vector<32x384xbf16>,
    return
  }
  func.func @transform_0(%arg0: i32, %arg1: i32, %arg2: i32) -> (i32, i32) {
    %c0_i32 = arith.constant 0 : i32
    return %arg0, %arg2 : i32, i32
  }
  func.func @transform_1(%arg0: i32, %arg1: i32, %arg2: i32) -> (i32, i32) {
    %c0_i32 = arith.constant 0 : i32
    return %arg2, %arg1 : i32, i32
  }
  func.func @transform_2(%arg0: i32, %arg1: i32, %arg2: i32) -> (i32, i32) {
    %c0_i32 = arith.constant 0 : i32
    %c0_i32_0 = arith.constant 0 : i32
    return %c0_i32, %arg1 : i32, i32
  }
  func.func @transform_3(%arg0: i32, %arg1: i32, %arg2: i32) -> (i32, i32) {
    %c0_i32 = arith.constant 0 : i32
    return %arg0, %arg1 : i32, i32
  }
}

module attributes {stable_mosaic.version = 11 : i64} {
  func.func @_attn_kernel(%arg0: i32, %arg1: memref<16x384xbf16, #tpu.memory_space<vmem>>, %arg2: memref<16x128xbf16, #tpu.memory_space<vmem>>) attributes {dimension_semantics = [#tpu.dimension_semantics<parallel>], iteration_bounds = array<i64: 4>, scalar_prefetch = 0 : i64, scratch_operands = 0 : i64, tpu.core_type = #tpu.core_type<tc>, window_params = [{transform_indices = @transform_0, window_bounds = array<i64: 16, 384>}, {transform_indices = @transform_1, window_bounds = array<i64: 16, 128>}]} {
    %c0 = arith.constant 0 : index
    %c0_0 = arith.constant 0 : index
    %0 = vector.load %arg1[%c0, %c0_0] : memref<16x384xbf16, #tpu.memory_space<vmem>>, vector<16x384xbf16>
    %1 = tpu.iota {dimensions = array<i32: 0>} : vector<16x16xi32>
    %2 = tpu.iota {dimensions = array<i32: 1>} : vector<16x16xi32>
    %3 = arith.cmpi sge, %1, %2 : vector<16x16xi32>
    %4 = vector.extract_strided_slice %0 {offsets = [0, 0], sizes = [16, 32], strides = [1, 1]} : vector<16x384xbf16> to vector<16x32xbf16>
    %5 = vector.extract_strided_slice %0 {offsets = [0, 128], sizes = [16, 32], strides = [1, 1]} : vector<16x384xbf16> to vector<16x32xbf16>
    %6 = vector.extract_strided_slice %0 {offsets = [0, 256], sizes = [16, 32], strides = [1, 1]} : vector<16x384xbf16> to vector<16x32xbf16>
    %cst = arith.constant dense<0.000000e+00> : vector<16x16xf32>
    %7 = tpu.matmul %4, %5, %cst {dimension_numbers = #tpu.dot_dimension_numbers<[1], [1], [0], [0], [0, 0, 1, 0], [], []>} : vector<16x32xbf16>, vector<16x32xbf16>, vector<16x16xf32> -> vector<16x16xf32>
    %cst_1 = arith.constant 0.176776692 : f32
    %8 = vector.broadcast %cst_1 : f32 to vector<16x16xf32>
    %9 = arith.mulf %7, %8 : vector<16x16xf32>
    %cst_2 = arith.constant -1.000000e+30 : f32
    %10 = vector.broadcast %cst_2 : f32 to vector<16x16xf32>
    %11 = arith.select %3, %9, %10 : vector<16x16xi1>, vector<16x16xf32>
    %cst_3 = arith.constant dense<0xFF800000> : vector<16xf32>
    %12 = vector.multi_reduction <maximumf>, %11, %cst_3 [1] : vector<16x16xf32> to vector<16xf32>
    %13 = vector.shape_cast %12 : vector<16xf32> to vector<16x1xf32>
    %14 = vector.broadcast %13 : vector<16x1xf32> to vector<16x16xf32>
    %15 = arith.subf %11, %14 : vector<16x16xf32>
    %16 = math.exp %15 : vector<16x16xf32>
    %cst_4 = arith.constant dense<0.000000e+00> : vector<16xf32>
    %17 = vector.multi_reduction <add>, %16, %cst_4 [1] : vector<16x16xf32> to vector<16xf32>
    %18 = vector.shape_cast %17 : vector<16xf32> to vector<16x1xf32>
    %19 = arith.truncf %16 : vector<16x16xf32> to vector<16x16xbf16>
    %cst_5 = arith.constant dense<0.000000e+00> : vector<16x32xf32>
    %20 = tpu.matmul %19, %6, %cst_5 {dimension_numbers = #tpu.dot_dimension_numbers<[1], [0], [0], [1], [0, 0, 1, 1], [], []>} : vector<16x16xbf16>, vector<16x32xbf16>, vector<16x32xf32> -> vector<16x32xf32>
    %21 = tpu.reciprocal %18 {approx = true} : vector<16x1xf32> -> vector<16x1xf32>
    %22 = vector.broadcast %21 : vector<16x1xf32> to vector<16x32xf32>
    %23 = arith.mulf %20, %22 : vector<16x32xf32>
    %24 = vector.extract_strided_slice %0 {offsets = [0, 32], sizes = [16, 32], strides = [1, 1]} : vector<16x384xbf16> to vector<16x32xbf16>
    %25 = vector.extract_strided_slice %0 {offsets = [0, 160], sizes = [16, 32], strides = [1, 1]} : vector<16x384xbf16> to vector<16x32xbf16>
    %26 = vector.extract_strided_slice %0 {offsets = [0, 288], sizes = [16, 32], strides = [1, 1]} : vector<16x384xbf16> to vector<16x32xbf16>
    %cst_6 = arith.constant dense<0.000000e+00> : vector<16x16xf32>
    %27 = tpu.matmul %24, %25, %cst_6 {dimension_numbers = #tpu.dot_dimension_numbers<[1], [1], [0], [0], [0, 0, 1, 0], [], []>} : vector<16x32xbf16>, vector<16x32xbf16>, vector<16x16xf32> -> vector<16x16xf32>
    %cst_7 = arith.constant 0.176776692 : f32
    %28 = vector.broadcast %cst_7 : f32 to vector<16x16xf32>
    %29 = arith.mulf %27, %28 : vector<16x16xf32>
    %cst_8 = arith.constant -1.000000e+30 : f32
    %30 = vector.broadcast %cst_8 : f32 to vector<16x16xf32>
    %31 = arith.select %3, %29, %30 : vector<16x16xi1>, vector<16x16xf32>
    %cst_9 = arith.constant dense<0xFF800000> : vector<16xf32>
    %32 = vector.multi_reduction <maximumf>, %31, %cst_9 [1] : vector<16x16xf32> to vector<16xf32>
    %33 = vector.shape_cast %32 : vector<16xf32> to vector<16x1xf32>
    %34 = vector.broadcast %33 : vector<16x1xf32> to vector<16x16xf32>
    %35 = arith.subf %31, %34 : vector<16x16xf32>
    %36 = math.exp %35 : vector<16x16xf32>
    %cst_10 = arith.constant dense<0.000000e+00> : vector<16xf32>
    %37 = vector.multi_reduction <add>, %36, %cst_10 [1] : vector<16x16xf32> to vector<16xf32>
    %38 = vector.shape_cast %37 : vector<16xf32> to vector<16x1xf32>
    %39 = arith.truncf %36 : vector<16x16xf32> to vector<16x16xbf16>
    %cst_11 = arith.constant dense<0.000000e+00> : vector<16x32xf32>
    %40 = tpu.matmul %39, %26, %cst_11 {dimension_numbers = #tpu.dot_dimension_numbers<[1], [0], [0], [1], [0, 0, 1, 1], [], []>} : vector<16x16xbf16>, vector<16x32xbf16>, vector<16x32xf32> -> vector<16x32xf32>
    %41 = tpu.reciprocal %38 {approx = true} : vector<16x1xf32> -> vector<16x1xf32>
    %42 = vector.broadcast %41 : vector<16x1xf32> to vector<16x32xf32>
    %43 = arith.mulf %40, %42 : vector<16x32xf32>
    %44 = vector.extract_strided_slice %0 {offsets = [0, 64], sizes = [16, 32], strides = [1, 1]} : vector<16x384xbf16> to vector<16x32xbf16>
    %45 = vector.extract_strided_slice %0 {offsets = [0, 192], sizes = [16, 32], strides = [1, 1]} : vector<16x384xbf16> to vector<16x32xbf16>
    %46 = vector.extract_strided_slice %0 {offsets = [0, 320], sizes = [16, 32], strides = [1, 1]} : vector<16x384xbf16> to vector<16x32xbf16>
    %cst_12 = arith.constant dense<0.000000e+00> : vector<16x16xf32>
    %47 = tpu.matmul %44, %45, %cst_12 {dimension_numbers = #tpu.dot_dimension_numbers<[1], [1], [0], [0], [0, 0, 1, 0], [], []>} : vector<16x32xbf16>, vector<16x32xbf16>, vector<16x16xf32> -> vector<16x16xf32>
    %cst_13 = arith.constant 0.176776692 : f32
    %48 = vector.broadcast %cst_13 : f32 to vector<16x16xf32>
    %49 = arith.mulf %47, %48 : vector<16x16xf32>
    %cst_14 = arith.constant -1.000000e+30 : f32
    %50 = vector.broadcast %cst_14 : f32 to vector<16x16xf32>
    %51 = arith.select %3, %49, %50 : vector<16x16xi1>, vector<16x16xf32>
    %cst_15 = arith.constant dense<0xFF800000> : vector<16xf32>
    %52 = vector.multi_reduction <maximumf>, %51, %cst_15 [1] : vector<16x16xf32> to vector<16xf32>
    %53 = vector.shape_cast %52 : vector<16xf32> to vector<16x1xf32>
    %54 = vector.broadcast %53 : vector<16x1xf32> to vector<16x16xf32>
    %55 = arith.subf %51, %54 : vector<16x16xf32>
    %56 = math.exp %55 : vector<16x16xf32>
    %cst_16 = arith.constant dense<0.000000e+00> : vector<16xf32>
    %57 = vector.multi_reduction <add>, %56, %cst_16 [1] : vector<16x16xf32> to vector<16xf32>
    %58 = vector.shape_cast %57 : vector<16xf32> to vector<16x1xf32>
    %59 = arith.truncf %56 : vector<16x16xf32> to vector<16x16xbf16>
    %cst_17 = arith.constant dense<0.000000e+00> : vector<16x32xf32>
    %60 = tpu.matmul %59, %46, %cst_17 {dimension_numbers = #tpu.dot_dimension_numbers<[1], [0], [0], [1], [0, 0, 1, 1], [], []>} : vector<16x16xbf16>, vector<16x32xbf16>, vector<16x32xf32> -> vector<16x32xf32>
    %61 = tpu.reciprocal %58 {approx = true} : vector<16x1xf32> -> vector<16x1xf32>
    %62 = vector.broadcast %61 : vector<16x1xf32> to vector<16x32xf32>
    %63 = arith.mulf %60, %62 : vector<16x32xf32>
    %64 = vector.extract_strided_slice %0 {offsets = [0, 96], sizes = [16, 32], strides = [1, 1]} : vector<16x384xbf16> to vector<16x32xbf16>
    %65 = vector.extract_strided_slice %0 {offsets = [0, 224], sizes = [16, 32], strides = [1, 1]} : vector<16x384xbf16> to vector<16x32xbf16>
    %66 = vector.extract_strided_slice %0 {offsets = [0, 352], sizes = [16, 32], strides = [1, 1]} : vector<16x384xbf16> to vector<16x32xbf16>
    %cst_18 = arith.constant dense<0.000000e+00> : vector<16x16xf32>
    %67 = tpu.matmul %64, %65, %cst_18 {dimension_numbers = #tpu.dot_dimension_numbers<[1], [1], [0], [0], [0, 0, 1, 0], [], []>} : vector<16x32xbf16>, vector<16x32xbf16>, vector<16x16xf32> -> vector<16x16xf32>
    %cst_19 = arith.constant 0.176776692 : f32
    %68 = vector.broadcast %cst_19 : f32 to vector<16x16xf32>
    %69 = arith.mulf %67, %68 : vector<16x16xf32>
    %cst_20 = arith.constant -1.000000e+30 : f32
    %70 = vector.broadcast %cst_20 : f32 to vector<16x16xf32>
    %71 = arith.select %3, %69, %70 : vector<16x16xi1>, vector<16x16xf32>
    %cst_21 = arith.constant dense<0xFF800000> : vector<16xf32>
    %72 = vector.multi_reduction <maximumf>, %71, %cst_21 [1] : vector<16x16xf32> to vector<16xf32>
    %73 = vector.shape_cast %72 : vector<16xf32> to vector<16x1xf32>
    %74 = vector.broadcast %73 : vector<16x1xf32> to vector<16x16xf32>
    %75 = arith.subf %71, %74 : vector<16x16xf32>
    %76 = math.exp %75 : vector<16x16xf32>
    %cst_22 = arith.constant dense<0.000000e+00> : vector<16xf32>
    %77 = vector.multi_reduction <add>, %76, %cst_22 [1] : vector<16x16xf32> to vector<16xf32>
    %78 = vector.shape_cast %77 : vector<16xf32> to vector<16x1xf32>
    %79 = arith.truncf %76 : vector<16x16xf32> to vector<16x16xbf16>
    %cst_23 = arith.constant dense<0.000000e+00> : vector<16x32xf32>
    %80 = tpu.matmul %79, %66, %cst_23 {dimension_numbers = #tpu.dot_dimension_numbers<[1], [0], [0], [1], [0, 0, 1, 1], [], []>} : vector<16x16xbf16>, vector<16x32xbf16>, vector<16x32xf32> -> vector<16x32xf32>
    %81 = tpu.reciprocal %78 {approx = true} : vector<16x1xf32> -> vector<16x1xf32>
    %82 = vector.broadcast %81 : vector<16x1xf32> to vector<16x32xf32>
    %83 = arith.mulf %80, %82 : vector<16x32xf32>
    %84 = tpu.concatenate %23, %43, %63, %83 in 1 : vector<16x32xf32>, vector<16x32xf32>, vector<16x32xf32>, vector<16x32xf32> -> vector<16x128xf32>
    %85 = arith.truncf %84 : vector<16x128xf32> to vector<16x128xbf16>
    %c0_24 = arith.constant 0 : index
    %c0_25 = arith.constant 0 : index
    %86 = vector.load %arg2[%c0_24, %c0_25] : memref<16x128xbf16, #tpu.memory_space<vmem>>, vector<16x128xbf16>
    tpu.vector_store %arg2[%c0_24, %c0_25], %85 {strides = array<i32>} : memref<16x128xbf16, #tpu.memory_space<vmem>>, vector<16x128xbf16>,
    return
  }
  func.func @transform_0(%arg0: i32) -> (i32, i32) {
    %c0_i32 = arith.constant 0 : i32
    %c0_i32_0 = arith.constant 0 : i32
    return %arg0, %c0_i32 : i32, i32
  }
  func.func @transform_1(%arg0: i32) -> (i32, i32) {
    %c0_i32 = arith.constant 0 : i32
    %c0_i32_0 = arith.constant 0 : i32
    return %arg0, %c0_i32 : i32, i32
  }
}

module attributes {stable_mosaic.version = 11 : i64} {
  func.func @_matmul_kernel(%arg0: i32, %arg1: i32, %arg2: i32, %arg3: memref<32x128xbf16, #tpu.memory_space<vmem>>, %arg4: memref<128x128xbf16, #tpu.memory_space<vmem>>, %arg5: memref<1x128xf32, #tpu.memory_space<vmem>>, %arg6: memref<32x128xbf16, #tpu.memory_space<vmem>>, %arg7: memref<1x128xf32, #tpu.memory_space<vmem>>, %arg8: memref<1x128xf32, #tpu.memory_space<vmem>>, %arg9: memref<32x128xbf16, #tpu.memory_space<vmem>>) attributes {dimension_semantics = [#tpu.dimension_semantics<parallel>, #tpu.dimension_semantics<parallel>, #tpu.dimension_semantics<arbitrary>], iteration_bounds = array<i64: 2, 1, 1>, scalar_prefetch = 0 : i64, scratch_operands = 0 : i64, tpu.core_type = #tpu.core_type<tc>, window_params = [{transform_indices = @transform_0, window_bounds = array<i64: 32, 128>}, {transform_indices = @transform_1, window_bounds = array<i64: 128, 128>}, {transform_indices = @transform_2, window_bounds = array<i64: 1, 128>}, {transform_indices = @transform_3, window_bounds = array<i64: 32, 128>}, {transform_indices = @transform_4, window_bounds = array<i64: 1, 128>}, {transform_indices = @transform_5, window_bounds = array<i64: 1, 128>}, {transform_indices = @transform_6, window_bounds = array<i64: 32, 128>}]} {
    %c0 = arith.constant 0 : index
    %c0_0 = arith.constant 0 : index
    %0 = vector.load %arg3[%c0, %c0_0] : memref<32x128xbf16, #tpu.memory_space<vmem>>, vector<32x128xbf16>
    %c0_1 = arith.constant 0 : index
    %c0_2 = arith.constant 0 : index
    %1 = vector.load %arg4[%c0_1, %c0_2] : memref<128x128xbf16, #tpu.memory_space<vmem>>, vector<128x128xbf16>
    %cst = arith.constant dense<0.000000e+00> : vector<32x128xf32>
    %2 = tpu.matmul %0, %1, %cst {dimension_numbers = #tpu.dot_dimension_numbers<[1], [0], [0], [1], [0, 0, 1, 1], [], []>} : vector<32x128xbf16>, vector<128x128xbf16>, vector<32x128xf32> -> vector<32x128xf32>
    %c0_3 = arith.constant 0 : index
    %c0_4 = arith.constant 0 : index
    %3 = vector.load %arg5[%c0_3, %c0_4] : memref<1x128xf32, #tpu.memory_space<vmem>>, vector<1x128xf32>
    %4 = vector.broadcast %3 : vector<1x128xf32> to vector<32x128xf32>
    %5 = arith.addf %2, %4 : vector<32x128xf32>
    %c0_5 = arith.constant 0 : index
    %c0_6 = arith.constant 0 : index
    %6 = vector.load %arg6[%c0_5, %c0_6] : memref<32x128xbf16, #tpu.memory_space<vmem>>, vector<32x128xbf16>
    %7 = arith.extf %6 : vector<32x128xbf16> to vector<32x128xf32>
    %8 = arith.addf %5, %7 : vector<32x128xf32>
    %cst_7 = arith.constant dense<0.000000e+00> : vector<32xf32>
    %9 = vector.multi_reduction <add>, %8, %cst_7 [1] : vector<32x128xf32> to vector<32xf32>
    %10 = vector.shape_cast %9 : vector<32xf32> to vector<32x1xf32>
    %cst_8 = arith.constant 1.280000e+02 : f32
    %11 = vector.broadcast %cst_8 : f32 to vector<32x1xf32>
    %12 = arith.divf %10, %11 : vector<32x1xf32>
    %13 = vector.broadcast %12 : vector<32x1xf32> to vector<32x128xf32>
    %14 = arith.subf %8, %13 : vector<32x128xf32>
    %15 = arith.mulf %14, %14 : vector<32x128xf32>
    %cst_9 = arith.constant dense<0.000000e+00> : vector<32xf32>
    %16 = vector.multi_reduction <add>, %15, %cst_9 [1] : vector<32x128xf32> to vector<32xf32>
    %17 = vector.shape_cast %16 : vector<32xf32> to vector<32x1xf32>
    %cst_10 = arith.constant 1.280000e+02 : f32
    %18 = vector.broadcast %cst_10 : f32 to vector<32x1xf32>
    %19 = arith.divf %17, %18 : vector<32x1xf32>
    %cst_11 = arith.constant 9.99999974E-6 : f32
    %20 = vector.broadcast %cst_11 : f32 to vector<32x1xf32>
    %21 = arith.addf %19, %20 : vector<32x1xf32>
    %22 = math.rsqrt %21 : vector<32x1xf32>
    %23 = vector.broadcast %22 : vector<32x1xf32> to vector<32x128xf32>
    %24 = arith.mulf %14, %23 : vector<32x128xf32>
    %c0_12 = arith.constant 0 : index
    %c0_13 = arith.constant 0 : index
    %25 = vector.load %arg7[%c0_12, %c0_13] : memref<1x128xf32, #tpu.memory_space<vmem>>, vector<1x128xf32>
    %26 = vector.broadcast %25 : vector<1x128xf32> to vector<32x128xf32>
    %27 = arith.mulf %24, %26 : vector<32x128xf32>
    %c0_14 = arith.constant 0 : index
    %c0_15 = arith.constant 0 : index
    %28 = vector.load %arg8[%c0_14, %c0_15] : memref<1x128xf32, #tpu.memory_space<vmem>>, vector<1x128xf32>
    %29 = vector.broadcast %28 : vector<1x128xf32> to vector<32x128xf32>
    %30 = arith.addf %27, %29 : vector<32x128xf32>
    %31 = arith.truncf %30 : vector<32x128xf32> to vector<32x128xbf16>
    %c0_16 = arith.constant 0 : index
    %c0_17 = arith.constant 0 : index
    %32 = vector.load %arg9[%c0_16, %c0_17] : memref<32x128xbf16, #tpu.memory_space<vmem>>, vector<32x128xbf16>
    tpu.vector_store %arg9[%c0_16, %c0_17], %31 {strides = array<i32>} : memref<32x128xbf16, #tpu.memory_space<vmem>>, vector<32x128xbf16>,
    return
  }
  func.func @transform_0(%arg0: i32, %arg1: i32, %arg2: i32) -> (i32, i32) {
    %c0_i32 = arith.constant 0 : i32
    return %arg0, %arg2 : i32, i32
  }
  func.func @transform_1(%arg0: i32, %arg1: i32, %arg2: i32) -> (i32, i32) {
    %c0_i32 = arith.constant 0 : i32
    return %arg2, %arg1 : i32, i32
  }
  func.func @transform_2(%arg0: i32, %arg1: i32, %arg2: i32) -> (i32, i32) {
    %c0_i32 = arith.constant 0 : i32
    %c0_i32_0 = arith.constant 0 : i32
    return %c0_i32, %arg1 : i32, i32
  }
  func.func @transform_3(%arg0: i32, %arg1: i32, %arg2: i32) -> (i32, i32) {
    %c0_i32 = arith.constant 0 : i32
    return %arg0, %arg1 : i32, i32
  }
  func.func @transform_4(%arg0: i32, %arg1: i32, %arg2: i32) -> (i32, i32) {
    %c0_i32 = arith.constant 0 : i32
    %c0_i32_0 = arith.constant 0 : i32
    return %c0_i32, %arg1 : i32, i32
  }
  func.func @transform_5(%arg0: i32, %arg1: i32, %arg2: i32) -> (i32, i32) {
    %c0_i32 = arith.constant 0 : i32
    %c0_i32_0 = arith.constant 0 : i32
    return %c0_i32, %arg1 : i32, i32
  }
  func.func @transform_6(%arg0: i32, %arg1: i32, %arg2: i32) -> (i32, i32) {
    %c0_i32 = arith.constant 0 : i32
    return %arg0, %arg1 : i32, i32
  }
}

module attributes {stable_mosaic.version = 11 : i64} {
  func.func @_matmul_kernel(%arg0: i32, %arg1: i32, %arg2: i32, %arg3: memref<32x128xbf16, #tpu.memory_space<vmem>>, %arg4: memref<128x256xbf16, #tpu.memory_space<vmem>>, %arg5: memref<1x256xf32, #tpu.memory_space<vmem>>, %arg6: memref<32x256xbf16, #tpu.memory_space<vmem>>) attributes {dimension_semantics = [#tpu.dimension_semantics<parallel>, #tpu.dimension_semantics<parallel>, #tpu.dimension_semantics<arbitrary>], iteration_bounds = array<i64: 2, 1, 1>, scalar_prefetch = 0 : i64, scratch_operands = 0 : i64, tpu.core_type = #tpu.core_type<tc>, window_params = [{transform_indices = @transform_0, window_bounds = array<i64: 32, 128>}, {transform_indices = @transform_1, window_bounds = array<i64: 128, 256>}, {transform_indices = @transform_2, window_bounds = array<i64: 1, 256>}, {transform_indices = @transform_3, window_bounds = array<i64: 32, 256>}]} {
    %c0 = arith.constant 0 : index
    %c0_0 = arith.constant 0 : index
    %0 = vector.load %arg3[%c0, %c0_0] : memref<32x128xbf16, #tpu.memory_space<vmem>>, vector<32x128xbf16>
    %c0_1 = arith.constant 0 : index
    %c0_2 = arith.constant 0 : index
    %1 = vector.load %arg4[%c0_1, %c0_2] : memref<128x256xbf16, #tpu.memory_space<vmem>>, vector<128x256xbf16>
    %cst = arith.constant dense<0.000000e+00> : vector<32x256xf32>
    %2 = tpu.matmul %0, %1, %cst {dimension_numbers = #tpu.dot_dimension_numbers<[1], [0], [0], [1], [0, 0, 1, 1], [], []>} : vector<32x128xbf16>, vector<128x256xbf16>, vector<32x256xf32> -> vector<32x256xf32>
    %c0_3 = arith.constant 0 : index
    %c0_4 = arith.constant 0 : index
    %3 = vector.load %arg5[%c0_3, %c0_4] : memref<1x256xf32, #tpu.memory_space<vmem>>, vector<1x256xf32>
    %4 = vector.broadcast %3 : vector<1x256xf32> to vector<32x256xf32>
    %5 = arith.addf %2, %4 : vector<32x256xf32>
    %cst_5 = arith.constant 0.000000e+00 : f32
    %6 = vector.broadcast %cst_5 : f32 to vector<32x256xf32>
    %7 = arith.maximumf %5, %6 : vector<32x256xf32>
    %8 = arith.truncf %7 : vector<32x256xf32> to vector<32x256xbf16>
    %c0_6 = arith.constant 0 : index
    %c0_7 = arith.constant 0 : index
    %9 = vector.load %arg6[%c0_6, %c0_7] : memref<32x256xbf16, #tpu.memory_space<vmem>>, vector<32x256xbf16>
    tpu.vector_store %arg6[%c0_6, %c0_7], %8 {strides = array<i32>} : memref<32x256xbf16, #tpu.memory_space<vmem>>, vector<32x256xbf16>,
    return
  }
  func.func @transform_0(%arg0: i32, %arg1: i32, %arg2: i32) -> (i32, i32) {
    %c0_i32 = arith.constant 0 : i32
    return %arg0, %arg2 : i32, i32
  }
  func.func @transform_1(%arg0: i32, %arg1: i32, %arg2: i32) -> (i32, i32) {
    %c0_i32 = arith.constant 0 : i32
    return %arg2, %arg1 : i32, i32
  }
  func.func @transform_2(%arg0: i32, %arg1: i32, %arg2: i32) -> (i32, i32) {
    %c0_i32 = arith.constant 0 : i32
    %c0_i32_0 = arith.constant 0 : i32
    return %c0_i32, %arg1 : i32, i32
  }
  func.func @transform_3(%arg0: i32, %arg1: i32, %arg2: i32) -> (i32, i32) {
    %c0_i32 = arith.constant 0 : i32
    return %arg0, %arg1 : i32, i32
  }
}

module attributes {stable_mosaic.version = 11 : i64} {
  func.func @_matmul_kernel(%arg0: i32, %arg1: i32, %arg2: i32, %arg3: memref<32x256xbf16, #tpu.memory_space<vmem>>, %arg4: memref<256x128xbf16, #tpu.memory_space<vmem>>, %arg5: memref<1x128xf32, #tpu.memory_space<vmem>>, %arg6: memref<32x128xbf16, #tpu.memory_space<vmem>>, %arg7: memref<1x128xf32, #tpu.memory_space<vmem>>, %arg8: memref<1x128xf32, #tpu.memory_space<vmem>>, %arg9: memref<32x128xbf16, #tpu.memory_space<vmem>>) attributes {dimension_semantics = [#tpu.dimension_semantics<parallel>, #tpu.dimension_semantics<parallel>, #tpu.dimension_semantics<arbitrary>], iteration_bounds = array<i64: 2, 1, 1>, scalar_prefetch = 0 : i64, scratch_operands = 0 : i64, tpu.core_type = #tpu.core_type<tc>, window_params = [{transform_indices = @transform_0, window_bounds = array<i64: 32, 256>}, {transform_indices = @transform_1, window_bounds = array<i64: 256, 128>}, {transform_indices = @transform_2, window_bounds = array<i64: 1, 128>}, {transform_indices = @transform_3, window_bounds = array<i64: 32, 128>}, {transform_indices = @transform_4, window_bounds = array<i64: 1, 128>}, {transform_indices = @transform_5, window_bounds = array<i64: 1, 128>}, {transform_indices = @transform_6, window_bounds = array<i64: 32, 128>}]} {
    %c0 = arith.constant 0 : index
    %c0_0 = arith.constant 0 : index
    %0 = vector.load %arg3[%c0, %c0_0] : memref<32x256xbf16, #tpu.memory_space<vmem>>, vector<32x256xbf16>
    %c0_1 = arith.constant 0 : index
    %c0_2 = arith.constant 0 : index
    %1 = vector.load %arg4[%c0_1, %c0_2] : memref<256x128xbf16, #tpu.memory_space<vmem>>, vector<256x128xbf16>
    %cst = arith.constant dense<0.000000e+00> : vector<32x128xf32>
    %2 = tpu.matmul %0, %1, %cst {dimension_numbers = #tpu.dot_dimension_numbers<[1], [0], [0], [1], [0, 0, 1, 1], [], []>} : vector<32x256xbf16>, vector<256x128xbf16>, vector<32x128xf32> -> vector<32x128xf32>
    %c0_3 = arith.constant 0 : index
    %c0_4 = arith.constant 0 : index
    %3 = vector.load %arg5[%c0_3, %c0_4] : memref<1x128xf32, #tpu.memory_space<vmem>>, vector<1x128xf32>
    %4 = vector.broadcast %3 : vector<1x128xf32> to vector<32x128xf32>
    %5 = arith.addf %2, %4 : vector<32x128xf32>
    %c0_5 = arith.constant 0 : index
    %c0_6 = arith.constant 0 : index
    %6 = vector.load %arg6[%c0_5, %c0_6] : memref<32x128xbf16, #tpu.memory_space<vmem>>, vector<32x128xbf16>
    %7 = arith.extf %6 : vector<32x128xbf16> to vector<32x128xf32>
    %8 = arith.addf %5, %7 : vector<32x128xf32>
    %cst_7 = arith.constant dense<0.000000e+00> : vector<32xf32>
    %9 = vector.multi_reduction <add>, %8, %cst_7 [1] : vector<32x128xf32> to vector<32xf32>
    %10 = vector.shape_cast %9 : vector<32xf32> to vector<32x1xf32>
    %cst_8 = arith.constant 1.280000e+02 : f32
    %11 = vector.broadcast %cst_8 : f32 to vector<32x1xf32>
    %12 = arith.divf %10, %11 : vector<32x1xf32>
    %13 = vector.broadcast %12 : vector<32x1xf32> to vector<32x128xf32>
    %14 = arith.subf %8, %13 : vector<32x128xf32>
    %15 = arith.mulf %14, %14 : vector<32x128xf32>
    %cst_9 = arith.constant dense<0.000000e+00> : vector<32xf32>
    %16 = vector.multi_reduction <add>, %15, %cst_9 [1] : vector<32x128xf32> to vector<32xf32>
    %17 = vector.shape_cast %16 : vector<32xf32> to vector<32x1xf32>
    %cst_10 = arith.constant 1.280000e+02 : f32
    %18 = vector.broadcast %cst_10 : f32 to vector<32x1xf32>
    %19 = arith.divf %17, %18 : vector<32x1xf32>
    %cst_11 = arith.constant 9.99999974E-6 : f32
    %20 = vector.broadcast %cst_11 : f32 to vector<32x1xf32>
    %21 = arith.addf %19, %20 : vector<32x1xf32>
    %22 = math.rsqrt %21 : vector<32x1xf32>
    %23 = vector.broadcast %22 : vector<32x1xf32> to vector<32x128xf32>
    %24 = arith.mulf %14, %23 : vector<32x128xf32>
    %c0_12 = arith.constant 0 : index
    %c0_13 = arith.constant 0 : index
    %25 = vector.load %arg7[%c0_12, %c0_13] : memref<1x128xf32, #tpu.memory_space<vmem>>, vector<1x128xf32>
    %26 = vector.broadcast %25 : vector<1x128xf32> to vector<32x128xf32>
    %27 = arith.mulf %24, %26 : vector<32x128xf32>
    %c0_14 = arith.constant 0 : index
    %c0_15 = arith.constant 0 : index
    %28 = vector.load %arg8[%c0_14, %c0_15] : memref<1x128xf32, #tpu.memory_space<vmem>>, vector<1x128xf32>
    %29 = vector.broadcast %28 : vector<1x128xf32> to vector<32x128xf32>
    %30 = arith.addf %27, %29 : vector<32x128xf32>
    %31 = arith.truncf %30 : vector<32x128xf32> to vector<32x128xbf16>
    %c0_16 = arith.constant 0 : index
    %c0_17 = arith.constant 0 : index
    %32 = vector.load %arg9[%c0_16, %c0_17] : memref<32x128xbf16, #tpu.memory_space<vmem>>, vector<32x128xbf16>
    tpu.vector_store %arg9[%c0_16, %c0_17], %31 {strides = array<i32>} : memref<32x128xbf16, #tpu.memory_space<vmem>>, vector<32x128xbf16>,
    return
  }
  func.func @transform_0(%arg0: i32, %arg1: i32, %arg2: i32) -> (i32, i32) {
    %c0_i32 = arith.constant 0 : i32
    return %arg0, %arg2 : i32, i32
  }
  func.func @transform_1(%arg0: i32, %arg1: i32, %arg2: i32) -> (i32, i32) {
    %c0_i32 = arith.constant 0 : i32
    return %arg2, %arg1 : i32, i32
  }
  func.func @transform_2(%arg0: i32, %arg1: i32, %arg2: i32) -> (i32, i32) {
    %c0_i32 = arith.constant 0 : i32
    %c0_i32_0 = arith.constant 0 : i32
    return %c0_i32, %arg1 : i32, i32
  }
  func.func @transform_3(%arg0: i32, %arg1: i32, %arg2: i32) -> (i32, i32) {
    %c0_i32 = arith.constant 0 : i32
    return %arg0, %arg1 : i32, i32
  }
  func.func @transform_4(%arg0: i32, %arg1: i32, %arg2: i32) -> (i32, i32) {
    %c0_i32 = arith.constant 0 : i32
    %c0_i32_0 = arith.constant 0 : i32
    return %c0_i32, %arg1 : i32, i32
  }
  func.func @transform_5(%arg0: i32, %arg1: i32, %arg2: i32) -> (i32, i32) {
    %c0_i32 = arith.constant 0 : i32
    %c0_i32_0 = arith.constant 0 : i32
    return %c0_i32, %arg1 : i32, i32
  }
  func.func @transform_6(%arg0: i32, %arg1: i32, %arg2: i32) -> (i32, i32) {
    %c0_i32 = arith.constant 0 : i32
    return %arg0, %arg1 : i32, i32
  }
}

module attributes {stable_mosaic.version = 11 : i64} {
  func.func @_matmul_kernel(%arg0: i32, %arg1: i32, %arg2: i32, %arg3: memref<32x128xbf16, #tpu.memory_space<vmem>>, %arg4: memref<128x256xbf16, #tpu.memory_space<vmem>>, %arg5: memref<1x256xf32, #tpu.memory_space<vmem>>, %arg6: memref<32x256xf32, #tpu.memory_space<vmem>>) attributes {dimension_semantics = [#tpu.dimension_semantics<parallel>, #tpu.dimension_semantics<parallel>, #tpu.dimension_semantics<arbitrary>], iteration_bounds = array<i64: 2, 1, 1>, scalar_prefetch = 0 : i64, scratch_operands = 0 : i64, tpu.core_type = #tpu.core_type<tc>, window_params = [{transform_indices = @transform_0, window_bounds = array<i64: 32, 128>}, {transform_indices = @transform_1, window_bounds = array<i64: 128, 256>}, {transform_indices = @transform_2, window_bounds = array<i64: 1, 256>}, {transform_indices = @transform_3, window_bounds = array<i64: 32, 256>}]} {
    %c0 = arith.constant 0 : index
    %c0_0 = arith.constant 0 : index
    %0 = vector.load %arg3[%c0, %c0_0] : memref<32x128xbf16, #tpu.memory_space<vmem>>, vector<32x128xbf16>
    %c0_1 = arith.constant 0 : index
    %c0_2 = arith.constant 0 : index
    %1 = vector.load %arg4[%c0_1, %c0_2] : memref<128x256xbf16, #tpu.memory_space<vmem>>, vector<128x256xbf16>
    %cst = arith.constant dense<0.000000e+00> : vector<32x256xf32>
    %2 = tpu.matmul %0, %1, %cst {dimension_numbers = #tpu.dot_dimension_numbers<[1], [0], [0], [1], [0, 0, 1, 1], [], []>} : vector<32x128xbf16>, vector<128x256xbf16>, vector<32x256xf32> -> vector<32x256xf32>
    %c0_3 = arith.constant 0 : index
    %c0_4 = arith.constant 0 : index
    %3 = vector.load %arg5[%c0_3, %c0_4] : memref<1x256xf32, #tpu.memory_space<vmem>>, vector<1x256xf32>
    %4 = vector.broadcast %3 : vector<1x256xf32> to vector<32x256xf32>
    %5 = arith.addf %2, %4 : vector<32x256xf32>
    %cst_5 = arith.constant dense<0xFF800000> : vector<32xf32>
    %6 = vector.multi_reduction <maximumf>, %5, %cst_5 [1] : vector<32x256xf32> to vector<32xf32>
    %7 = vector.shape_cast %6 : vector<32xf32> to vector<32x1xf32>
    %8 = vector.broadcast %7 : vector<32x1xf32> to vector<32x256xf32>
    %9 = arith.subf %5, %8 : vector<32x256xf32>
    %10 = math.exp %9 : vector<32x256xf32>
    %cst_6 = arith.constant dense<0.000000e+00> : vector<32xf32>
    %11 = vector.multi_reduction <add>, %10, %cst_6 [1] : vector<32x256xf32> to vector<32xf32>
    %12 = vector.shape_cast %11 : vector<32xf32> to vector<32x1xf32>
    %13 = math.log %12 : vector<32x1xf32>
    %14 = vector.broadcast %13 : vector<32x1xf32> to vector<32x256xf32>
    %15 = arith.subf %9, %14 : vector<32x256xf32>
    %c0_7 = arith.constant 0 : index
    %c0_8 = arith.constant 0 : index
    %16 = vector.load %arg6[%c0_7, %c0_8] : memref<32x256xf32, #tpu.memory_space<vmem>>, vector<32x256xf32>
    tpu.vector_store %arg6[%c0_7, %c0_8], %15 {strides = array<i32>} : memref<32x256xf32, #tpu.memory_space<vmem>>, vector<32x256xf32>,
    return
  }
  func.func @transform_0(%arg0: i32, %arg1: i32, %arg2: i32) -> (i32, i32) {
    %c0_i32 = arith.constant 0 : i32
    return %arg0, %arg2 : i32, i32
  }
  func.func @transform_1(%arg0: i32, %arg1: i32, %arg2: i32) -> (i32, i32) {
    %c0_i32 = arith.constant 0 : i32
    return %arg2, %arg1 : i32, i32
  }
  func.func @transform_2(%arg0: i32, %arg1: i32, %arg2: i32) -> (i32, i32) {
    %c0_i32 = arith.constant 0 : i32
    %c0_i32_0 = arith.constant 0 : i32
    return %c0_i32, %arg1 : i32, i32
  }
  func.func @transform_3(%arg0: i32, %arg1: i32, %arg2: i32) -> (i32, i32) {
    %c0_i32 = arith.constant 0 : i32
    return %arg0, %arg1 : i32, i32
  }
}

</mosaic_0001>

<llo_original>
// kernel: transformer_forward.11
$region0: #{transformer_forward.11}
  #allocation0 [shape = 'u32[]', space=smem, size = 0x4, offset = 0x4, fixed_abs, tag = 'smem constant byte address 0x4 - core index']
  #allocation1 [shape = 'u32[144,128]{1,0:T(1,128)}', space=vmem, size = 0x12000, scoped, tag = 'internal scratch']
  %s0 = inlined_call_operand.vmem [shape: bf16[64,128], index: 0, kind: input, shape index: {}]
  %s1 = inlined_call_operand.vmem [shape: bf16[128,384], index: 1, kind: input, shape index: {}]
  %s2 = inlined_call_operand.vmem [shape: f32[1,384], index: 2, kind: input, shape index: {}]
  %s3 = inlined_call_operand.vmem [shape: bf16[64,384], index: 3, kind: output, shape index: {}]
  %s4 = sld [smem:[#allocation0]]
  $region45: #{transformer_forward.11} parent=0
    _
  %s6 = ssub.s32 1, %s4
  %s7 = scalar_select 0, %s6, %s4
  loop: start=0, step=1, limit=4
  $region2: #{transformer_forward.11} parent=0 // loop_pre_header
    _
  $region3: #{transformer_forward.11} parent=0 // loop_header
    %s9 = sphi 0, %s13
    %p10 = scmp.ge.s32.totalorder %s9, 4
    %s16 = sphi 0, %s35
    %s17 = sphi 0, %s31
    %s18 = sphi 0, %s27
    %s19 = sphi 0, %s16
    %s20 = sphi 0, %s17
    %s21 = sphi 0, %s18
    %s22 = sphi 0, %s19
    %s23 = sphi 0, %s20
    %s24 = sphi 0, %s21
    %s40 = sphi 0, %s42
    %s43 = sphi 0, %s40
    %s44 = sphi 0, %s43
    %s60 = sphi 0, %s44
    %s68 = sphi 0, %s70
    %s71 = sphi 0, %s68
    %s72 = sphi 0, %s71
    %s88 = sphi 0, %s72
    %s94 = sphi 0, %s96
    %s97 = sphi 0, %s94
    %s98 = sphi 0, %s97
    %s114 = sphi 0, %s98
    %s122 = sphi 0, %s124
    %s125 = sphi 0, %s122
    %s126 = sphi 0, %s125
    %s142 = sphi 0, %s126
  $region4: #{transformer_forward.11} parent=0 // loop_header_branch
    %12 = sbr.rel (%p10) target = $region8
  $region5: #{transformer_forward.11} parent=0 // loop_body
    %s14 = ssub.s32 %s9, 1
    %s15 = ssub.s32 %s9, 2
    %s25 = sadd.s32 1, %s18
    %p26 = scmp.ge.s32.totalorder %s25, 1
    %s27 = scalar_select %p26, 0, %s25
    %s28 = sadd.s32 1, %s17
    %s29 = scalar_select %p26, %s28, %s17
    %p30 = scmp.ge.s32.totalorder %s29, 1
    %s31 = scalar_select %p30, 0, %s29
    %s32 = sadd.s32 1, %s16
    %s33 = scalar_select %p30, %s32, %s16
    %p34 = scmp.ge.s32.totalorder %s33, 2
    %s35 = scalar_select %p34, 0, %s33
    %s36 = ssub.s32 %s16, %s35
    %s37 = ssub.s32 %s18, %s27
    %s38 = sor.u32 %s36, %s37
    %p39 = scmp.eq.s32.totalorder %s38, 0
    %s41 = sadd.s32 %s40, 1
    %s42 = scalar_select %p39, %s40, %s41
    %p45 = pneg %p39
    %p46 = scmp.eq.s32.totalorder %s9, 1
    %p47 = por %p45, %p46
    %p48 = scmp.ne.s32.totalorder %s40, %s43
    %p49 = scmp.eq.s32.totalorder %s9, 0
    %p50 = por %p48, %p49
    %p51 = scmp.ne.s32.totalorder %s40, %s43
    %p52 = scmp.eq.s32.totalorder %s14, 1
    %p53 = por %p51, %p52
    %p54 = scmp.ne.s32.totalorder %s43, %s44
    %p55 = scmp.eq.s32.totalorder %s14, 0
    %p56 = por %p54, %p55
    %p57 = scmp.ne.s32.totalorder %s43, %s44
    %p58 = scmp.eq.s32.totalorder %s15, 1
    %p59 = por %p57, %p58
    %p61 = scmp.ne.s32.totalorder %s44, %s60
    %p62 = scmp.eq.s32.totalorder %s15, 0
    %p63 = por %p61, %p62
    %s64 = ssub.s32 %s18, %s27
    %s65 = ssub.s32 %s17, %s31
    %s66 = sor.u32 %s64, %s65
    %p67 = scmp.eq.s32.totalorder %s66, 0
    %s69 = sadd.s32 %s68, 1
    %s70 = scalar_select %p67, %s68, %s69
    %p73 = pneg %p67
    %p74 = scmp.eq.s32.totalorder %s9, 1
    %p75 = por %p73, %p74
    %p76 = scmp.ne.s32.totalorder %s68, %s71
    %p77 = scmp.eq.s32.totalorder %s9, 0
    %p78 = por %p76, %p77
    %p79 = scmp.ne.s32.totalorder %s68, %s71
    %p80 = scmp.eq.s32.totalorder %s14, 1
    %p81 = por %p79, %p80
    %p82 = scmp.ne.s32.totalorder %s71, %s72
    %p83 = scmp.eq.s32.totalorder %s14, 0
    %p84 = por %p82, %p83
    %p85 = scmp.ne.s32.totalorder %s71, %s72
    %p86 = scmp.eq.s32.totalorder %s15, 1
    %p87 = por %p85, %p86
    %p89 = scmp.ne.s32.totalorder %s72, %s88
    %p90 = scmp.eq.s32.totalorder %s15, 0
    %p91 = por %p89, %p90
    %s92 = ssub.s32 %s17, %s31
    %p93 = scmp.eq.s32.totalorder %s92, 0
    %s95 = sadd.s32 %s94, 1
    %s96 = scalar_select %p93, %s94, %s95
    %p99 = pneg %p93
    %p100 = scmp.eq.s32.totalorder %s9, 1
    %p101 = por %p99, %p100
    %p102 = scmp.ne.s32.totalorder %s94, %s97
    %p103 = scmp.eq.s32.totalorder %s9, 0
    %p104 = por %p102, %p103
    %p105 = scmp.ne.s32.totalorder %s94, %s97
    %p106 = scmp.eq.s32.totalorder %s14, 1
    %p107 = por %p105, %p106
    %p108 = scmp.ne.s32.totalorder %s97, %s98
    %p109 = scmp.eq.s32.totalorder %s14, 0
    %p110 = por %p108, %p109
    %p111 = scmp.ne.s32.totalorder %s97, %s98
    %p112 = scmp.eq.s32.totalorder %s15, 1
    %p113 = por %p111, %p112
    %p115 = scmp.ne.s32.totalorder %s98, %s114
    %p116 = scmp.eq.s32.totalorder %s15, 0
    %p117 = por %p115, %p116
    %s118 = ssub.s32 %s16, %s35
    %s119 = ssub.s32 %s17, %s31
    %s120 = sor.u32 %s118, %s119
    %p121 = scmp.eq.s32.totalorder %s120, 0
    %s123 = sadd.s32 %s122, 1
    %s124 = scalar_select %p121, %s122, %s123
    %p127 = pneg %p121
    %p128 = scmp.eq.s32.totalorder %s9, 1
    %p129 = por %p127, %p128
    %p130 = scmp.ne.s32.totalorder %s122, %s125
    %p131 = scmp.eq.s32.totalorder %s9, 0
    %p132 = por %p130, %p131
    %p133 = scmp.ne.s32.totalorder %s122, %s125
    %p134 = scmp.eq.s32.totalorder %s14, 1
    %p135 = por %p133, %p134
    %p136 = scmp.ne.s32.totalorder %s125, %s126
    %p137 = scmp.eq.s32.totalorder %s14, 0
    %p138 = por %p136, %p137
    %p139 = scmp.ne.s32.totalorder %s125, %s126
    %p140 = scmp.eq.s32.totalorder %s15, 1
    %p141 = por %p139, %p140
    %p143 = scmp.ne.s32.totalorder %s126, %s142
    %p144 = scmp.eq.s32.totalorder %s15, 0
    %p145 = por %p143, %p144
    %p146 = scmp.le.s32.totalorder 1, %s9
    %p147 = scmp.lt.s32.totalorder %s9, 3
    %p148 = pnand %p146, %p147
    %p149 = pneg %p148
    // Predicated region
    $region9: #{transformer_forward.11} parent=5 // pred_check
      _
    $region10: #{transformer_forward.11} parent=5 // pred_check_branch
      %151 = sbr.rel (%p148) target = $region12
    $region11: #{transformer_forward.11} parent=5 // pred_region
      %s152 = ssub.s32 %s9, 1
      // Predicated region
      $region13: #{transformer_forward.11} parent=11 // pred_check
        %p153 = pneg %p84
      $region14: #{transformer_forward.11} parent=11 // pred_check_branch
        %155 = sbr.rel (%p153) target = $region16
      $region15: #{transformer_forward.11} parent=11 // pred_region
        %s156 = smul.u32 16, %s21
        %s157 = smul.u32 3, %s20
        %p158 = scmp.lt.s32.totalorder %s156, 15
        %s159 = scalar_select %p158, %s156, 15
        %p160 = scmp.lt.s32.totalorder %s157, 2
        %s161 = scalar_select %p160, %s157, 2
        %s162 = smul.addr %s159, 3
        %s163 = sadd.s32 %s161, %s162
        %s164 = smul.addr %s163, 4
        %s165 = scalar_lea.vmem %s1, %s164
        %s166 = smul.u32 16, %s21
        %s167 = smul.u32 3, %s20
      $region16: #{transformer_forward.11} parent=11 // pred_fallthru
        _
      // Predicated region
      $region17: #{transformer_forward.11} parent=11 // pred_check
        %p168 = pneg %p110
      $region18: #{transformer_forward.11} parent=11 // pred_check_branch
        %170 = sbr.rel (%p168) target = $region20
      $region19: #{transformer_forward.11} parent=11 // pred_region
        %s171 = smul.u32 3, %s20
        %p172 = scmp.lt.s32.totalorder %s171, 2
        %s173 = scalar_select %p172, %s171, 2
        %s174 = scalar_lea.vmem %s2, %s173
        %s175 = smul.u32 3, %s20
      $region20: #{transformer_forward.11} parent=11 // pred_fallthru
        _
    $region12: #{transformer_forward.11} parent=5 // pred_fallthru
      _
    %p176 = scmp.lt.s32.totalorder %s9, 2
    // Predicated region
    $region21: #{transformer_forward.11} parent=5 // pred_check
      %p177 = pneg %p176
    $region22: #{transformer_forward.11} parent=5 // pred_check_branch
      %179 = sbr.rel (%p177) target = $region24
    $region23: #{transformer_forward.11} parent=5 // pred_region
      // Predicated region
      $region25: #{transformer_forward.11} parent=23 // pred_check
        %p180 = pneg %p50
      $region26: #{transformer_forward.11} parent=23 // pred_check_branch
        %182 = sbr.rel (%p180) target = $region28
      $region27: #{transformer_forward.11} parent=23 // pred_region
        %s183 = smul.u32 4, %s16
        %p184 = scmp.lt.s32.totalorder %s183, 7
        %s185 = scalar_select %p184, %s183, 7
        %p186 = scmp.lt.s32.totalorder %s18, 0
        %s187 = scalar_select %p186, %s18, 0
        %s188 = sadd.s32 %s187, %s185
        %s189 = smul.addr %s188, 4
        %s190 = scalar_lea.vmem %s0, %s189
        %s191 = smul.u32 4, %s16
      $region28: #{transformer_forward.11} parent=23 // pred_fallthru
        _
    $region24: #{transformer_forward.11} parent=5 // pred_fallthru
      _
    %p192 = scmp.le.s32.totalorder 1, %s9
    %p193 = scmp.lt.s32.totalorder %s9, 3
    %p194 = pnand %p192, %p193
    %p195 = pneg %p194
    // Predicated region
    $region29: #{transformer_forward.11} parent=5 // pred_check
      _
    $region30: #{transformer_forward.11} parent=5 // pred_check_branch
      %197 = sbr.rel (%p194) target = $region32
    $region31: #{transformer_forward.11} parent=5 // pred_region
      %s198 = ssub.s32 %s9, 1
      %s199 = smul.u32 4, %s19
      %p200 = scmp.lt.s32.totalorder %s199, 7
      %s201 = scalar_select %p200, %s199, 7
      %p202 = scmp.lt.s32.totalorder %s21, 0
      %s203 = scalar_select %p202, %s21, 0
      %s204 = sadd.s32 %s203, %s201
      %s205 = smul.addr %s204, 4
      %s206 = scalar_lea.vmem %s0, %s205
      %p207 = pneg %p56
      %p208 = pneg %p53
      %s209 = smul.u32 16, %s21
      %s210 = smul.u32 3, %s20
      %p211 = scmp.lt.s32.totalorder %s209, 15
      %s212 = scalar_select %p211, %s209, 15
      %p213 = scmp.lt.s32.totalorder %s210, 2
      %s214 = scalar_select %p213, %s210, 2
      %s215 = smul.addr %s212, 3
      %s216 = sadd.s32 %s214, %s215
      %s217 = smul.addr %s216, 4
      %s218 = scalar_lea.vmem %s1, %s217
      %p219 = pneg %p84
      %p220 = pneg %p81
      %s221 = smul.u32 3, %s20
      %p222 = scmp.lt.s32.totalorder %s221, 2
      %s223 = scalar_select %p222, %s221, 2
      %s224 = scalar_lea.vmem %s2, %s223
      %p225 = pneg %p110
      %p226 = pneg %p107
      %p227 = pneg %p138
      %p228 = pneg %p135
      %s229 = smul.u32 4, %s19
      %s230 = smul.u32 3, %s20
      %p231 = scmp.lt.s32.totalorder %s229, 7
      %s232 = scalar_select %p231, %s229, 7
      %p233 = scmp.lt.s32.totalorder %s230, 2
      %s234 = scalar_select %p233, %s230, 2
      %s235 = smul.addr %s232, 3
      %s236 = sadd.s32 %s234, %s235
      %s237 = smul.addr %s236, 4
      %s238 = scalar_lea.vmem %s3, %s237
      %s239 = smul.u32 4, %s19
      %p240 = scmp.lt.s32.totalorder %s239, 7
      %s241 = scalar_select %p240, %s239, 7
      %p242 = scmp.lt.s32.totalorder %s21, 0
      %s243 = scalar_select %p242, %s21, 0
      %s244 = sadd.s32 %s243, %s241
      %s245 = smul.addr %s244, 4
      %s246 = scalar_lea.vmem %s0, %s245
      %s247 = smul.u32 4, %s19
      %s248 = smul.u32 16, %s21
      %s249 = smul.u32 3, %s20
      %p250 = scmp.lt.s32.totalorder %s248, 15
      %s251 = scalar_select %p250, %s248, 15
      %p252 = scmp.lt.s32.totalorder %s249, 2
      %s253 = scalar_select %p252, %s249, 2
      %s254 = smul.addr %s251, 3
      %s255 = sadd.s32 %s253, %s254
      %s256 = smul.addr %s255, 4
      %s257 = scalar_lea.vmem %s1, %s256
      %s258 = smul.u32 16, %s21
      %s259 = smul.u32 3, %s20
      %s260 = smul.u32 3, %s20
      %p261 = scmp.lt.s32.totalorder %s260, 2
      %s262 = scalar_select %p261, %s260, 2
      %s263 = scalar_lea.vmem %s2, %s262
      %s264 = smul.u32 3, %s20
      %s265 = smul.u32 4, %s19
      %s266 = smul.u32 3, %s20
      %p267 = scmp.lt.s32.totalorder %s265, 7
      %s268 = scalar_select %p267, %s265, 7
      %p269 = scmp.lt.s32.totalorder %s266, 2
      %s270 = scalar_select %p269, %s266, 2
      %s271 = smul.addr %s268, 3
      %s272 = sadd.s32 %s270, %s271
      %s273 = smul.addr %s272, 4
      %s274 = scalar_lea.vmem %s3, %s273
      %s275 = smul.u32 4, %s19
      %s276 = smul.u32 3, %s20
      %v278 = vld [vmem:[%s246] sm:$0xf]
      %v279 = vld [vmem:[%s246 + $0x4] sm:$0xf]
      %v280 = vld [vmem:[%s246 + $0x8] sm:$0xf]
      %v281 = vld [vmem:[%s246 + $0xc] sm:$0xf]
      %v282 = vld [vmem:[%s257] sm:$0xff]
      %v283 = vld [vmem:[%s257 + $0x8] sm:$0xf]
      %v284 = vld [vmem:[%s257 + $0xc] sm:$0xff]
      %v285 = vld [vmem:[%s257 + $0x14] sm:$0xf]
      %v286 = vld [vmem:[%s257 + $0x18] sm:$0xff]
      %v287 = vld [vmem:[%s257 + $0x20] sm:$0xf]
      %v288 = vld [vmem:[%s257 + $0x24] sm:$0xff]
      %v289 = vld [vmem:[%s257 + $0x2c] sm:$0xf]
      %v290 = vld [vmem:[%s257 + $0x30] sm:$0xff]
      %v291 = vld [vmem:[%s257 + $0x38] sm:$0xf]
      %v292 = vld [vmem:[%s257 + $0x3c] sm:$0xff]
      %v293 = vld [vmem:[%s257 + $0x44] sm:$0xf]
      %v294 = vld [vmem:[%s257 + $0x48] sm:$0xff]
      %v295 = vld [vmem:[%s257 + $0x50] sm:$0xf]
      %v296 = vld [vmem:[%s257 + $0x54] sm:$0xff]
      %v297 = vld [vmem:[%s257 + $0x5c] sm:$0xf]
      %v298 = vld [vmem:[%s257 + $0x60] sm:$0xff]
      %v299 = vld [vmem:[%s257 + $0x68] sm:$0xf]
      %v300 = vld [vmem:[%s257 + $0x6c] sm:$0xff]
      %v301 = vld [vmem:[%s257 + $0x74] sm:$0xf]
      %v302 = vld [vmem:[%s257 + $0x78] sm:$0xff]
      %v303 = vld [vmem:[%s257 + $0x80] sm:$0xf]
      %v304 = vld [vmem:[%s257 + $0x84] sm:$0xff]
      %v305 = vld [vmem:[%s257 + $0x8c] sm:$0xf]
      %v306 = vld [vmem:[%s257 + $0x90] sm:$0xff]
      %v307 = vld [vmem:[%s257 + $0x98] sm:$0xf]
      %v308 = vld [vmem:[%s257 + $0x9c] sm:$0xff]
      %v309 = vld [vmem:[%s257 + $0xa4] sm:$0xf]
      %v310 = vld [vmem:[%s257 + $0xa8] sm:$0xff]
      %v311 = vld [vmem:[%s257 + $0xb0] sm:$0xf]
      %v312 = vld [vmem:[%s257 + $0xb4] sm:$0xff]
      %v313 = vld [vmem:[%s257 + $0xbc] sm:$0xf]
      %v314 = vld [vmem:[%s263] sm:$0x7]
      %v316 = vlaneseq
      %v317 = vshrl.u32 %v316, 7
      %v318 = vsub.s32 0, %v317
      %v319 = vrot.slane %v314, %v318
      %v320 = vlaneseq
      %v321 = vshrl.u32 %v320, 7
      %v322 = vsub.s32 1, %v321
      %v323 = vrot.slane %v314, %v322
      %v324 = vlaneseq
      %v325 = vshrl.u32 %v324, 7
      %v326 = vsub.s32 2, %v325
      %v327 = vrot.slane %v314, %v326
      %v335 = vunpack.c.l.b16 %v278
      %v336 = vunpack.c.l.b16 %v279
      %v337 = vunpack.c.l.b16 %v280
      %v338 = vunpack.c.l.b16 %v281
      %v339 = vpack.c.b16 %v336, %v335
      %v340 = vpack.c.b16 %v338, %v337
      %v375 = vunpack.c.l.b16 %v282
      %v376 = vunpack.c.h.b16 %v282
      %v377 = vunpack.c.l.b16 %v283
      %v378 = vunpack.c.l.b16 %v284
      %v379 = vunpack.c.h.b16 %v284
      %v380 = vunpack.c.l.b16 %v285
      %v381 = vunpack.c.l.b16 %v286
      %v382 = vunpack.c.h.b16 %v286
      %v383 = vunpack.c.l.b16 %v287
      %v384 = vunpack.c.l.b16 %v288
      %v385 = vunpack.c.h.b16 %v288
      %v386 = vunpack.c.l.b16 %v289
      %v387 = vunpack.c.l.b16 %v290
      %v388 = vunpack.c.h.b16 %v290
      %v389 = vunpack.c.l.b16 %v291
      %v390 = vunpack.c.l.b16 %v292
      %v391 = vunpack.c.h.b16 %v292
      %v392 = vunpack.c.l.b16 %v293
      %v393 = vunpack.c.l.b16 %v294
      %v394 = vunpack.c.h.b16 %v294
      %v395 = vunpack.c.l.b16 %v295
      %v396 = vunpack.c.l.b16 %v296
      %v397 = vunpack.c.h.b16 %v296
      %v398 = vunpack.c.l.b16 %v297
      %v399 = vunpack.c.l.b16 %v298
      %v400 = vunpack.c.h.b16 %v298
      %v401 = vunpack.c.l.b16 %v299
      %v402 = vunpack.c.l.b16 %v300
      %v403 = vunpack.c.h.b16 %v300
      %v404 = vunpack.c.l.b16 %v301
      %v405 = vunpack.c.l.b16 %v302
      %v406 = vunpack.c.h.b16 %v302
      %v407 = vunpack.c.l.b16 %v303
      %v408 = vunpack.c.l.b16 %v304
      %v409 = vunpack.c.h.b16 %v304
      %v410 = vunpack.c.l.b16 %v305
      %v411 = vunpack.c.l.b16 %v306
      %v412 = vunpack.c.h.b16 %v306
      %v413 = vunpack.c.l.b16 %v307
      %v414 = vunpack.c.l.b16 %v308
      %v415 = vunpack.c.h.b16 %v308
      %v416 = vunpack.c.l.b16 %v309
      %v417 = vunpack.c.l.b16 %v310
      %v418 = vunpack.c.h.b16 %v310
      %v419 = vunpack.c.l.b16 %v311
      %v420 = vunpack.c.l.b16 %v312
      %v421 = vunpack.c.h.b16 %v312
      %v422 = vunpack.c.l.b16 %v313
      %v423 = vpack.c.b16 %v378, %v375
      %v424 = vpack.c.b16 %v379, %v376
      %v425 = vpack.c.b16 %v380, %v377
      %v426 = vpack.c.b16 %v384, %v381
      %v427 = vpack.c.b16 %v385, %v382
      %v428 = vpack.c.b16 %v386, %v383
      %v429 = vpack.c.b16 %v390, %v387
      %v430 = vpack.c.b16 %v391, %v388
      %v431 = vpack.c.b16 %v392, %v389
      %v432 = vpack.c.b16 %v396, %v393
      %v433 = vpack.c.b16 %v397, %v394
      %v434 = vpack.c.b16 %v398, %v395
      %v435 = vpack.c.b16 %v402, %v399
      %v436 = vpack.c.b16 %v403, %v400
      %v437 = vpack.c.b16 %v404, %v401
      %v438 = vpack.c.b16 %v408, %v405
      %v439 = vpack.c.b16 %v409, %v406
      %v440 = vpack.c.b16 %v410, %v407
      %v441 = vpack.c.b16 %v414, %v411
      %v442 = vpack.c.b16 %v415, %v412
      %v443 = vpack.c.b16 %v416, %v413
      %v444 = vpack.c.b16 %v420, %v417
      %v445 = vpack.c.b16 %v421, %v418
      %v446 = vpack.c.b16 %v422, %v419
      %471 = vmatprep.subr.bf16.mxu0 %v445
      %472 = vmatpush1.bf16.msra.mxu0 %v444
      %473 = vmatprep.subr.bf16.mxu0 %v442
      %474 = vmatpush1.bf16.msra.mxu0 %v441
      %475 = vmatprep.subr.bf16.mxu0 %v439
      %476 = vmatpush1.bf16.msra.mxu0 %v438
      %477 = vmatprep.subr.bf16.mxu0 %v436
      %478 = vmatpush1.bf16.msra.mxu0 %v435
      %479 = vmatprep.subr.bf16.mxu0 %v433
      %480 = vmatpush1.bf16.msra.mxu0 %v432
      %481 = vmatprep.subr.bf16.mxu0 %v430
      %482 = vmatpush1.bf16.msra.mxu0 %v429
      %483 = vmatprep.subr.bf16.mxu0 %v427
      %484 = vmatpush1.bf16.msra.mxu0 %v426
      %485 = vmatprep.subr.bf16.mxu0 %v424
      %486 = vmatpush1.bf16.msra.mxu0 %v423
      %487 = vmatprep.subr.bf16.mxu0 0
      %488 = vmatpush2.bf16.msra.mxu0 0
      %489 = vmatprep.subr.bf16.mxu0 0
      %490 = vmatpush2.bf16.msra.mxu0 0
      %491 = vmatprep.subr.bf16.mxu0 0
      %492 = vmatpush2.bf16.msra.mxu0 0
      %493 = vmatprep.subr.bf16.mxu0 0
      %494 = vmatpush2.bf16.msra.mxu0 0
      %495 = vmatprep.subr.bf16.mxu0 0
      %496 = vmatpush2.bf16.msra.mxu0 0
      %497 = vmatprep.subr.bf16.mxu0 0
      %498 = vmatpush2.bf16.msra.mxu0 0
      %499 = vmatprep.subr.bf16.mxu0 0
      %500 = vmatpush2.bf16.msra.mxu0 0
      %501 = vmatprep.subr.bf16.mxu0 0
      %502 = vmatpush2.bf16.msra.mxu0 0
      %503 = vmatprep.mubr.bf16.mxu0 0
      %504 = vmatmul.mubr.bf16.gmra.mxu0 %v339
      %v505 = vpop.f32.mrf.mxu0
      %v506 = vadd.f32 %v319, %v505
      %v507 = vpop.f32.mrf.mxu0
      %v508 = vadd.f32 %v323, %v507
      %v509 = vpop.f32.mrf.mxu0
      %v510 = vadd.f32 %v319, %v509
      %v511 = vpop.f32.mrf.mxu0
      %v512 = vadd.f32 %v323, %v511
      %513 = vmatprep.mubr.bf16.mxu0 0
      %514 = vmatmul.mubr.bf16.gmra.mxu0 %v340
      %v515 = vpop.f32.mrf.mxu0
      %v516 = vadd.f32 %v319, %v515
      %v517 = vpop.f32.mrf.mxu0
      %v518 = vadd.f32 %v323, %v517
      %v519 = vpop.f32.mrf.mxu0
      %v520 = vadd.f32 %v319, %v519
      %v521 = vpop.f32.mrf.mxu0
      %v522 = vadd.f32 %v323, %v521
      %523 = vdwg.mxu0
      %524 = vmatprep.subr.bf16.mxu0 0
      %525 = vmatpush1.bf16.msra.mxu0 %v446
      %526 = vmatprep.subr.bf16.mxu0 0
      %527 = vmatpush1.bf16.msra.mxu0 %v443
      %528 = vmatprep.subr.bf16.mxu0 0
      %529 = vmatpush1.bf16.msra.mxu0 %v440
      %530 = vmatprep.subr.bf16.mxu0 0
      %531 = vmatpush1.bf16.msra.mxu0 %v437
      %532 = vmatprep.subr.bf16.mxu0 0
      %533 = vmatpush1.bf16.msra.mxu0 %v434
      %534 = vmatprep.subr.bf16.mxu0 0
      %535 = vmatpush1.bf16.msra.mxu0 %v431
      %536 = vmatprep.subr.bf16.mxu0 0
      %537 = vmatpush1.bf16.msra.mxu0 %v428
      %538 = vmatprep.subr.bf16.mxu0 0
      %539 = vmatpush1.bf16.msra.mxu0 %v425
      %540 = vmatprep.subr.bf16.mxu0 0
      %541 = vmatpush2.bf16.msra.mxu0 0
      %542 = vmatprep.subr.bf16.mxu0 0
      %543 = vmatpush2.bf16.msra.mxu0 0
      %544 = vmatprep.subr.bf16.mxu0 0
      %545 = vmatpush2.bf16.msra.mxu0 0
      %546 = vmatprep.subr.bf16.mxu0 0
      %547 = vmatpush2.bf16.msra.mxu0 0
      %548 = vmatprep.subr.bf16.mxu0 0
      %549 = vmatpush2.bf16.msra.mxu0 0
      %550 = vmatprep.subr.bf16.mxu0 0
      %551 = vmatpush2.bf16.msra.mxu0 0
      %552 = vmatprep.subr.bf16.mxu0 0
      %553 = vmatpush2.bf16.msra.mxu0 0
      %554 = vmatprep.subr.bf16.mxu0 0
      %555 = vmatpush2.bf16.msra.mxu0 0
      %556 = vmatprep.mubr.bf16.mxu0 0
      %557 = vmatmul.mubr.bf16.gmra.mxu0 %v339
      %v558 = vpop.f32.mrf.mxu0
      %v559 = vadd.f32 %v327, %v558
      %v560 = vpop.f32.mrf.mxu0
      %v561 = vpop.f32.mrf.mxu0
      %v562 = vadd.f32 %v327, %v561
      %v563 = vpop.f32.mrf.mxu0
      %564 = vmatprep.mubr.bf16.mxu0 0
      %565 = vmatmul.mubr.bf16.gmra.mxu0 %v340
      %v566 = vpop.f32.mrf.mxu0
      %v567 = vadd.f32 %v327, %v566
      %v568 = vpop.f32.mrf.mxu0
      %v569 = vpop.f32.mrf.mxu0
      %v570 = vadd.f32 %v327, %v569
      %v571 = vpop.f32.mrf.mxu0
      %572 = vdwg.mxu0
      %v573 = vpack.c.bf16 %v510, %v506
      %v574 = vpack.c.bf16 %v512, %v508
      %v575 = vpack.c.bf16 %v562, %v559
      %v576 = vpack.c.bf16 %v520, %v516
      %v577 = vpack.c.bf16 %v522, %v518
      %v578 = vpack.c.bf16 %v570, %v567
      %v585 = vunpack.c.l.b16 %v573
      %v586 = vunpack.c.l.b16 %v574
      %v587 = vunpack.c.l.b16 %v575
      %v588 = vunpack.c.h.b16 %v573
      %v589 = vunpack.c.h.b16 %v574
      %v590 = vunpack.c.h.b16 %v575
      %v591 = vunpack.c.l.b16 %v576
      %v592 = vunpack.c.l.b16 %v577
      %v593 = vunpack.c.l.b16 %v578
      %v594 = vunpack.c.h.b16 %v576
      %v595 = vunpack.c.h.b16 %v577
      %v596 = vunpack.c.h.b16 %v578
      %v597 = vpack.c.b16 %v586, %v585
      %v598 = vpack.c.b16 %v587, %v587
      %v599 = vpack.c.b16 %v589, %v588
      %v600 = vpack.c.b16 %v590, %v590
      %v601 = vpack.c.b16 %v592, %v591
      %v602 = vpack.c.b16 %v593, %v593
      %v603 = vpack.c.b16 %v595, %v594
      %v604 = vpack.c.b16 %v596, %v596
      %613 = vst [vmem:[%s274] sm:$0xff] %v597
      %614 = vst [vmem:[%s274 + $0x8] sm:$0xf] %v598
      %615 = vst [vmem:[%s274 + $0xc] sm:$0xff] %v599
      %616 = vst [vmem:[%s274 + $0x14] sm:$0xf] %v600
      %617 = vst [vmem:[%s274 + $0x18] sm:$0xff] %v601
      %618 = vst [vmem:[%s274 + $0x20] sm:$0xf] %v602
      %619 = vst [vmem:[%s274 + $0x24] sm:$0xff] %v603
      %620 = vst [vmem:[%s274 + $0x2c] sm:$0xf] %v604
      %s621 = smul.u32 4, %s19
      %s622 = smul.u32 3, %s20
      %p623 = scmp.lt.s32.totalorder %s621, 7
      %s624 = scalar_select %p623, %s621, 7
      %p625 = scmp.lt.s32.totalorder %s622, 2
      %s626 = scalar_select %p625, %s622, 2
      %s627 = smul.addr %s624, 3
      %s628 = sadd.s32 %s626, %s627
      %s629 = smul.addr %s628, 4
      %s630 = scalar_lea.vmem %s3, %s629
      // Predicated region
      $region33: #{transformer_forward.11} parent=31 // pred_check
        %p631 = pneg %p135
      $region34: #{transformer_forward.11} parent=31 // pred_check_branch
        %633 = sbr.rel (%p631) target = $region36
      $region35: #{transformer_forward.11} parent=31 // pred_region
        %s634 = smul.u32 4, %s19
        %s635 = smul.u32 3, %s20
      $region36: #{transformer_forward.11} parent=31 // pred_fallthru
        _
    $region32: #{transformer_forward.11} parent=5 // pred_fallthru
      _
    %p636 = scmp.le.s32.totalorder 2, %s9
    // Predicated region
    $region37: #{transformer_forward.11} parent=5 // pred_check
      %p637 = pneg %p636
    $region38: #{transformer_forward.11} parent=5 // pred_check_branch
      %639 = sbr.rel (%p637) target = $region40
    $region39: #{transformer_forward.11} parent=5 // pred_region
      %s640 = ssub.s32 %s9, 2
      // Predicated region
      $region41: #{transformer_forward.11} parent=39 // pred_check
        %p641 = pneg %p141
      $region42: #{transformer_forward.11} parent=39 // pred_check_branch
        %643 = sbr.rel (%p641) target = $region44
      $region43: #{transformer_forward.11} parent=39 // pred_region
        %s644 = smul.u32 4, %s22
        %s645 = smul.u32 3, %s23
        %p646 = scmp.lt.s32.totalorder %s644, 7
        %s647 = scalar_select %p646, %s644, 7
        %p648 = scmp.lt.s32.totalorder %s645, 2
        %s649 = scalar_select %p648, %s645, 2
        %s650 = smul.addr %s647, 3
        %s651 = sadd.s32 %s649, %s650
        %s652 = smul.addr %s651, 4
        %s653 = scalar_lea.vmem %s3, %s652
      $region44: #{transformer_forward.11} parent=39 // pred_fallthru
        _
    $region40: #{transformer_forward.11} parent=5 // pred_fallthru
      _
  $region6: #{transformer_forward.11} parent=0 // loop_footer
    %s13 = sadd.s32 1, %s9
  $region7: #{transformer_forward.11} parent=0 // loop_footer_branch
    %8 = sbr.rel target = $region3
  $region8: #{transformer_forward.11} parent=0 // loop_exit
    _

// kernel: transformer_forward.13
$region0: #{transformer_forward.13}
  #allocation0 [shape = 'u32[]', space=smem, size = 0x4, offset = 0x4, fixed_abs, tag = 'smem constant byte address 0x4 - core index']
  #allocation1 [shape = 'u32[144,128]{1,0:T(1,128)}', space=vmem, size = 0x12000, scoped, tag = 'internal scratch']
  %s0 = inlined_call_operand.vmem [shape: bf16[64,128], index: 0, kind: input, shape index: {}]
  %s1 = inlined_call_operand.vmem [shape: bf16[128,128], index: 1, kind: input, shape index: {}]
  %s2 = inlined_call_operand.vmem [shape: f32[1,128], index: 2, kind: input, shape index: {}]
  %s3 = inlined_call_operand.vmem [shape: bf16[64,128], index: 3, kind: input, shape index: {}]
  %s4 = inlined_call_operand.vmem [shape: f32[1,128], index: 4, kind: input, shape index: {}]
  %s5 = inlined_call_operand.vmem [shape: f32[1,128], index: 5, kind: input, shape index: {}]
  %s6 = inlined_call_operand.vmem [shape: bf16[64,128], index: 6, kind: output, shape index: {}]
  %s7 = sld [smem:[#allocation0]]
  $region57: #{transformer_forward.13} parent=0
    _
  %s9 = ssub.s32 1, %s7
  %s10 = scalar_select 0, %s9, %s7
  loop: start=0, step=1, limit=4
  $region2: #{transformer_forward.13} parent=0 // loop_pre_header
    _
  $region3: #{transformer_forward.13} parent=0 // loop_header
    %s12 = sphi 0, %s16
    %p13 = scmp.ge.s32.totalorder %s12, 4
    %s19 = sphi 0, %s38
    %s20 = sphi 0, %s34
    %s21 = sphi 0, %s30
    %s22 = sphi 0, %s19
    %s23 = sphi 0, %s20
    %s24 = sphi 0, %s21
    %s25 = sphi 0, %s22
    %s26 = sphi 0, %s23
    %s27 = sphi 0, %s24
    %s43 = sphi 0, %s45
    %s46 = sphi 0, %s43
    %s47 = sphi 0, %s46
    %s63 = sphi 0, %s47
    %s71 = sphi 0, %s73
    %s74 = sphi 0, %s71
    %s75 = sphi 0, %s74
    %s91 = sphi 0, %s75
    %s97 = sphi 0, %s99
    %s100 = sphi 0, %s97
    %s101 = sphi 0, %s100
    %s117 = sphi 0, %s101
    %s125 = sphi 0, %s127
    %s128 = sphi 0, %s125
    %s129 = sphi 0, %s128
    %s145 = sphi 0, %s129
    %s151 = sphi 0, %s153
    %s154 = sphi 0, %s151
    %s155 = sphi 0, %s154
    %s171 = sphi 0, %s155
    %s177 = sphi 0, %s179
    %s180 = sphi 0, %s177
    %s181 = sphi 0, %s180
    %s197 = sphi 0, %s181
    %s205 = sphi 0, %s207
    %s208 = sphi 0, %s205
    %s209 = sphi 0, %s208
    %s225 = sphi 0, %s209
  $region4: #{transformer_forward.13} parent=0 // loop_header_branch
    %15 = sbr.rel (%p13) target = $region8
  $region5: #{transformer_forward.13} parent=0 // loop_body
    %s17 = ssub.s32 %s12, 1
    %s18 = ssub.s32 %s12, 2
    %s28 = sadd.s32 1, %s21
    %p29 = scmp.ge.s32.totalorder %s28, 1
    %s30 = scalar_select %p29, 0, %s28
    %s31 = sadd.s32 1, %s20
    %s32 = scalar_select %p29, %s31, %s20
    %p33 = scmp.ge.s32.totalorder %s32, 1
    %s34 = scalar_select %p33, 0, %s32
    %s35 = sadd.s32 1, %s19
    %s36 = scalar_select %p33, %s35, %s19
    %p37 = scmp.ge.s32.totalorder %s36, 2
    %s38 = scalar_select %p37, 0, %s36
    %s39 = ssub.s32 %s19, %s38
    %s40 = ssub.s32 %s21, %s30
    %s41 = sor.u32 %s39, %s40
    %p42 = scmp.eq.s32.totalorder %s41, 0
    %s44 = sadd.s32 %s43, 1
    %s45 = scalar_select %p42, %s43, %s44
    %p48 = pneg %p42
    %p49 = scmp.eq.s32.totalorder %s12, 1
    %p50 = por %p48, %p49
    %p51 = scmp.ne.s32.totalorder %s43, %s46
    %p52 = scmp.eq.s32.totalorder %s12, 0
    %p53 = por %p51, %p52
    %p54 = scmp.ne.s32.totalorder %s43, %s46
    %p55 = scmp.eq.s32.totalorder %s17, 1
    %p56 = por %p54, %p55
    %p57 = scmp.ne.s32.totalorder %s46, %s47
    %p58 = scmp.eq.s32.totalorder %s17, 0
    %p59 = por %p57, %p58
    %p60 = scmp.ne.s32.totalorder %s46, %s47
    %p61 = scmp.eq.s32.totalorder %s18, 1
    %p62 = por %p60, %p61
    %p64 = scmp.ne.s32.totalorder %s47, %s63
    %p65 = scmp.eq.s32.totalorder %s18, 0
    %p66 = por %p64, %p65
    %s67 = ssub.s32 %s21, %s30
    %s68 = ssub.s32 %s20, %s34
    %s69 = sor.u32 %s67, %s68
    %p70 = scmp.eq.s32.totalorder %s69, 0
    %s72 = sadd.s32 %s71, 1
    %s73 = scalar_select %p70, %s71, %s72
    %p76 = pneg %p70
    %p77 = scmp.eq.s32.totalorder %s12, 1
    %p78 = por %p76, %p77
    %p79 = scmp.ne.s32.totalorder %s71, %s74
    %p80 = scmp.eq.s32.totalorder %s12, 0
    %p81 = por %p79, %p80
    %p82 = scmp.ne.s32.totalorder %s71, %s74
    %p83 = scmp.eq.s32.totalorder %s17, 1
    %p84 = por %p82, %p83
    %p85 = scmp.ne.s32.totalorder %s74, %s75
    %p86 = scmp.eq.s32.totalorder %s17, 0
    %p87 = por %p85, %p86
    %p88 = scmp.ne.s32.totalorder %s74, %s75
    %p89 = scmp.eq.s32.totalorder %s18, 1
    %p90 = por %p88, %p89
    %p92 = scmp.ne.s32.totalorder %s75, %s91
    %p93 = scmp.eq.s32.totalorder %s18, 0
    %p94 = por %p92, %p93
    %s95 = ssub.s32 %s20, %s34
    %p96 = scmp.eq.s32.totalorder %s95, 0
    %s98 = sadd.s32 %s97, 1
    %s99 = scalar_select %p96, %s97, %s98
    %p102 = pneg %p96
    %p103 = scmp.eq.s32.totalorder %s12, 1
    %p104 = por %p102, %p103
    %p105 = scmp.ne.s32.totalorder %s97, %s100
    %p106 = scmp.eq.s32.totalorder %s12, 0
    %p107 = por %p105, %p106
    %p108 = scmp.ne.s32.totalorder %s97, %s100
    %p109 = scmp.eq.s32.totalorder %s17, 1
    %p110 = por %p108, %p109
    %p111 = scmp.ne.s32.totalorder %s100, %s101
    %p112 = scmp.eq.s32.totalorder %s17, 0
    %p113 = por %p111, %p112
    %p114 = scmp.ne.s32.totalorder %s100, %s101
    %p115 = scmp.eq.s32.totalorder %s18, 1
    %p116 = por %p114, %p115
    %p118 = scmp.ne.s32.totalorder %s101, %s117
    %p119 = scmp.eq.s32.totalorder %s18, 0
    %p120 = por %p118, %p119
    %s121 = ssub.s32 %s19, %s38
    %s122 = ssub.s32 %s20, %s34
    %s123 = sor.u32 %s121, %s122
    %p124 = scmp.eq.s32.totalorder %s123, 0
    %s126 = sadd.s32 %s125, 1
    %s127 = scalar_select %p124, %s125, %s126
    %p130 = pneg %p124
    %p131 = scmp.eq.s32.totalorder %s12, 1
    %p132 = por %p130, %p131
    %p133 = scmp.ne.s32.totalorder %s125, %s128
    %p134 = scmp.eq.s32.totalorder %s12, 0
    %p135 = por %p133, %p134
    %p136 = scmp.ne.s32.totalorder %s125, %s128
    %p137 = scmp.eq.s32.totalorder %s17, 1
    %p138 = por %p136, %p137
    %p139 = scmp.ne.s32.totalorder %s128, %s129
    %p140 = scmp.eq.s32.totalorder %s17, 0
    %p141 = por %p139, %p140
    %p142 = scmp.ne.s32.totalorder %s128, %s129
    %p143 = scmp.eq.s32.totalorder %s18, 1
    %p144 = por %p142, %p143
    %p146 = scmp.ne.s32.totalorder %s129, %s145
    %p147 = scmp.eq.s32.totalorder %s18, 0
    %p148 = por %p146, %p147
    %s149 = ssub.s32 %s20, %s34
    %p150 = scmp.eq.s32.totalorder %s149, 0
    %s152 = sadd.s32 %s151, 1
    %s153 = scalar_select %p150, %s151, %s152
    %p156 = pneg %p150
    %p157 = scmp.eq.s32.totalorder %s12, 1
    %p158 = por %p156, %p157
    %p159 = scmp.ne.s32.totalorder %s151, %s154
    %p160 = scmp.eq.s32.totalorder %s12, 0
    %p161 = por %p159, %p160
    %p162 = scmp.ne.s32.totalorder %s151, %s154
    %p163 = scmp.eq.s32.totalorder %s17, 1
    %p164 = por %p162, %p163
    %p165 = scmp.ne.s32.totalorder %s154, %s155
    %p166 = scmp.eq.s32.totalorder %s17, 0
    %p167 = por %p165, %p166
    %p168 = scmp.ne.s32.totalorder %s154, %s155
    %p169 = scmp.eq.s32.totalorder %s18, 1
    %p170 = por %p168, %p169
    %p172 = scmp.ne.s32.totalorder %s155, %s171
    %p173 = scmp.eq.s32.totalorder %s18, 0
    %p174 = por %p172, %p173
    %s175 = ssub.s32 %s20, %s34
    %p176 = scmp.eq.s32.totalorder %s175, 0
    %s178 = sadd.s32 %s177, 1
    %s179 = scalar_select %p176, %s177, %s178
    %p182 = pneg %p176
    %p183 = scmp.eq.s32.totalorder %s12, 1
    %p184 = por %p182, %p183
    %p185 = scmp.ne.s32.totalorder %s177, %s180
    %p186 = scmp.eq.s32.totalorder %s12, 0
    %p187 = por %p185, %p186
    %p188 = scmp.ne.s32.totalorder %s177, %s180
    %p189 = scmp.eq.s32.totalorder %s17, 1
    %p190 = por %p188, %p189
    %p191 = scmp.ne.s32.totalorder %s180, %s181
    %p192 = scmp.eq.s32.totalorder %s17, 0
    %p193 = por %p191, %p192
    %p194 = scmp.ne.s32.totalorder %s180, %s181
    %p195 = scmp.eq.s32.totalorder %s18, 1
    %p196 = por %p194, %p195
    %p198 = scmp.ne.s32.totalorder %s181, %s197
    %p199 = scmp.eq.s32.totalorder %s18, 0
    %p200 = por %p198, %p199
    %s201 = ssub.s32 %s19, %s38
    %s202 = ssub.s32 %s20, %s34
    %s203 = sor.u32 %s201, %s202
    %p204 = scmp.eq.s32.totalorder %s203, 0
    %s206 = sadd.s32 %s205, 1
    %s207 = scalar_select %p204, %s205, %s206
    %p210 = pneg %p204
    %p211 = scmp.eq.s32.totalorder %s12, 1
    %p212 = por %p210, %p211
    %p213 = scmp.ne.s32.totalorder %s205, %s208
    %p214 = scmp.eq.s32.totalorder %s12, 0
    %p215 = por %p213, %p214
    %p216 = scmp.ne.s32.totalorder %s205, %s208
    %p217 = scmp.eq.s32.totalorder %s17, 1
    %p218 = por %p216, %p217
    %p219 = scmp.ne.s32.totalorder %s208, %s209
    %p220 = scmp.eq.s32.totalorder %s17, 0
    %p221 = por %p219, %p220
    %p222 = scmp.ne.s32.totalorder %s208, %s209
    %p223 = scmp.eq.s32.totalorder %s18, 1
    %p224 = por %p222, %p223
    %p226 = scmp.ne.s32.totalorder %s209, %s225
    %p227 = scmp.eq.s32.totalorder %s18, 0
    %p228 = por %p226, %p227
    %p229 = scmp.le.s32.totalorder 1, %s12
    %p230 = scmp.lt.s32.totalorder %s12, 3
    %p231 = pnand %p229, %p230
    %p232 = pneg %p231
    // Predicated region
    $region9: #{transformer_forward.13} parent=5 // pred_check
      _
    $region10: #{transformer_forward.13} parent=5 // pred_check_branch
      %234 = sbr.rel (%p231) target = $region12
    $region11: #{transformer_forward.13} parent=5 // pred_region
      %s235 = ssub.s32 %s12, 1
      // Predicated region
      $region13: #{transformer_forward.13} parent=11 // pred_check
        %p236 = pneg %p87
      $region14: #{transformer_forward.13} parent=11 // pred_check_branch
        %238 = sbr.rel (%p236) target = $region16
      $region15: #{transformer_forward.13} parent=11 // pred_region
        %s239 = smul.u32 16, %s24
        %p240 = scmp.lt.s32.totalorder %s239, 15
        %s241 = scalar_select %p240, %s239, 15
        %p242 = scmp.lt.s32.totalorder %s23, 0
        %s243 = scalar_select %p242, %s23, 0
        %s244 = sadd.s32 %s243, %s241
        %s245 = smul.addr %s244, 4
        %s246 = scalar_lea.vmem %s1, %s245
        %s247 = smul.u32 16, %s24
      $region16: #{transformer_forward.13} parent=11 // pred_fallthru
        _
      // Predicated region
      $region17: #{transformer_forward.13} parent=11 // pred_check
        %p248 = pneg %p113
      $region18: #{transformer_forward.13} parent=11 // pred_check_branch
        %250 = sbr.rel (%p248) target = $region20
      $region19: #{transformer_forward.13} parent=11 // pred_region
        %p251 = scmp.lt.s32.totalorder %s23, 0
        %s252 = scalar_select %p251, %s23, 0
        %s253 = scalar_lea.vmem %s2, %s252
      $region20: #{transformer_forward.13} parent=11 // pred_fallthru
        _
      // Predicated region
      $region21: #{transformer_forward.13} parent=11 // pred_check
        %p254 = pneg %p167
      $region22: #{transformer_forward.13} parent=11 // pred_check_branch
        %256 = sbr.rel (%p254) target = $region24
      $region23: #{transformer_forward.13} parent=11 // pred_region
        %p257 = scmp.lt.s32.totalorder %s23, 0
        %s258 = scalar_select %p257, %s23, 0
        %s259 = scalar_lea.vmem %s4, %s258
      $region24: #{transformer_forward.13} parent=11 // pred_fallthru
        _
      // Predicated region
      $region25: #{transformer_forward.13} parent=11 // pred_check
        %p260 = pneg %p193
      $region26: #{transformer_forward.13} parent=11 // pred_check_branch
        %262 = sbr.rel (%p260) target = $region28
      $region27: #{transformer_forward.13} parent=11 // pred_region
        %p263 = scmp.lt.s32.totalorder %s23, 0
        %s264 = scalar_select %p263, %s23, 0
        %s265 = scalar_lea.vmem %s5, %s264
      $region28: #{transformer_forward.13} parent=11 // pred_fallthru
        _
    $region12: #{transformer_forward.13} parent=5 // pred_fallthru
      _
    %p266 = scmp.lt.s32.totalorder %s12, 2
    // Predicated region
    $region29: #{transformer_forward.13} parent=5 // pred_check
      %p267 = pneg %p266
    $region30: #{transformer_forward.13} parent=5 // pred_check_branch
      %269 = sbr.rel (%p267) target = $region32
    $region31: #{transformer_forward.13} parent=5 // pred_region
      // Predicated region
      $region33: #{transformer_forward.13} parent=31 // pred_check
        %p270 = pneg %p53
      $region34: #{transformer_forward.13} parent=31 // pred_check_branch
        %272 = sbr.rel (%p270) target = $region36
      $region35: #{transformer_forward.13} parent=31 // pred_region
        %s273 = smul.u32 4, %s19
        %p274 = scmp.lt.s32.totalorder %s273, 7
        %s275 = scalar_select %p274, %s273, 7
        %p276 = scmp.lt.s32.totalorder %s21, 0
        %s277 = scalar_select %p276, %s21, 0
        %s278 = sadd.s32 %s277, %s275
        %s279 = smul.addr %s278, 4
        %s280 = scalar_lea.vmem %s0, %s279
        %s281 = smul.u32 4, %s19
      $region36: #{transformer_forward.13} parent=31 // pred_fallthru
        _
      // Predicated region
      $region37: #{transformer_forward.13} parent=31 // pred_check
        %p282 = pneg %p135
      $region38: #{transformer_forward.13} parent=31 // pred_check_branch
        %284 = sbr.rel (%p282) target = $region40
      $region39: #{transformer_forward.13} parent=31 // pred_region
        %s285 = smul.u32 4, %s19
        %p286 = scmp.lt.s32.totalorder %s285, 7
        %s287 = scalar_select %p286, %s285, 7
        %p288 = scmp.lt.s32.totalorder %s20, 0
        %s289 = scalar_select %p288, %s20, 0
        %s290 = sadd.s32 %s289, %s287
        %s291 = smul.addr %s290, 4
        %s292 = scalar_lea.vmem %s3, %s291
        %s293 = smul.u32 4, %s19
      $region40: #{transformer_forward.13} parent=31 // pred_fallthru
        _
    $region32: #{transformer_forward.13} parent=5 // pred_fallthru
      _
    %p294 = scmp.le.s32.totalorder 1, %s12
    %p295 = scmp.lt.s32.totalorder %s12, 3
    %p296 = pnand %p294, %p295
    %p297 = pneg %p296
    // Predicated region
    $region41: #{transformer_forward.13} parent=5 // pred_check
      _
    $region42: #{transformer_forward.13} parent=5 // pred_check_branch
      %299 = sbr.rel (%p296) target = $region44
    $region43: #{transformer_forward.13} parent=5 // pred_region
      %s300 = ssub.s32 %s12, 1
      %s301 = smul.u32 4, %s22
      %p302 = scmp.lt.s32.totalorder %s301, 7
      %s303 = scalar_select %p302, %s301, 7
      %p304 = scmp.lt.s32.totalorder %s24, 0
      %s305 = scalar_select %p304, %s24, 0
      %s306 = sadd.s32 %s305, %s303
      %s307 = smul.addr %s306, 4
      %s308 = scalar_lea.vmem %s0, %s307
      %p309 = pneg %p59
      %p310 = pneg %p56
      %s311 = smul.u32 16, %s24
      %p312 = scmp.lt.s32.totalorder %s311, 15
      %s313 = scalar_select %p312, %s311, 15
      %p314 = scmp.lt.s32.totalorder %s23, 0
      %s315 = scalar_select %p314, %s23, 0
      %s316 = sadd.s32 %s315, %s313
      %s317 = smul.addr %s316, 4
      %s318 = scalar_lea.vmem %s1, %s317
      %p319 = pneg %p87
      %p320 = pneg %p84
      %p321 = scmp.lt.s32.totalorder %s23, 0
      %s322 = scalar_select %p321, %s23, 0
      %s323 = scalar_lea.vmem %s2, %s322
      %p324 = pneg %p113
      %p325 = pneg %p110
      %s326 = smul.u32 4, %s22
      %p327 = scmp.lt.s32.totalorder %s326, 7
      %s328 = scalar_select %p327, %s326, 7
      %p329 = scmp.lt.s32.totalorder %s23, 0
      %s330 = scalar_select %p329, %s23, 0
      %s331 = sadd.s32 %s330, %s328
      %s332 = smul.addr %s331, 4
      %s333 = scalar_lea.vmem %s3, %s332
      %p334 = pneg %p141
      %p335 = pneg %p138
      %p336 = scmp.lt.s32.totalorder %s23, 0
      %s337 = scalar_select %p336, %s23, 0
      %s338 = scalar_lea.vmem %s4, %s337
      %p339 = pneg %p167
      %p340 = pneg %p164
      %p341 = scmp.lt.s32.totalorder %s23, 0
      %s342 = scalar_select %p341, %s23, 0
      %s343 = scalar_lea.vmem %s5, %s342
      %p344 = pneg %p193
      %p345 = pneg %p190
      %p346 = pneg %p221
      %p347 = pneg %p218
      %s348 = smul.u32 4, %s22
      %p349 = scmp.lt.s32.totalorder %s348, 7
      %s350 = scalar_select %p349, %s348, 7
      %p351 = scmp.lt.s32.totalorder %s23, 0
      %s352 = scalar_select %p351, %s23, 0
      %s353 = sadd.s32 %s352, %s350
      %s354 = smul.addr %s353, 4
      %s355 = scalar_lea.vmem %s6, %s354
      %s356 = smul.u32 4, %s22
      %p357 = scmp.lt.s32.totalorder %s356, 7
      %s358 = scalar_select %p357, %s356, 7
      %p359 = scmp.lt.s32.totalorder %s24, 0
      %s360 = scalar_select %p359, %s24, 0
      %s361 = sadd.s32 %s360, %s358
      %s362 = smul.addr %s361, 4
      %s363 = scalar_lea.vmem %s0, %s362
      %s364 = smul.u32 4, %s22
      %s365 = smul.u32 16, %s24
      %p366 = scmp.lt.s32.totalorder %s365, 15
      %s367 = scalar_select %p366, %s365, 15
      %p368 = scmp.lt.s32.totalorder %s23, 0
      %s369 = scalar_select %p368, %s23, 0
      %s370 = sadd.s32 %s369, %s367
      %s371 = smul.addr %s370, 4
      %s372 = scalar_lea.vmem %s1, %s371
      %s373 = smul.u32 16, %s24
      %p374 = scmp.lt.s32.totalorder %s23, 0
      %s375 = scalar_select %p374, %s23, 0
      %s376 = scalar_lea.vmem %s2, %s375
      %s377 = smul.u32 4, %s22
      %p378 = scmp.lt.s32.totalorder %s377, 7
      %s379 = scalar_select %p378, %s377, 7
      %p380 = scmp.lt.s32.totalorder %s23, 0
      %s381 = scalar_select %p380, %s23, 0
      %s382 = sadd.s32 %s381, %s379
      %s383 = smul.addr %s382, 4
      %s384 = scalar_lea.vmem %s3, %s383
      %s385 = smul.u32 4, %s22
      %p386 = scmp.lt.s32.totalorder %s23, 0
      %s387 = scalar_select %p386, %s23, 0
      %s388 = scalar_lea.vmem %s4, %s387
      %p389 = scmp.lt.s32.totalorder %s23, 0
      %s390 = scalar_select %p389, %s23, 0
      %s391 = scalar_lea.vmem %s5, %s390
      %s392 = smul.u32 4, %s22
      %p393 = scmp.lt.s32.totalorder %s392, 7
      %s394 = scalar_select %p393, %s392, 7
      %p395 = scmp.lt.s32.totalorder %s23, 0
      %s396 = scalar_select %p395, %s23, 0
      %s397 = sadd.s32 %s396, %s394
      %s398 = smul.addr %s397, 4
      %s399 = scalar_lea.vmem %s6, %s398
      %s400 = smul.u32 4, %s22
      %v402 = vld [vmem:[%s363] sm:$0xf]
      %v403 = vld [vmem:[%s363 + $0x4] sm:$0xf]
      %v404 = vld [vmem:[%s363 + $0x8] sm:$0xf]
      %v405 = vld [vmem:[%s363 + $0xc] sm:$0xf]
      %v406 = vld [vmem:[%s372] sm:$0xf]
      %v407 = vld [vmem:[%s372 + $0x4] sm:$0xf]
      %v408 = vld [vmem:[%s372 + $0x8] sm:$0xf]
      %v409 = vld [vmem:[%s372 + $0xc] sm:$0xf]
      %v410 = vld [vmem:[%s372 + $0x10] sm:$0xf]
      %v411 = vld [vmem:[%s372 + $0x14] sm:$0xf]
      %v412 = vld [vmem:[%s372 + $0x18] sm:$0xf]
      %v413 = vld [vmem:[%s372 + $0x1c] sm:$0xf]
      %v414 = vld [vmem:[%s372 + $0x20] sm:$0xf]
      %v415 = vld [vmem:[%s372 + $0x24] sm:$0xf]
      %v416 = vld [vmem:[%s372 + $0x28] sm:$0xf]
      %v417 = vld [vmem:[%s372 + $0x2c] sm:$0xf]
      %v418 = vld [vmem:[%s372 + $0x30] sm:$0xf]
      %v419 = vld [vmem:[%s372 + $0x34] sm:$0xf]
      %v420 = vld [vmem:[%s372 + $0x38] sm:$0xf]
      %v421 = vld [vmem:[%s372 + $0x3c] sm:$0xf]
      %v422 = vld [vmem:[%s376] sm:$0x1]
      %v424 = vlaneseq
      %v425 = vshrl.u32 %v424, 7
      %v426 = vsub.s32 0, %v425
      %v427 = vrot.slane %v422, %v426
      %v433 = vunpack.c.l.b16 %v402
      %v434 = vunpack.c.l.b16 %v403
      %v435 = vunpack.c.l.b16 %v404
      %v436 = vunpack.c.l.b16 %v405
      %v437 = vpack.c.b16 %v434, %v433
      %v438 = vpack.c.b16 %v436, %v435
      %v457 = vunpack.c.l.b16 %v406
      %v458 = vunpack.c.l.b16 %v407
      %v459 = vunpack.c.l.b16 %v408
      %v460 = vunpack.c.l.b16 %v409
      %v461 = vunpack.c.l.b16 %v410
      %v462 = vunpack.c.l.b16 %v411
      %v463 = vunpack.c.l.b16 %v412
      %v464 = vunpack.c.l.b16 %v413
      %v465 = vunpack.c.l.b16 %v414
      %v466 = vunpack.c.l.b16 %v415
      %v467 = vunpack.c.l.b16 %v416
      %v468 = vunpack.c.l.b16 %v417
      %v469 = vunpack.c.l.b16 %v418
      %v470 = vunpack.c.l.b16 %v419
      %v471 = vunpack.c.l.b16 %v420
      %v472 = vunpack.c.l.b16 %v421
      %v473 = vpack.c.b16 %v458, %v457
      %v474 = vpack.c.b16 %v460, %v459
      %v475 = vpack.c.b16 %v462, %v461
      %v476 = vpack.c.b16 %v464, %v463
      %v477 = vpack.c.b16 %v466, %v465
      %v478 = vpack.c.b16 %v468, %v467
      %v479 = vpack.c.b16 %v470, %v469
      %v480 = vpack.c.b16 %v472, %v471
      %489 = vmatprep.subr.bf16.mxu0 0
      %490 = vmatpush1.bf16.msra.mxu0 %v480
      %491 = vmatprep.subr.bf16.mxu0 0
      %492 = vmatpush1.bf16.msra.mxu0 %v479
      %493 = vmatprep.subr.bf16.mxu0 0
      %494 = vmatpush1.bf16.msra.mxu0 %v478
      %495 = vmatprep.subr.bf16.mxu0 0
      %496 = vmatpush1.bf16.msra.mxu0 %v477
      %497 = vmatprep.subr.bf16.mxu0 0
      %498 = vmatpush1.bf16.msra.mxu0 %v476
      %499 = vmatprep.subr.bf16.mxu0 0
      %500 = vmatpush1.bf16.msra.mxu0 %v475
      %501 = vmatprep.subr.bf16.mxu0 0
      %502 = vmatpush1.bf16.msra.mxu0 %v474
      %503 = vmatprep.subr.bf16.mxu0 0
      %504 = vmatpush1.bf16.msra.mxu0 %v473
      %505 = vmatprep.subr.bf16.mxu0 0
      %506 = vmatpush2.bf16.msra.mxu0 0
      %507 = vmatprep.subr.bf16.mxu0 0
      %508 = vmatpush2.bf16.msra.mxu0 0
      %509 = vmatprep.subr.bf16.mxu0 0
      %510 = vmatpush2.bf16.msra.mxu0 0
      %511 = vmatprep.subr.bf16.mxu0 0
      %512 = vmatpush2.bf16.msra.mxu0 0
      %513 = vmatprep.subr.bf16.mxu0 0
      %514 = vmatpush2.bf16.msra.mxu0 0
      %515 = vmatprep.subr.bf16.mxu0 0
      %516 = vmatpush2.bf16.msra.mxu0 0
      %517 = vmatprep.subr.bf16.mxu0 0
      %518 = vmatpush2.bf16.msra.mxu0 0
      %519 = vmatprep.subr.bf16.mxu0 0
      %520 = vmatpush2.bf16.msra.mxu0 0
      %521 = vmatprep.mubr.bf16.mxu0 0
      %522 = vmatmul.mubr.bf16.gmra.mxu0 %v437
      %v523 = vpop.f32.mrf.mxu0
      %v524 = vadd.f32 %v427, %v523
      %v525 = vpop.f32.mrf.mxu0
      %v526 = vpop.f32.mrf.mxu0
      %v527 = vadd.f32 %v427, %v526
      %v528 = vpop.f32.mrf.mxu0
      %529 = vmatprep.mubr.bf16.mxu0 0
      %530 = vmatmul.mubr.bf16.gmra.mxu0 %v438
      %v531 = vpop.f32.mrf.mxu0
      %v532 = vadd.f32 %v427, %v531
      %v533 = vpop.f32.mrf.mxu0
      %v534 = vpop.f32.mrf.mxu0
      %v535 = vadd.f32 %v427, %v534
      %v536 = vpop.f32.mrf.mxu0
      %537 = vdwg.mxu0
      %v538 = vld [vmem:[%s384] sm:$0xf]
      %v539 = vld [vmem:[%s384 + $0x4] sm:$0xf]
      %v540 = vld [vmem:[%s384 + $0x8] sm:$0xf]
      %v541 = vld [vmem:[%s384 + $0xc] sm:$0xf]
      %v542 = vunpack.c.l.bf16 %v538
      %v543 = vunpack.c.l.bf16 %v539
      %v544 = vunpack.c.l.bf16 %v540
      %v545 = vunpack.c.l.bf16 %v541
      %v546 = vadd.f32 %v524, %v542
      %v547 = vadd.f32 %v527, %v543
      %v548 = vadd.f32 %v532, %v544
      %v549 = vadd.f32 %v535, %v545
      %550 = vadd.xlane.f32.xlu0 %v546
      %v551 = vpop.xlane.xlu0 %550
      %552 = vadd.xlane.f32.xlu0 %v547
      %v553 = vpop.xlane.xlu0 %552
      %554 = vadd.xlane.f32.xlu0 %v548
      %v555 = vpop.xlane.xlu0 %554
      %556 = vadd.xlane.f32.xlu0 %v549
      %v557 = vpop.xlane.xlu0 %556
      %v558 = vrcp.pop 128.0
      %v559 = vmul.f32 %v551, %v558
      %v560 = vmul.f32 %v553, %v558
      %v561 = vmul.f32 %v555, %v558
      %v562 = vmul.f32 %v557, %v558
      %v563 = vsub.f32 %v546, %v559
      %v564 = vsub.f32 %v547, %v560
      %v565 = vsub.f32 %v548, %v561
      %v566 = vsub.f32 %v549, %v562
      %v567 = vmul.f32 %v563, %v563
      %v568 = vmul.f32 %v564, %v564
      %v569 = vmul.f32 %v565, %v565
      %v570 = vmul.f32 %v566, %v566
      %571 = vadd.xlane.f32.xlu0 %v567
      %v572 = vpop.xlane.xlu0 %571
      %573 = vadd.xlane.f32.xlu0 %v568
      %v574 = vpop.xlane.xlu0 %573
      %575 = vadd.xlane.f32.xlu0 %v569
      %v576 = vpop.xlane.xlu0 %575
      %577 = vadd.xlane.f32.xlu0 %v570
      %v578 = vpop.xlane.xlu0 %577
      %v579 = vmul.f32 %v572, %v558
      %v580 = vmul.f32 %v574, %v558
      %v581 = vmul.f32 %v576, %v558
      %v582 = vmul.f32 %v578, %v558
      %v583 = vadd.f32 %v579, 1e-05
      %v584 = vadd.f32 %v580, 1e-05
      %v585 = vadd.f32 %v581, 1e-05
      %v586 = vadd.f32 %v582, 1e-05
      %v587 = vrsqrt.pop %v583
      %v588 = vrsqrt.pop %v584
      %v589 = vrsqrt.pop %v585
      %v590 = vrsqrt.pop %v586
      %v591 = vmul.f32 %v563, %v587
      %v592 = vmul.f32 %v564, %v588
      %v593 = vmul.f32 %v565, %v589
      %v594 = vmul.f32 %v566, %v590
      %v595 = vld [vmem:[%s388] sm:$0x1]
      %v597 = vlaneseq
      %v598 = vshrl.u32 %v597, 7
      %v599 = vsub.s32 0, %v598
      %v600 = vrot.slane %v595, %v599
      %v602 = vmul.f32 %v591, %v600
      %v603 = vmul.f32 %v592, %v600
      %v604 = vmul.f32 %v593, %v600
      %v605 = vmul.f32 %v594, %v600
      %v606 = vld [vmem:[%s391] sm:$0x1]
      %v608 = vlaneseq
      %v609 = vshrl.u32 %v608, 7
      %v610 = vsub.s32 0, %v609
      %v611 = vrot.slane %v606, %v610
      %v613 = vadd.f32 %v602, %v611
      %v614 = vadd.f32 %v603, %v611
      %v615 = vadd.f32 %v604, %v611
      %v616 = vadd.f32 %v605, %v611
      %v617 = vpack.c.bf16 %v614, %v613
      %v618 = vpack.c.bf16 %v616, %v615
      %v621 = vunpack.c.l.b16 %v617
      %v622 = vunpack.c.h.b16 %v617
      %v623 = vunpack.c.l.b16 %v618
      %v624 = vunpack.c.h.b16 %v618
      %v625 = vpack.c.b16 %v621, %v621
      %v626 = vpack.c.b16 %v622, %v622
      %v627 = vpack.c.b16 %v623, %v623
      %v628 = vpack.c.b16 %v624, %v624
      %633 = vst [vmem:[%s399] sm:$0xf] %v625
      %634 = vst [vmem:[%s399 + $0x4] sm:$0xf] %v626
      %635 = vst [vmem:[%s399 + $0x8] sm:$0xf] %v627
      %636 = vst [vmem:[%s399 + $0xc] sm:$0xf] %v628
      %s637 = smul.u32 4, %s22
      %p638 = scmp.lt.s32.totalorder %s637, 7
      %s639 = scalar_select %p638, %s637, 7
      %p640 = scmp.lt.s32.totalorder %s23, 0
      %s641 = scalar_select %p640, %s23, 0
      %s642 = sadd.s32 %s641, %s639
      %s643 = smul.addr %s642, 4
      %s644 = scalar_lea.vmem %s6, %s643
      // Predicated region
      $region45: #{transformer_forward.13} parent=43 // pred_check
        %p645 = pneg %p218
      $region46: #{transformer_forward.13} parent=43 // pred_check_branch
        %647 = sbr.rel (%p645) target = $region48
      $region47: #{transformer_forward.13} parent=43 // pred_region
        %s648 = smul.u32 4, %s22
      $region48: #{transformer_forward.13} parent=43 // pred_fallthru
        _
    $region44: #{transformer_forward.13} parent=5 // pred_fallthru
      _
    %p649 = scmp.le.s32.totalorder 2, %s12
    // Predicated region
    $region49: #{transformer_forward.13} parent=5 // pred_check
      %p650 = pneg %p649
    $region50: #{transformer_forward.13} parent=5 // pred_check_branch
      %652 = sbr.rel (%p650) target = $region52
    $region51: #{transformer_forward.13} parent=5 // pred_region
      %s653 = ssub.s32 %s12, 2
      // Predicated region
      $region53: #{transformer_forward.13} parent=51 // pred_check
        %p654 = pneg %p224
      $region54: #{transformer_forward.13} parent=51 // pred_check_branch
        %656 = sbr.rel (%p654) target = $region56
      $region55: #{transformer_forward.13} parent=51 // pred_region
        %s657 = smul.u32 4, %s25
        %p658 = scmp.lt.s32.totalorder %s657, 7
        %s659 = scalar_select %p658, %s657, 7
        %p660 = scmp.lt.s32.totalorder %s26, 0
        %s661 = scalar_select %p660, %s26, 0
        %s662 = sadd.s32 %s661, %s659
        %s663 = smul.addr %s662, 4
        %s664 = scalar_lea.vmem %s6, %s663
      $region56: #{transformer_forward.13} parent=51 // pred_fallthru
        _
    $region52: #{transformer_forward.13} parent=5 // pred_fallthru
      _
  $region6: #{transformer_forward.13} parent=0 // loop_footer
    %s16 = sadd.s32 1, %s12
  $region7: #{transformer_forward.13} parent=0 // loop_footer_branch
    %11 = sbr.rel target = $region3
  $region8: #{transformer_forward.13} parent=0 // loop_exit
    _

// kernel: transformer_forward.12
$region0: #{transformer_forward.12}
  #allocation0 [shape = 'u32[]', space=smem, size = 0x4, offset = 0x4, fixed_abs, tag = 'smem constant byte address 0x4 - core index']
  #allocation1 [shape = 'u32[144,128]{1,0:T(1,128)}', space=vmem, size = 0x12000, scoped, tag = 'internal scratch']
  %s0 = inlined_call_operand.vmem [shape: bf16[64,384], index: 0, kind: input, shape index: {}]
  %s1 = inlined_call_operand.vmem [shape: bf16[64,128], index: 1, kind: output, shape index: {}]
  %s2 = sld [smem:[#allocation0]]
  $region37: #{transformer_forward.12} parent=0
    _
  %s4 = ssub.s32 1, %s2
  %s5 = scalar_select 0, %s4, %s2
  loop: start=0, step=1, limit=6
  $region2: #{transformer_forward.12} parent=0 // loop_pre_header
    _
  $region3: #{transformer_forward.12} parent=0 // loop_header
    %s7 = sphi 0, %s11
    %p8 = scmp.ge.s32.totalorder %s7, 6
    %s17 = sphi 0, %s19
    %s20 = sphi 0, %s17
    %s21 = sphi 0, %s20
    %s37 = sphi 0, %s21
    %s43 = sphi 0, %s45
    %s46 = sphi 0, %s43
    %s47 = sphi 0, %s46
    %s63 = sphi 0, %s47
  $region4: #{transformer_forward.12} parent=0 // loop_header_branch
    %10 = sbr.rel (%p8) target = $region8
  $region5: #{transformer_forward.12} parent=0 // loop_body
    %s12 = ssub.s32 %s7, 1
    %s13 = ssub.s32 %s7, 2
    %s14 = sadd.s32 %s7, 1
    %s15 = ssub.s32 %s7, %s14
    %p16 = scmp.eq.s32.totalorder %s15, 0
    %s18 = sadd.s32 %s17, 1
    %s19 = scalar_select %p16, %s17, %s18
    %p22 = pneg %p16
    %p23 = scmp.eq.s32.totalorder %s7, 3
    %p24 = por %p22, %p23
    %p25 = scmp.ne.s32.totalorder %s17, %s20
    %p26 = scmp.eq.s32.totalorder %s7, 0
    %p27 = por %p25, %p26
    %p28 = scmp.ne.s32.totalorder %s17, %s20
    %p29 = scmp.eq.s32.totalorder %s12, 3
    %p30 = por %p28, %p29
    %p31 = scmp.ne.s32.totalorder %s20, %s21
    %p32 = scmp.eq.s32.totalorder %s12, 0
    %p33 = por %p31, %p32
    %p34 = scmp.ne.s32.totalorder %s20, %s21
    %p35 = scmp.eq.s32.totalorder %s13, 3
    %p36 = por %p34, %p35
    %p38 = scmp.ne.s32.totalorder %s21, %s37
    %p39 = scmp.eq.s32.totalorder %s13, 0
    %p40 = por %p38, %p39
    %s41 = ssub.s32 %s7, %s14
    %p42 = scmp.eq.s32.totalorder %s41, 0
    %s44 = sadd.s32 %s43, 1
    %s45 = scalar_select %p42, %s43, %s44
    %p48 = pneg %p42
    %p49 = scmp.eq.s32.totalorder %s7, 3
    %p50 = por %p48, %p49
    %p51 = scmp.ne.s32.totalorder %s43, %s46
    %p52 = scmp.eq.s32.totalorder %s7, 0
    %p53 = por %p51, %p52
    %p54 = scmp.ne.s32.totalorder %s43, %s46
    %p55 = scmp.eq.s32.totalorder %s12, 3
    %p56 = por %p54, %p55
    %p57 = scmp.ne.s32.totalorder %s46, %s47
    %p58 = scmp.eq.s32.totalorder %s12, 0
    %p59 = por %p57, %p58
    %p60 = scmp.ne.s32.totalorder %s46, %s47
    %p61 = scmp.eq.s32.totalorder %s13, 3
    %p62 = por %p60, %p61
    %p64 = scmp.ne.s32.totalorder %s47, %s63
    %p65 = scmp.eq.s32.totalorder %s13, 0
    %p66 = por %p64, %p65
    %p67 = scmp.le.s32.totalorder 1, %s7
    %p68 = scmp.lt.s32.totalorder %s7, 5
    %p69 = pnand %p67, %p68
    %p70 = pneg %p69
    // Predicated region
    $region9: #{transformer_forward.12} parent=5 // pred_check
      _
    $region10: #{transformer_forward.12} parent=5 // pred_check_branch
      %72 = sbr.rel (%p69) target = $region12
    $region11: #{transformer_forward.12} parent=5 // pred_region
      %s73 = ssub.s32 %s7, 1
    $region12: #{transformer_forward.12} parent=5 // pred_fallthru
      _
    %p74 = scmp.lt.s32.totalorder %s7, 4
    // Predicated region
    $region13: #{transformer_forward.12} parent=5 // pred_check
      %p75 = pneg %p74
    $region14: #{transformer_forward.12} parent=5 // pred_check_branch
      %77 = sbr.rel (%p75) target = $region16
    $region15: #{transformer_forward.12} parent=5 // pred_region
      // Predicated region
      $region17: #{transformer_forward.12} parent=15 // pred_check
        %p78 = pneg %p27
      $region18: #{transformer_forward.12} parent=15 // pred_check_branch
        %80 = sbr.rel (%p78) target = $region20
      $region19: #{transformer_forward.12} parent=15 // pred_region
        %s81 = smul.u32 2, %s7
        %p82 = scmp.lt.s32.totalorder %s81, 7
        %s83 = scalar_select %p82, %s81, 7
        %s84 = smul.addr %s83, 3
        %s85 = smul.addr %s84, 4
        %s86 = scalar_lea.vmem %s0, %s85
        %s87 = smul.u32 2, %s7
      $region20: #{transformer_forward.12} parent=15 // pred_fallthru
        _
    $region16: #{transformer_forward.12} parent=5 // pred_fallthru
      _
    %p88 = scmp.le.s32.totalorder 1, %s7
    %p89 = scmp.lt.s32.totalorder %s7, 5
    %p90 = pnand %p88, %p89
    %p91 = pneg %p90
    // Predicated region
    $region21: #{transformer_forward.12} parent=5 // pred_check
      _
    $region22: #{transformer_forward.12} parent=5 // pred_check_branch
      %93 = sbr.rel (%p90) target = $region24
    $region23: #{transformer_forward.12} parent=5 // pred_region
      %s94 = ssub.s32 %s7, 1
      %s95 = smul.u32 2, %s12
      %p96 = scmp.lt.s32.totalorder %s95, 7
      %s97 = scalar_select %p96, %s95, 7
      %s98 = smul.addr %s97, 3
      %s99 = smul.addr %s98, 4
      %s100 = scalar_lea.vmem %s0, %s99
      %p101 = pneg %p33
      %p102 = pneg %p30
      %p103 = pneg %p59
      %p104 = pneg %p56
      %s105 = smul.u32 2, %s12
      %p106 = scmp.lt.s32.totalorder %s105, 7
      %s107 = scalar_select %p106, %s105, 7
      %s108 = smul.addr %s107, 4
      %s109 = scalar_lea.vmem %s1, %s108
      %s110 = smul.u32 2, %s12
      %p111 = scmp.lt.s32.totalorder %s110, 7
      %s112 = scalar_select %p111, %s110, 7
      %s113 = smul.addr %s112, 3
      %s114 = smul.addr %s113, 4
      %s115 = scalar_lea.vmem %s0, %s114
      %s116 = smul.u32 2, %s12
      %s117 = smul.u32 2, %s12
      %p118 = scmp.lt.s32.totalorder %s117, 7
      %s119 = scalar_select %p118, %s117, 7
      %s120 = smul.addr %s119, 4
      %s121 = scalar_lea.vmem %s1, %s120
      %s122 = smul.u32 2, %s12
      %v124 = vld [vmem:[%s115] sm:$0xff]
      %v125 = vld [vmem:[%s115 + $0x8] sm:$0xf]
      %v126 = vld [vmem:[%s115 + $0xc] sm:$0xff]
      %v127 = vld [vmem:[%s115 + $0x14] sm:$0xf]
      %v128 = vlaneseq
      %v129 = vshrl.u32 %v128, 7
      %v130 = vadd.s32 %v129, 8
      %v131 = vlaneseq
      %v132 = vand.u32 %v131, 127
      %vm133 = vcmp.ge.s32.totalorder %v129, %v132
      %vm134 = vcmp.ge.s32.totalorder %v130, %v132
      %v137 = vunpack.c.l.b16 %v124
      %v138 = vunpack.c.l.b16 %v126
      %v139 = vpack.c.b16 %v138, %v137
      %v140 = vunpack.c.h.b16 %v124
      %v141 = vunpack.c.h.b16 %v126
      %v142 = vpack.c.b16 %v141, %v140
      %vm143 = vcmask 261120
      %v145 = vsel %vm143, %v139, 0
      %v148 = vsel %vm143, %v142, 0
      %150 = vmatprep.subr.bf16.mxu0 0
      %151 = vmatpush1.bf16.xpose.msra.mxu0 0
      %152 = vmatprep.subr.bf16.mxu0 0
      %153 = vmatpush1.bf16.xpose.msra.mxu0 0
      %154 = vmatprep.subr.bf16.mxu0 0
      %155 = vmatpush1.bf16.xpose.msra.mxu0 0
      %156 = vmatprep.subr.bf16.mxu0 0
      %157 = vmatpush1.bf16.xpose.msra.mxu0 0
      %158 = vmatprep.subr.bf16.mxu0 0
      %159 = vmatpush1.bf16.xpose.msra.mxu0 0
      %160 = vmatprep.subr.bf16.mxu0 0
      %161 = vmatpush1.bf16.xpose.msra.mxu0 0
      %162 = vmatprep.subr.bf16.mxu0 0
      %163 = vmatpush1.bf16.xpose.msra.mxu0 0
      %164 = vmatprep.subr.bf16.mxu0 0
      %165 = vmatpush1.bf16.xpose.msra.mxu0 %v148
      %166 = vmatprep.subr.bf16.mxu0 0
      %167 = vmatpush2.bf16.xpose.msra.mxu0 0
      %168 = vmatprep.subr.bf16.mxu0 0
      %169 = vmatpush2.bf16.xpose.msra.mxu0 0
      %170 = vmatprep.subr.bf16.mxu0 0
      %171 = vmatpush2.bf16.xpose.msra.mxu0 0
      %172 = vmatprep.subr.bf16.mxu0 0
      %173 = vmatpush2.bf16.xpose.msra.mxu0 0
      %174 = vmatprep.subr.bf16.mxu0 0
      %175 = vmatpush2.bf16.xpose.msra.mxu0 0
      %176 = vmatprep.subr.bf16.mxu0 0
      %177 = vmatpush2.bf16.xpose.msra.mxu0 0
      %178 = vmatprep.subr.bf16.mxu0 0
      %179 = vmatpush2.bf16.xpose.msra.mxu0 0
      %180 = vmatprep.subr.bf16.mxu0 0
      %181 = vmatpush2.bf16.xpose.msra.mxu0 0
      %182 = vmatprep.mubr.bf16.mxu0 0
      %183 = vmatmul.mubr.bf16.gmra.mxu0 %v145
      %v184 = vpop.f32.mrf.mxu0
      %v185 = vadd.f32 0.0, %v184
      %v186 = vpop.f32.mrf.mxu0
      %v187 = vpop.f32.mrf.mxu0
      %v188 = vadd.f32 0.0, %v187
      %v189 = vpop.f32.mrf.mxu0
      %190 = vdwg.mxu0
      %v191 = vmul.f32 %v185, 0.17677669
      %v192 = vmul.f32 %v188, 0.17677669
      %v193 = vsel %vm133, %v191, -1e+30
      %v194 = vsel %vm134, %v192, -1e+30
      %vm195 = vcmask 130048
      %v196 = vsel %vm195, %v193, -inf
      %197 = vmax.xlane.f32.xlu0 %v196
      %v198 = vpop.xlane.xlu0 %197
      %v199 = vsel %vm195, %v194, -inf
      %200 = vmax.xlane.f32.xlu0 %v199
      %v201 = vpop.xlane.xlu0 %200
      %v202 = vsub.f32 %v193, %v198
      %v203 = vsub.f32 %v194, %v201
      %v204 = vmul.f32 %v202, 1.442695
      %v205 = vpow.pop %v204
      %v206 = vmul.f32 %v203, 1.442695
      %v207 = vpow.pop %v206
      %v208 = vsel %vm195, %v205, 0.0
      %209 = vadd.xlane.f32.xlu0 %v208
      %v210 = vpop.xlane.xlu0 %209
      %v211 = vsel %vm195, %v207, 0.0
      %212 = vadd.xlane.f32.xlu0 %v211
      %v213 = vpop.xlane.xlu0 %212
      %v214 = vpack.c.bf16 %v207, %v205
      %v217 = vunpack.c.l.b16 %v125
      %v218 = vunpack.c.l.b16 %v127
      %v219 = vpack.c.b16 %v218, %v217
      %v222 = vsel %vm195, %v214, 0
      %224 = vmatprep.subr.bf16.mxu0 0
      %225 = vmatpush1.bf16.msra.mxu0 0
      %226 = vmatprep.subr.bf16.mxu0 0
      %227 = vmatpush1.bf16.msra.mxu0 0
      %228 = vmatprep.subr.bf16.mxu0 0
      %229 = vmatpush1.bf16.msra.mxu0 0
      %230 = vmatprep.subr.bf16.mxu0 0
      %231 = vmatpush1.bf16.msra.mxu0 0
      %232 = vmatprep.subr.bf16.mxu0 0
      %233 = vmatpush1.bf16.msra.mxu0 0
      %234 = vmatprep.subr.bf16.mxu0 0
      %235 = vmatpush1.bf16.msra.mxu0 0
      %236 = vmatprep.subr.bf16.mxu0 0
      %237 = vmatpush1.bf16.msra.mxu0 0
      %238 = vmatprep.subr.bf16.mxu0 0
      %239 = vmatpush1.bf16.msra.mxu0 %v219
      %240 = vmatprep.subr.bf16.mxu0 0
      %241 = vmatpush2.bf16.msra.mxu0 0
      %242 = vmatprep.subr.bf16.mxu0 0
      %243 = vmatpush2.bf16.msra.mxu0 0
      %244 = vmatprep.subr.bf16.mxu0 0
      %245 = vmatpush2.bf16.msra.mxu0 0
      %246 = vmatprep.subr.bf16.mxu0 0
      %247 = vmatpush2.bf16.msra.mxu0 0
      %248 = vmatprep.subr.bf16.mxu0 0
      %249 = vmatpush2.bf16.msra.mxu0 0
      %250 = vmatprep.subr.bf16.mxu0 0
      %251 = vmatpush2.bf16.msra.mxu0 0
      %252 = vmatprep.subr.bf16.mxu0 0
      %253 = vmatpush2.bf16.msra.mxu0 0
      %254 = vmatprep.subr.bf16.mxu0 0
      %255 = vmatpush2.bf16.msra.mxu0 0
      %256 = vmatprep.mubr.bf16.mxu0 0
      %257 = vmatmul.mubr.bf16.gmra.mxu0 %v222
      %v258 = vpop.f32.mrf.mxu0
      %v259 = vadd.f32 0.0, %v258
      %v260 = vpop.f32.mrf.mxu0
      %v261 = vpop.f32.mrf.mxu0
      %v262 = vadd.f32 0.0, %v261
      %v263 = vpop.f32.mrf.mxu0
      %264 = vdwg.mxu0
      %v265 = vrcp.pop %v210
      %v266 = vrcp.pop %v213
      %v267 = vmul.f32 %v259, %v265
      %v268 = vmul.f32 %v262, %v266
      %269 = vrot.lane.b32.xlu0 %v139, 96
      %v270 = vpop.permute.xlu0 %269
      %271 = vrot.lane.b32.xlu0 %v142, 96
      %v272 = vpop.permute.xlu0 %271
      %v274 = vsel %vm143, %v270, 0
      %v277 = vsel %vm143, %v272, 0
      %279 = vmatprep.subr.bf16.mxu0 0
      %280 = vmatpush1.bf16.xpose.msra.mxu0 0
      %281 = vmatprep.subr.bf16.mxu0 0
      %282 = vmatpush1.bf16.xpose.msra.mxu0 0
      %283 = vmatprep.subr.bf16.mxu0 0
      %284 = vmatpush1.bf16.xpose.msra.mxu0 0
      %285 = vmatprep.subr.bf16.mxu0 0
      %286 = vmatpush1.bf16.xpose.msra.mxu0 0
      %287 = vmatprep.subr.bf16.mxu0 0
      %288 = vmatpush1.bf16.xpose.msra.mxu0 0
      %289 = vmatprep.subr.bf16.mxu0 0
      %290 = vmatpush1.bf16.xpose.msra.mxu0 0
      %291 = vmatprep.subr.bf16.mxu0 0
      %292 = vmatpush1.bf16.xpose.msra.mxu0 0
      %293 = vmatprep.subr.bf16.mxu0 0
      %294 = vmatpush1.bf16.xpose.msra.mxu0 %v277
      %295 = vmatprep.subr.bf16.mxu0 0
      %296 = vmatpush2.bf16.xpose.msra.mxu0 0
      %297 = vmatprep.subr.bf16.mxu0 0
      %298 = vmatpush2.bf16.xpose.msra.mxu0 0
      %299 = vmatprep.subr.bf16.mxu0 0
      %300 = vmatpush2.bf16.xpose.msra.mxu0 0
      %301 = vmatprep.subr.bf16.mxu0 0
      %302 = vmatpush2.bf16.xpose.msra.mxu0 0
      %303 = vmatprep.subr.bf16.mxu0 0
      %304 = vmatpush2.bf16.xpose.msra.mxu0 0
      %305 = vmatprep.subr.bf16.mxu0 0
      %306 = vmatpush2.bf16.xpose.msra.mxu0 0
      %307 = vmatprep.subr.bf16.mxu0 0
      %308 = vmatpush2.bf16.xpose.msra.mxu0 0
      %309 = vmatprep.subr.bf16.mxu0 0
      %310 = vmatpush2.bf16.xpose.msra.mxu0 0
      %311 = vmatprep.mubr.bf16.mxu0 0
      %312 = vmatmul.mubr.bf16.gmra.mxu0 %v274
      %v313 = vpop.f32.mrf.mxu0
      %v314 = vadd.f32 0.0, %v313
      %v315 = vpop.f32.mrf.mxu0
      %v316 = vpop.f32.mrf.mxu0
      %v317 = vadd.f32 0.0, %v316
      %v318 = vpop.f32.mrf.mxu0
      %319 = vdwg.mxu0
      %v320 = vmul.f32 %v314, 0.17677669
      %v321 = vmul.f32 %v317, 0.17677669
      %v322 = vsel %vm133, %v320, -1e+30
      %v323 = vsel %vm134, %v321, -1e+30
      %v324 = vsel %vm195, %v322, -inf
      %325 = vmax.xlane.f32.xlu0 %v324
      %v326 = vpop.xlane.xlu0 %325
      %v327 = vsel %vm195, %v323, -inf
      %328 = vmax.xlane.f32.xlu0 %v327
      %v329 = vpop.xlane.xlu0 %328
      %v330 = vsub.f32 %v322, %v326
      %v331 = vsub.f32 %v323, %v329
      %v332 = vmul.f32 %v330, 1.442695
      %v333 = vpow.pop %v332
      %v334 = vmul.f32 %v331, 1.442695
      %v335 = vpow.pop %v334
      %v336 = vsel %vm195, %v333, 0.0
      %337 = vadd.xlane.f32.xlu0 %v336
      %v338 = vpop.xlane.xlu0 %337
      %v339 = vsel %vm195, %v335, 0.0
      %340 = vadd.xlane.f32.xlu0 %v339
      %v341 = vpop.xlane.xlu0 %340
      %v342 = vpack.c.bf16 %v335, %v333
      %343 = vrot.lane.b32.xlu0 %v219, 96
      %v344 = vpop.permute.xlu0 %343
      %v347 = vsel %vm195, %v342, 0
      %349 = vmatprep.subr.bf16.mxu0 0
      %350 = vmatpush1.bf16.msra.mxu0 0
      %351 = vmatprep.subr.bf16.mxu0 0
      %352 = vmatpush1.bf16.msra.mxu0 0
      %353 = vmatprep.subr.bf16.mxu0 0
      %354 = vmatpush1.bf16.msra.mxu0 0
      %355 = vmatprep.subr.bf16.mxu0 0
      %356 = vmatpush1.bf16.msra.mxu0 0
      %357 = vmatprep.subr.bf16.mxu0 0
      %358 = vmatpush1.bf16.msra.mxu0 0
      %359 = vmatprep.subr.bf16.mxu0 0
      %360 = vmatpush1.bf16.msra.mxu0 0
      %361 = vmatprep.subr.bf16.mxu0 0
      %362 = vmatpush1.bf16.msra.mxu0 0
      %363 = vmatprep.subr.bf16.mxu0 0
      %364 = vmatpush1.bf16.msra.mxu0 %v344
      %365 = vmatprep.subr.bf16.mxu0 0
      %366 = vmatpush2.bf16.msra.mxu0 0
      %367 = vmatprep.subr.bf16.mxu0 0
      %368 = vmatpush2.bf16.msra.mxu0 0
      %369 = vmatprep.subr.bf16.mxu0 0
      %370 = vmatpush2.bf16.msra.mxu0 0
      %371 = vmatprep.subr.bf16.mxu0 0
      %372 = vmatpush2.bf16.msra.mxu0 0
      %373 = vmatprep.subr.bf16.mxu0 0
      %374 = vmatpush2.bf16.msra.mxu0 0
      %375 = vmatprep.subr.bf16.mxu0 0
      %376 = vmatpush2.bf16.msra.mxu0 0
      %377 = vmatprep.subr.bf16.mxu0 0
      %378 = vmatpush2.bf16.msra.mxu0 0
      %379 = vmatprep.subr.bf16.mxu0 0
      %380 = vmatpush2.bf16.msra.mxu0 0
      %381 = vmatprep.mubr.bf16.mxu0 0
      %382 = vmatmul.mubr.bf16.gmra.mxu0 %v347
      %v383 = vpop.f32.mrf.mxu0
      %v384 = vadd.f32 0.0, %v383
      %v385 = vpop.f32.mrf.mxu0
      %v386 = vpop.f32.mrf.mxu0
      %v387 = vadd.f32 0.0, %v386
      %v388 = vpop.f32.mrf.mxu0
      %389 = vdwg.mxu0
      %v390 = vrcp.pop %v338
      %v391 = vrcp.pop %v341
      %v392 = vmul.f32 %v384, %v390
      %v393 = vmul.f32 %v387, %v391
      %394 = vrot.lane.b32.xlu0 %v139, 64
      %v395 = vpop.permute.xlu0 %394
      %396 = vrot.lane.b32.xlu0 %v142, 64
      %v397 = vpop.permute.xlu0 %396
      %v399 = vsel %vm143, %v395, 0
      %v402 = vsel %vm143, %v397, 0
      %404 = vmatprep.subr.bf16.mxu0 0
      %405 = vmatpush1.bf16.xpose.msra.mxu0 0
      %406 = vmatprep.subr.bf16.mxu0 0
      %407 = vmatpush1.bf16.xpose.msra.mxu0 0
      %408 = vmatprep.subr.bf16.mxu0 0
      %409 = vmatpush1.bf16.xpose.msra.mxu0 0
      %410 = vmatprep.subr.bf16.mxu0 0
      %411 = vmatpush1.bf16.xpose.msra.mxu0 0
      %412 = vmatprep.subr.bf16.mxu0 0
      %413 = vmatpush1.bf16.xpose.msra.mxu0 0
      %414 = vmatprep.subr.bf16.mxu0 0
      %415 = vmatpush1.bf16.xpose.msra.mxu0 0
      %416 = vmatprep.subr.bf16.mxu0 0
      %417 = vmatpush1.bf16.xpose.msra.mxu0 0
      %418 = vmatprep.subr.bf16.mxu0 0
      %419 = vmatpush1.bf16.xpose.msra.mxu0 %v402
      %420 = vmatprep.subr.bf16.mxu0 0
      %421 = vmatpush2.bf16.xpose.msra.mxu0 0
      %422 = vmatprep.subr.bf16.mxu0 0
      %423 = vmatpush2.bf16.xpose.msra.mxu0 0
      %424 = vmatprep.subr.bf16.mxu0 0
      %425 = vmatpush2.bf16.xpose.msra.mxu0 0
      %426 = vmatprep.subr.bf16.mxu0 0
      %427 = vmatpush2.bf16.xpose.msra.mxu0 0
      %428 = vmatprep.subr.bf16.mxu0 0
      %429 = vmatpush2.bf16.xpose.msra.mxu0 0
      %430 = vmatprep.subr.bf16.mxu0 0
      %431 = vmatpush2.bf16.xpose.msra.mxu0 0
      %432 = vmatprep.subr.bf16.mxu0 0
      %433 = vmatpush2.bf16.xpose.msra.mxu0 0
      %434 = vmatprep.subr.bf16.mxu0 0
      %435 = vmatpush2.bf16.xpose.msra.mxu0 0
      %436 = vmatprep.mubr.bf16.mxu0 0
      %437 = vmatmul.mubr.bf16.gmra.mxu0 %v399
      %v438 = vpop.f32.mrf.mxu0
      %v439 = vadd.f32 0.0, %v438
      %v440 = vpop.f32.mrf.mxu0
      %v441 = vpop.f32.mrf.mxu0
      %v442 = vadd.f32 0.0, %v441
      %v443 = vpop.f32.mrf.mxu0
      %444 = vdwg.mxu0
      %v445 = vmul.f32 %v439, 0.17677669
      %v446 = vmul.f32 %v442, 0.17677669
      %v447 = vsel %vm133, %v445, -1e+30
      %v448 = vsel %vm134, %v446, -1e+30
      %v449 = vsel %vm195, %v447, -inf
      %450 = vmax.xlane.f32.xlu0 %v449
      %v451 = vpop.xlane.xlu0 %450
      %v452 = vsel %vm195, %v448, -inf
      %453 = vmax.xlane.f32.xlu0 %v452
      %v454 = vpop.xlane.xlu0 %453
      %v455 = vsub.f32 %v447, %v451
      %v456 = vsub.f32 %v448, %v454
      %v457 = vmul.f32 %v455, 1.442695
      %v458 = vpow.pop %v457
      %v459 = vmul.f32 %v456, 1.442695
      %v460 = vpow.pop %v459
      %v461 = vsel %vm195, %v458, 0.0
      %462 = vadd.xlane.f32.xlu0 %v461
      %v463 = vpop.xlane.xlu0 %462
      %v464 = vsel %vm195, %v460, 0.0
      %465 = vadd.xlane.f32.xlu0 %v464
      %v466 = vpop.xlane.xlu0 %465
      %v467 = vpack.c.bf16 %v460, %v458
      %468 = vrot.lane.b32.xlu0 %v219, 64
      %v469 = vpop.permute.xlu0 %468
      %v472 = vsel %vm195, %v467, 0
      %474 = vmatprep.subr.bf16.mxu0 0
      %475 = vmatpush1.bf16.msra.mxu0 0
      %476 = vmatprep.subr.bf16.mxu0 0
      %477 = vmatpush1.bf16.msra.mxu0 0
      %478 = vmatprep.subr.bf16.mxu0 0
      %479 = vmatpush1.bf16.msra.mxu0 0
      %480 = vmatprep.subr.bf16.mxu0 0
      %481 = vmatpush1.bf16.msra.mxu0 0
      %482 = vmatprep.subr.bf16.mxu0 0
      %483 = vmatpush1.bf16.msra.mxu0 0
      %484 = vmatprep.subr.bf16.mxu0 0
      %485 = vmatpush1.bf16.msra.mxu0 0
      %486 = vmatprep.subr.bf16.mxu0 0
      %487 = vmatpush1.bf16.msra.mxu0 0
      %488 = vmatprep.subr.bf16.mxu0 0
      %489 = vmatpush1.bf16.msra.mxu0 %v469
      %490 = vmatprep.subr.bf16.mxu0 0
      %491 = vmatpush2.bf16.msra.mxu0 0
      %492 = vmatprep.subr.bf16.mxu0 0
      %493 = vmatpush2.bf16.msra.mxu0 0
      %494 = vmatprep.subr.bf16.mxu0 0
      %495 = vmatpush2.bf16.msra.mxu0 0
      %496 = vmatprep.subr.bf16.mxu0 0
      %497 = vmatpush2.bf16.msra.mxu0 0
      %498 = vmatprep.subr.bf16.mxu0 0
      %499 = vmatpush2.bf16.msra.mxu0 0
      %500 = vmatprep.subr.bf16.mxu0 0
      %501 = vmatpush2.bf16.msra.mxu0 0
      %502 = vmatprep.subr.bf16.mxu0 0
      %503 = vmatpush2.bf16.msra.mxu0 0
      %504 = vmatprep.subr.bf16.mxu0 0
      %505 = vmatpush2.bf16.msra.mxu0 0
      %506 = vmatprep.mubr.bf16.mxu0 0
      %507 = vmatmul.mubr.bf16.gmra.mxu0 %v472
      %v508 = vpop.f32.mrf.mxu0
      %v509 = vadd.f32 0.0, %v508
      %v510 = vpop.f32.mrf.mxu0
      %v511 = vpop.f32.mrf.mxu0
      %v512 = vadd.f32 0.0, %v511
      %v513 = vpop.f32.mrf.mxu0
      %514 = vdwg.mxu0
      %v515 = vrcp.pop %v463
      %v516 = vrcp.pop %v466
      %v517 = vmul.f32 %v509, %v515
      %v518 = vmul.f32 %v512, %v516
      %519 = vrot.lane.b32.xlu0 %v139, 32
      %v520 = vpop.permute.xlu0 %519
      %521 = vrot.lane.b32.xlu0 %v142, 32
      %v522 = vpop.permute.xlu0 %521
      %v524 = vsel %vm143, %v520, 0
      %v527 = vsel %vm143, %v522, 0
      %529 = vmatprep.subr.bf16.mxu0 0
      %530 = vmatpush1.bf16.xpose.msra.mxu0 0
      %531 = vmatprep.subr.bf16.mxu0 0
      %532 = vmatpush1.bf16.xpose.msra.mxu0 0
      %533 = vmatprep.subr.bf16.mxu0 0
      %534 = vmatpush1.bf16.xpose.msra.mxu0 0
      %535 = vmatprep.subr.bf16.mxu0 0
      %536 = vmatpush1.bf16.xpose.msra.mxu0 0
      %537 = vmatprep.subr.bf16.mxu0 0
      %538 = vmatpush1.bf16.xpose.msra.mxu0 0
      %539 = vmatprep.subr.bf16.mxu0 0
      %540 = vmatpush1.bf16.xpose.msra.mxu0 0
      %541 = vmatprep.subr.bf16.mxu0 0
      %542 = vmatpush1.bf16.xpose.msra.mxu0 0
      %543 = vmatprep.subr.bf16.mxu0 0
      %544 = vmatpush1.bf16.xpose.msra.mxu0 %v527
      %545 = vmatprep.subr.bf16.mxu0 0
      %546 = vmatpush2.bf16.xpose.msra.mxu0 0
      %547 = vmatprep.subr.bf16.mxu0 0
      %548 = vmatpush2.bf16.xpose.msra.mxu0 0
      %549 = vmatprep.subr.bf16.mxu0 0
      %550 = vmatpush2.bf16.xpose.msra.mxu0 0
      %551 = vmatprep.subr.bf16.mxu0 0
      %552 = vmatpush2.bf16.xpose.msra.mxu0 0
      %553 = vmatprep.subr.bf16.mxu0 0
      %554 = vmatpush2.bf16.xpose.msra.mxu0 0
      %555 = vmatprep.subr.bf16.mxu0 0
      %556 = vmatpush2.bf16.xpose.msra.mxu0 0
      %557 = vmatprep.subr.bf16.mxu0 0
      %558 = vmatpush2.bf16.xpose.msra.mxu0 0
      %559 = vmatprep.subr.bf16.mxu0 0
      %560 = vmatpush2.bf16.xpose.msra.mxu0 0
      %561 = vmatprep.mubr.bf16.mxu0 0
      %562 = vmatmul.mubr.bf16.gmra.mxu0 %v524
      %v563 = vpop.f32.mrf.mxu0
      %v564 = vadd.f32 0.0, %v563
      %v565 = vpop.f32.mrf.mxu0
      %v566 = vpop.f32.mrf.mxu0
      %v567 = vadd.f32 0.0, %v566
      %v568 = vpop.f32.mrf.mxu0
      %569 = vdwg.mxu0
      %v570 = vmul.f32 %v564, 0.17677669
      %v571 = vmul.f32 %v567, 0.17677669
      %v572 = vsel %vm133, %v570, -1e+30
      %v573 = vsel %vm134, %v571, -1e+30
      %v574 = vsel %vm195, %v572, -inf
      %575 = vmax.xlane.f32.xlu0 %v574
      %v576 = vpop.xlane.xlu0 %575
      %v577 = vsel %vm195, %v573, -inf
      %578 = vmax.xlane.f32.xlu0 %v577
      %v579 = vpop.xlane.xlu0 %578
      %v580 = vsub.f32 %v572, %v576
      %v581 = vsub.f32 %v573, %v579
      %v582 = vmul.f32 %v580, 1.442695
      %v583 = vpow.pop %v582
      %v584 = vmul.f32 %v581, 1.442695
      %v585 = vpow.pop %v584
      %v586 = vsel %vm195, %v583, 0.0
      %587 = vadd.xlane.f32.xlu0 %v586
      %v588 = vpop.xlane.xlu0 %587
      %v589 = vsel %vm195, %v585, 0.0
      %590 = vadd.xlane.f32.xlu0 %v589
      %v591 = vpop.xlane.xlu0 %590
      %v592 = vpack.c.bf16 %v585, %v583
      %593 = vrot.lane.b32.xlu0 %v219, 32
      %v594 = vpop.permute.xlu0 %593
      %v597 = vsel %vm195, %v592, 0
      %599 = vmatprep.subr.bf16.mxu0 0
      %600 = vmatpush1.bf16.msra.mxu0 0
      %601 = vmatprep.subr.bf16.mxu0 0
      %602 = vmatpush1.bf16.msra.mxu0 0
      %603 = vmatprep.subr.bf16.mxu0 0
      %604 = vmatpush1.bf16.msra.mxu0 0
      %605 = vmatprep.subr.bf16.mxu0 0
      %606 = vmatpush1.bf16.msra.mxu0 0
      %607 = vmatprep.subr.bf16.mxu0 0
      %608 = vmatpush1.bf16.msra.mxu0 0
      %609 = vmatprep.subr.bf16.mxu0 0
      %610 = vmatpush1.bf16.msra.mxu0 0
      %611 = vmatprep.subr.bf16.mxu0 0
      %612 = vmatpush1.bf16.msra.mxu0 0
      %613 = vmatprep.subr.bf16.mxu0 0
      %614 = vmatpush1.bf16.msra.mxu0 %v594
      %615 = vmatprep.subr.bf16.mxu0 0
      %616 = vmatpush2.bf16.msra.mxu0 0
      %617 = vmatprep.subr.bf16.mxu0 0
      %618 = vmatpush2.bf16.msra.mxu0 0
      %619 = vmatprep.subr.bf16.mxu0 0
      %620 = vmatpush2.bf16.msra.mxu0 0
      %621 = vmatprep.subr.bf16.mxu0 0
      %622 = vmatpush2.bf16.msra.mxu0 0
      %623 = vmatprep.subr.bf16.mxu0 0
      %624 = vmatpush2.bf16.msra.mxu0 0
      %625 = vmatprep.subr.bf16.mxu0 0
      %626 = vmatpush2.bf16.msra.mxu0 0
      %627 = vmatprep.subr.bf16.mxu0 0
      %628 = vmatpush2.bf16.msra.mxu0 0
      %629 = vmatprep.subr.bf16.mxu0 0
      %630 = vmatpush2.bf16.msra.mxu0 0
      %631 = vmatprep.mubr.bf16.mxu0 0
      %632 = vmatmul.mubr.bf16.gmra.mxu0 %v597
      %v633 = vpop.f32.mrf.mxu0
      %v634 = vadd.f32 0.0, %v633
      %v635 = vpop.f32.mrf.mxu0
      %v636 = vpop.f32.mrf.mxu0
      %v637 = vadd.f32 0.0, %v636
      %v638 = vpop.f32.mrf.mxu0
      %639 = vdwg.mxu0
      %v640 = vrcp.pop %v588
      %v641 = vrcp.pop %v591
      %v642 = vmul.f32 %v634, %v640
      %v643 = vmul.f32 %v637, %v641
      %646 = vrot.lane.b32.xlu0 %v392, 32
      %v647 = vpop.permute.xlu0 %646
      %648 = vrot.lane.b32.xlu0 %v393, 32
      %v649 = vpop.permute.xlu0 %648
      %654 = vrot.lane.b32.xlu0 %v517, 64
      %v655 = vpop.permute.xlu0 %654
      %656 = vrot.lane.b32.xlu0 %v518, 64
      %v657 = vpop.permute.xlu0 %656
      %662 = vrot.lane.b32.xlu0 %v642, 96
      %v663 = vpop.permute.xlu0 %662
      %664 = vrot.lane.b32.xlu0 %v643, 96
      %v665 = vpop.permute.xlu0 %664
      %v668 = vsel %vm143, %v267, %v647
      %v669 = vsel %vm143, %v268, %v649
      %vm670 = vcmask 523264
      %v671 = vsel %vm670, %v668, %v655
      %v672 = vsel %vm670, %v669, %v657
      %vm673 = vcmask 785408
      %v674 = vsel %vm673, %v671, %v663
      %v675 = vsel %vm673, %v672, %v665
      %v676 = vpack.c.bf16 %v675, %v674
      %v678 = vunpack.c.l.b16 %v676
      %v679 = vunpack.c.h.b16 %v676
      %v680 = vpack.c.b16 %v678, %v678
      %v681 = vpack.c.b16 %v679, %v679
      %684 = vst [vmem:[%s121] sm:$0xf] %v680
      %685 = vst [vmem:[%s121 + $0x4] sm:$0xf] %v681
      %s686 = smul.u32 2, %s12
      %p687 = scmp.lt.s32.totalorder %s686, 7
      %s688 = scalar_select %p687, %s686, 7
      %s689 = smul.addr %s688, 4
      %s690 = scalar_lea.vmem %s1, %s689
      // Predicated region
      $region25: #{transformer_forward.12} parent=23 // pred_check
        %p691 = pneg %p56
      $region26: #{transformer_forward.12} parent=23 // pred_check_branch
        %693 = sbr.rel (%p691) target = $region28
      $region27: #{transformer_forward.12} parent=23 // pred_region
        %s694 = smul.u32 2, %s12
      $region28: #{transformer_forward.12} parent=23 // pred_fallthru
        _
    $region24: #{transformer_forward.12} parent=5 // pred_fallthru
      _
    %p695 = scmp.le.s32.totalorder 2, %s7
    // Predicated region
    $region29: #{transformer_forward.12} parent=5 // pred_check
      %p696 = pneg %p695
    $region30: #{transformer_forward.12} parent=5 // pred_check_branch
      %698 = sbr.rel (%p696) target = $region32
    $region31: #{transformer_forward.12} parent=5 // pred_region
      %s699 = ssub.s32 %s7, 2
      // Predicated region
      $region33: #{transformer_forward.12} parent=31 // pred_check
        %p700 = pneg %p62
      $region34: #{transformer_forward.12} parent=31 // pred_check_branch
        %702 = sbr.rel (%p700) target = $region36
      $region35: #{transformer_forward.12} parent=31 // pred_region
        %s703 = smul.u32 2, %s13
        %p704 = scmp.lt.s32.totalorder %s703, 7
        %s705 = scalar_select %p704, %s703, 7
        %s706 = smul.addr %s705, 4
        %s707 = scalar_lea.vmem %s1, %s706
      $region36: #{transformer_forward.12} parent=31 // pred_fallthru
        _
    $region32: #{transformer_forward.12} parent=5 // pred_fallthru
      _
  $region6: #{transformer_forward.12} parent=0 // loop_footer
    %s11 = sadd.s32 1, %s7
  $region7: #{transformer_forward.12} parent=0 // loop_footer_branch
    %6 = sbr.rel target = $region3
  $region8: #{transformer_forward.12} parent=0 // loop_exit
    _

// kernel: transformer_forward.14
$region0: #{transformer_forward.14}
  #allocation0 [shape = 'u32[]', space=smem, size = 0x4, offset = 0x4, fixed_abs, tag = 'smem constant byte address 0x4 - core index']
  #allocation1 [shape = 'u32[144,128]{1,0:T(1,128)}', space=vmem, size = 0x12000, scoped, tag = 'internal scratch']
  %s0 = inlined_call_operand.vmem [shape: bf16[64,128], index: 0, kind: input, shape index: {}]
  %s1 = inlined_call_operand.vmem [shape: bf16[128,256], index: 1, kind: input, shape index: {}]
  %s2 = inlined_call_operand.vmem [shape: f32[1,256], index: 2, kind: input, shape index: {}]
  %s3 = inlined_call_operand.vmem [shape: bf16[64,256], index: 3, kind: output, shape index: {}]
  %s4 = sld [smem:[#allocation0]]
  $region45: #{transformer_forward.14} parent=0
    _
  %s6 = ssub.s32 1, %s4
  %s7 = scalar_select 0, %s6, %s4
  loop: start=0, step=1, limit=4
  $region2: #{transformer_forward.14} parent=0 // loop_pre_header
    _
  $region3: #{transformer_forward.14} parent=0 // loop_header
    %s9 = sphi 0, %s13
    %p10 = scmp.ge.s32.totalorder %s9, 4
    %s16 = sphi 0, %s35
    %s17 = sphi 0, %s31
    %s18 = sphi 0, %s27
    %s19 = sphi 0, %s16
    %s20 = sphi 0, %s17
    %s21 = sphi 0, %s18
    %s22 = sphi 0, %s19
    %s23 = sphi 0, %s20
    %s24 = sphi 0, %s21
    %s40 = sphi 0, %s42
    %s43 = sphi 0, %s40
    %s44 = sphi 0, %s43
    %s60 = sphi 0, %s44
    %s68 = sphi 0, %s70
    %s71 = sphi 0, %s68
    %s72 = sphi 0, %s71
    %s88 = sphi 0, %s72
    %s94 = sphi 0, %s96
    %s97 = sphi 0, %s94
    %s98 = sphi 0, %s97
    %s114 = sphi 0, %s98
    %s122 = sphi 0, %s124
    %s125 = sphi 0, %s122
    %s126 = sphi 0, %s125
    %s142 = sphi 0, %s126
  $region4: #{transformer_forward.14} parent=0 // loop_header_branch
    %12 = sbr.rel (%p10) target = $region8
  $region5: #{transformer_forward.14} parent=0 // loop_body
    %s14 = ssub.s32 %s9, 1
    %s15 = ssub.s32 %s9, 2
    %s25 = sadd.s32 1, %s18
    %p26 = scmp.ge.s32.totalorder %s25, 1
    %s27 = scalar_select %p26, 0, %s25
    %s28 = sadd.s32 1, %s17
    %s29 = scalar_select %p26, %s28, %s17
    %p30 = scmp.ge.s32.totalorder %s29, 1
    %s31 = scalar_select %p30, 0, %s29
    %s32 = sadd.s32 1, %s16
    %s33 = scalar_select %p30, %s32, %s16
    %p34 = scmp.ge.s32.totalorder %s33, 2
    %s35 = scalar_select %p34, 0, %s33
    %s36 = ssub.s32 %s16, %s35
    %s37 = ssub.s32 %s18, %s27
    %s38 = sor.u32 %s36, %s37
    %p39 = scmp.eq.s32.totalorder %s38, 0
    %s41 = sadd.s32 %s40, 1
    %s42 = scalar_select %p39, %s40, %s41
    %p45 = pneg %p39
    %p46 = scmp.eq.s32.totalorder %s9, 1
    %p47 = por %p45, %p46
    %p48 = scmp.ne.s32.totalorder %s40, %s43
    %p49 = scmp.eq.s32.totalorder %s9, 0
    %p50 = por %p48, %p49
    %p51 = scmp.ne.s32.totalorder %s40, %s43
    %p52 = scmp.eq.s32.totalorder %s14, 1
    %p53 = por %p51, %p52
    %p54 = scmp.ne.s32.totalorder %s43, %s44
    %p55 = scmp.eq.s32.totalorder %s14, 0
    %p56 = por %p54, %p55
    %p57 = scmp.ne.s32.totalorder %s43, %s44
    %p58 = scmp.eq.s32.totalorder %s15, 1
    %p59 = por %p57, %p58
    %p61 = scmp.ne.s32.totalorder %s44, %s60
    %p62 = scmp.eq.s32.totalorder %s15, 0
    %p63 = por %p61, %p62
    %s64 = ssub.s32 %s18, %s27
    %s65 = ssub.s32 %s17, %s31
    %s66 = sor.u32 %s64, %s65
    %p67 = scmp.eq.s32.totalorder %s66, 0
    %s69 = sadd.s32 %s68, 1
    %s70 = scalar_select %p67, %s68, %s69
    %p73 = pneg %p67
    %p74 = scmp.eq.s32.totalorder %s9, 1
    %p75 = por %p73, %p74
    %p76 = scmp.ne.s32.totalorder %s68, %s71
    %p77 = scmp.eq.s32.totalorder %s9, 0
    %p78 = por %p76, %p77
    %p79 = scmp.ne.s32.totalorder %s68, %s71
    %p80 = scmp.eq.s32.totalorder %s14, 1
    %p81 = por %p79, %p80
    %p82 = scmp.ne.s32.totalorder %s71, %s72
    %p83 = scmp.eq.s32.totalorder %s14, 0
    %p84 = por %p82, %p83
    %p85 = scmp.ne.s32.totalorder %s71, %s72
    %p86 = scmp.eq.s32.totalorder %s15, 1
    %p87 = por %p85, %p86
    %p89 = scmp.ne.s32.totalorder %s72, %s88
    %p90 = scmp.eq.s32.totalorder %s15, 0
    %p91 = por %p89, %p90
    %s92 = ssub.s32 %s17, %s31
    %p93 = scmp.eq.s32.totalorder %s92, 0
    %s95 = sadd.s32 %s94, 1
    %s96 = scalar_select %p93, %s94, %s95
    %p99 = pneg %p93
    %p100 = scmp.eq.s32.totalorder %s9, 1
    %p101 = por %p99, %p100
    %p102 = scmp.ne.s32.totalorder %s94, %s97
    %p103 = scmp.eq.s32.totalorder %s9, 0
    %p104 = por %p102, %p103
    %p105 = scmp.ne.s32.totalorder %s94, %s97
    %p106 = scmp.eq.s32.totalorder %s14, 1
    %p107 = por %p105, %p106
    %p108 = scmp.ne.s32.totalorder %s97, %s98
    %p109 = scmp.eq.s32.totalorder %s14, 0
    %p110 = por %p108, %p109
    %p111 = scmp.ne.s32.totalorder %s97, %s98
    %p112 = scmp.eq.s32.totalorder %s15, 1
    %p113 = por %p111, %p112
    %p115 = scmp.ne.s32.totalorder %s98, %s114
    %p116 = scmp.eq.s32.totalorder %s15, 0
    %p117 = por %p115, %p116
    %s118 = ssub.s32 %s16, %s35
    %s119 = ssub.s32 %s17, %s31
    %s120 = sor.u32 %s118, %s119
    %p121 = scmp.eq.s32.totalorder %s120, 0
    %s123 = sadd.s32 %s122, 1
    %s124 = scalar_select %p121, %s122, %s123
    %p127 = pneg %p121
    %p128 = scmp.eq.s32.totalorder %s9, 1
    %p129 = por %p127, %p128
    %p130 = scmp.ne.s32.totalorder %s122, %s125
    %p131 = scmp.eq.s32.totalorder %s9, 0
    %p132 = por %p130, %p131
    %p133 = scmp.ne.s32.totalorder %s122, %s125
    %p134 = scmp.eq.s32.totalorder %s14, 1
    %p135 = por %p133, %p134
    %p136 = scmp.ne.s32.totalorder %s125, %s126
    %p137 = scmp.eq.s32.totalorder %s14, 0
    %p138 = por %p136, %p137
    %p139 = scmp.ne.s32.totalorder %s125, %s126
    %p140 = scmp.eq.s32.totalorder %s15, 1
    %p141 = por %p139, %p140
    %p143 = scmp.ne.s32.totalorder %s126, %s142
    %p144 = scmp.eq.s32.totalorder %s15, 0
    %p145 = por %p143, %p144
    %p146 = scmp.le.s32.totalorder 1, %s9
    %p147 = scmp.lt.s32.totalorder %s9, 3
    %p148 = pnand %p146, %p147
    %p149 = pneg %p148
    // Predicated region
    $region9: #{transformer_forward.14} parent=5 // pred_check
      _
    $region10: #{transformer_forward.14} parent=5 // pred_check_branch
      %151 = sbr.rel (%p148) target = $region12
    $region11: #{transformer_forward.14} parent=5 // pred_region
      %s152 = ssub.s32 %s9, 1
      // Predicated region
      $region13: #{transformer_forward.14} parent=11 // pred_check
        %p153 = pneg %p84
      $region14: #{transformer_forward.14} parent=11 // pred_check_branch
        %155 = sbr.rel (%p153) target = $region16
      $region15: #{transformer_forward.14} parent=11 // pred_region
        %s156 = smul.u32 16, %s21
        %s157 = smul.u32 2, %s20
        %p158 = scmp.lt.s32.totalorder %s156, 15
        %s159 = scalar_select %p158, %s156, 15
        %p160 = scmp.lt.s32.totalorder %s157, 1
        %s161 = scalar_select %p160, %s157, 1
        %s162 = smul.addr %s159, 2
        %s163 = sadd.s32 %s161, %s162
        %s164 = smul.addr %s163, 4
        %s165 = scalar_lea.vmem %s1, %s164
        %s166 = smul.u32 16, %s21
        %s167 = smul.u32 2, %s20
      $region16: #{transformer_forward.14} parent=11 // pred_fallthru
        _
      // Predicated region
      $region17: #{transformer_forward.14} parent=11 // pred_check
        %p168 = pneg %p110
      $region18: #{transformer_forward.14} parent=11 // pred_check_branch
        %170 = sbr.rel (%p168) target = $region20
      $region19: #{transformer_forward.14} parent=11 // pred_region
        %s171 = smul.u32 2, %s20
        %p172 = scmp.lt.s32.totalorder %s171, 1
        %s173 = scalar_select %p172, %s171, 1
        %s174 = scalar_lea.vmem %s2, %s173
        %s175 = smul.u32 2, %s20
      $region20: #{transformer_forward.14} parent=11 // pred_fallthru
        _
    $region12: #{transformer_forward.14} parent=5 // pred_fallthru
      _
    %p176 = scmp.lt.s32.totalorder %s9, 2
    // Predicated region
    $region21: #{transformer_forward.14} parent=5 // pred_check
      %p177 = pneg %p176
    $region22: #{transformer_forward.14} parent=5 // pred_check_branch
      %179 = sbr.rel (%p177) target = $region24
    $region23: #{transformer_forward.14} parent=5 // pred_region
      // Predicated region
      $region25: #{transformer_forward.14} parent=23 // pred_check
        %p180 = pneg %p50
      $region26: #{transformer_forward.14} parent=23 // pred_check_branch
        %182 = sbr.rel (%p180) target = $region28
      $region27: #{transformer_forward.14} parent=23 // pred_region
        %s183 = smul.u32 4, %s16
        %p184 = scmp.lt.s32.totalorder %s183, 7
        %s185 = scalar_select %p184, %s183, 7
        %p186 = scmp.lt.s32.totalorder %s18, 0
        %s187 = scalar_select %p186, %s18, 0
        %s188 = sadd.s32 %s187, %s185
        %s189 = smul.addr %s188, 4
        %s190 = scalar_lea.vmem %s0, %s189
        %s191 = smul.u32 4, %s16
      $region28: #{transformer_forward.14} parent=23 // pred_fallthru
        _
    $region24: #{transformer_forward.14} parent=5 // pred_fallthru
      _
    %p192 = scmp.le.s32.totalorder 1, %s9
    %p193 = scmp.lt.s32.totalorder %s9, 3
    %p194 = pnand %p192, %p193
    %p195 = pneg %p194
    // Predicated region
    $region29: #{transformer_forward.14} parent=5 // pred_check
      _
    $region30: #{transformer_forward.14} parent=5 // pred_check_branch
      %197 = sbr.rel (%p194) target = $region32
    $region31: #{transformer_forward.14} parent=5 // pred_region
      %s198 = ssub.s32 %s9, 1
      %s199 = smul.u32 4, %s19
      %p200 = scmp.lt.s32.totalorder %s199, 7
      %s201 = scalar_select %p200, %s199, 7
      %p202 = scmp.lt.s32.totalorder %s21, 0
      %s203 = scalar_select %p202, %s21, 0
      %s204 = sadd.s32 %s203, %s201
      %s205 = smul.addr %s204, 4
      %s206 = scalar_lea.vmem %s0, %s205
      %p207 = pneg %p56
      %p208 = pneg %p53
      %s209 = smul.u32 16, %s21
      %s210 = smul.u32 2, %s20
      %p211 = scmp.lt.s32.totalorder %s209, 15
      %s212 = scalar_select %p211, %s209, 15
      %p213 = scmp.lt.s32.totalorder %s210, 1
      %s214 = scalar_select %p213, %s210, 1
      %s215 = smul.addr %s212, 2
      %s216 = sadd.s32 %s214, %s215
      %s217 = smul.addr %s216, 4
      %s218 = scalar_lea.vmem %s1, %s217
      %p219 = pneg %p84
      %p220 = pneg %p81
      %s221 = smul.u32 2, %s20
      %p222 = scmp.lt.s32.totalorder %s221, 1
      %s223 = scalar_select %p222, %s221, 1
      %s224 = scalar_lea.vmem %s2, %s223
      %p225 = pneg %p110
      %p226 = pneg %p107
      %p227 = pneg %p138
      %p228 = pneg %p135
      %s229 = smul.u32 4, %s19
      %s230 = smul.u32 2, %s20
      %p231 = scmp.lt.s32.totalorder %s229, 7
      %s232 = scalar_select %p231, %s229, 7
      %p233 = scmp.lt.s32.totalorder %s230, 1
      %s234 = scalar_select %p233, %s230, 1
      %s235 = smul.addr %s232, 2
      %s236 = sadd.s32 %s234, %s235
      %s237 = smul.addr %s236, 4
      %s238 = scalar_lea.vmem %s3, %s237
      %s239 = smul.u32 4, %s19
      %p240 = scmp.lt.s32.totalorder %s239, 7
      %s241 = scalar_select %p240, %s239, 7
      %p242 = scmp.lt.s32.totalorder %s21, 0
      %s243 = scalar_select %p242, %s21, 0
      %s244 = sadd.s32 %s243, %s241
      %s245 = smul.addr %s244, 4
      %s246 = scalar_lea.vmem %s0, %s245
      %s247 = smul.u32 4, %s19
      %s248 = smul.u32 16, %s21
      %s249 = smul.u32 2, %s20
      %p250 = scmp.lt.s32.totalorder %s248, 15
      %s251 = scalar_select %p250, %s248, 15
      %p252 = scmp.lt.s32.totalorder %s249, 1
      %s253 = scalar_select %p252, %s249, 1
      %s254 = smul.addr %s251, 2
      %s255 = sadd.s32 %s253, %s254
      %s256 = smul.addr %s255, 4
      %s257 = scalar_lea.vmem %s1, %s256
      %s258 = smul.u32 16, %s21
      %s259 = smul.u32 2, %s20
      %s260 = smul.u32 2, %s20
      %p261 = scmp.lt.s32.totalorder %s260, 1
      %s262 = scalar_select %p261, %s260, 1
      %s263 = scalar_lea.vmem %s2, %s262
      %s264 = smul.u32 2, %s20
      %s265 = smul.u32 4, %s19
      %s266 = smul.u32 2, %s20
      %p267 = scmp.lt.s32.totalorder %s265, 7
      %s268 = scalar_select %p267, %s265, 7
      %p269 = scmp.lt.s32.totalorder %s266, 1
      %s270 = scalar_select %p269, %s266, 1
      %s271 = smul.addr %s268, 2
      %s272 = sadd.s32 %s270, %s271
      %s273 = smul.addr %s272, 4
      %s274 = scalar_lea.vmem %s3, %s273
      %s275 = smul.u32 4, %s19
      %s276 = smul.u32 2, %s20
      %v278 = vld [vmem:[%s246] sm:$0xf]
      %v279 = vld [vmem:[%s246 + $0x4] sm:$0xf]
      %v280 = vld [vmem:[%s246 + $0x8] sm:$0xf]
      %v281 = vld [vmem:[%s246 + $0xc] sm:$0xf]
      %v282 = vld [vmem:[%s257] sm:$0xff]
      %v283 = vld [vmem:[%s257 + $0x8] sm:$0xff]
      %v284 = vld [vmem:[%s257 + $0x10] sm:$0xff]
      %v285 = vld [vmem:[%s257 + $0x18] sm:$0xff]
      %v286 = vld [vmem:[%s257 + $0x20] sm:$0xff]
      %v287 = vld [vmem:[%s257 + $0x28] sm:$0xff]
      %v288 = vld [vmem:[%s257 + $0x30] sm:$0xff]
      %v289 = vld [vmem:[%s257 + $0x38] sm:$0xff]
      %v290 = vld [vmem:[%s257 + $0x40] sm:$0xff]
      %v291 = vld [vmem:[%s257 + $0x48] sm:$0xff]
      %v292 = vld [vmem:[%s257 + $0x50] sm:$0xff]
      %v293 = vld [vmem:[%s257 + $0x58] sm:$0xff]
      %v294 = vld [vmem:[%s257 + $0x60] sm:$0xff]
      %v295 = vld [vmem:[%s257 + $0x68] sm:$0xff]
      %v296 = vld [vmem:[%s257 + $0x70] sm:$0xff]
      %v297 = vld [vmem:[%s257 + $0x78] sm:$0xff]
      %v298 = vld [vmem:[%s263] sm:$0x3]
      %v300 = vlaneseq
      %v301 = vshrl.u32 %v300, 7
      %v302 = vsub.s32 0, %v301
      %v303 = vrot.slane %v298, %v302
      %v304 = vlaneseq
      %v305 = vshrl.u32 %v304, 7
      %v306 = vsub.s32 1, %v305
      %v307 = vrot.slane %v298, %v306
      %v314 = vunpack.c.l.b16 %v278
      %v315 = vunpack.c.l.b16 %v279
      %v316 = vunpack.c.l.b16 %v280
      %v317 = vunpack.c.l.b16 %v281
      %v318 = vpack.c.b16 %v315, %v314
      %v319 = vpack.c.b16 %v317, %v316
      %v338 = vunpack.c.l.b16 %v282
      %v339 = vunpack.c.h.b16 %v282
      %v340 = vunpack.c.l.b16 %v283
      %v341 = vunpack.c.h.b16 %v283
      %v342 = vunpack.c.l.b16 %v284
      %v343 = vunpack.c.h.b16 %v284
      %v344 = vunpack.c.l.b16 %v285
      %v345 = vunpack.c.h.b16 %v285
      %v346 = vunpack.c.l.b16 %v286
      %v347 = vunpack.c.h.b16 %v286
      %v348 = vunpack.c.l.b16 %v287
      %v349 = vunpack.c.h.b16 %v287
      %v350 = vunpack.c.l.b16 %v288
      %v351 = vunpack.c.h.b16 %v288
      %v352 = vunpack.c.l.b16 %v289
      %v353 = vunpack.c.h.b16 %v289
      %v354 = vunpack.c.l.b16 %v290
      %v355 = vunpack.c.h.b16 %v290
      %v356 = vunpack.c.l.b16 %v291
      %v357 = vunpack.c.h.b16 %v291
      %v358 = vunpack.c.l.b16 %v292
      %v359 = vunpack.c.h.b16 %v292
      %v360 = vunpack.c.l.b16 %v293
      %v361 = vunpack.c.h.b16 %v293
      %v362 = vunpack.c.l.b16 %v294
      %v363 = vunpack.c.h.b16 %v294
      %v364 = vunpack.c.l.b16 %v295
      %v365 = vunpack.c.h.b16 %v295
      %v366 = vunpack.c.l.b16 %v296
      %v367 = vunpack.c.h.b16 %v296
      %v368 = vunpack.c.l.b16 %v297
      %v369 = vunpack.c.h.b16 %v297
      %v370 = vpack.c.b16 %v340, %v338
      %v371 = vpack.c.b16 %v341, %v339
      %v372 = vpack.c.b16 %v344, %v342
      %v373 = vpack.c.b16 %v345, %v343
      %v374 = vpack.c.b16 %v348, %v346
      %v375 = vpack.c.b16 %v349, %v347
      %v376 = vpack.c.b16 %v352, %v350
      %v377 = vpack.c.b16 %v353, %v351
      %v378 = vpack.c.b16 %v356, %v354
      %v379 = vpack.c.b16 %v357, %v355
      %v380 = vpack.c.b16 %v360, %v358
      %v381 = vpack.c.b16 %v361, %v359
      %v382 = vpack.c.b16 %v364, %v362
      %v383 = vpack.c.b16 %v365, %v363
      %v384 = vpack.c.b16 %v368, %v366
      %v385 = vpack.c.b16 %v369, %v367
      %402 = vmatprep.subr.bf16.mxu0 %v385
      %403 = vmatpush1.bf16.msra.mxu0 %v384
      %404 = vmatprep.subr.bf16.mxu0 %v383
      %405 = vmatpush1.bf16.msra.mxu0 %v382
      %406 = vmatprep.subr.bf16.mxu0 %v381
      %407 = vmatpush1.bf16.msra.mxu0 %v380
      %408 = vmatprep.subr.bf16.mxu0 %v379
      %409 = vmatpush1.bf16.msra.mxu0 %v378
      %410 = vmatprep.subr.bf16.mxu0 %v377
      %411 = vmatpush1.bf16.msra.mxu0 %v376
      %412 = vmatprep.subr.bf16.mxu0 %v375
      %413 = vmatpush1.bf16.msra.mxu0 %v374
      %414 = vmatprep.subr.bf16.mxu0 %v373
      %415 = vmatpush1.bf16.msra.mxu0 %v372
      %416 = vmatprep.subr.bf16.mxu0 %v371
      %417 = vmatpush1.bf16.msra.mxu0 %v370
      %418 = vmatprep.subr.bf16.mxu0 0
      %419 = vmatpush2.bf16.msra.mxu0 0
      %420 = vmatprep.subr.bf16.mxu0 0
      %421 = vmatpush2.bf16.msra.mxu0 0
      %422 = vmatprep.subr.bf16.mxu0 0
      %423 = vmatpush2.bf16.msra.mxu0 0
      %424 = vmatprep.subr.bf16.mxu0 0
      %425 = vmatpush2.bf16.msra.mxu0 0
      %426 = vmatprep.subr.bf16.mxu0 0
      %427 = vmatpush2.bf16.msra.mxu0 0
      %428 = vmatprep.subr.bf16.mxu0 0
      %429 = vmatpush2.bf16.msra.mxu0 0
      %430 = vmatprep.subr.bf16.mxu0 0
      %431 = vmatpush2.bf16.msra.mxu0 0
      %432 = vmatprep.subr.bf16.mxu0 0
      %433 = vmatpush2.bf16.msra.mxu0 0
      %434 = vmatprep.mubr.bf16.mxu0 0
      %435 = vmatmul.mubr.bf16.gmra.mxu0 %v318
      %v436 = vpop.f32.mrf.mxu0
      %v437 = vadd.f32 %v303, %v436
      %v438 = vpop.f32.mrf.mxu0
      %v439 = vadd.f32 %v307, %v438
      %v440 = vpop.f32.mrf.mxu0
      %v441 = vadd.f32 %v303, %v440
      %v442 = vpop.f32.mrf.mxu0
      %v443 = vadd.f32 %v307, %v442
      %444 = vmatprep.mubr.bf16.mxu0 0
      %445 = vmatmul.mubr.bf16.gmra.mxu0 %v319
      %v446 = vpop.f32.mrf.mxu0
      %v447 = vadd.f32 %v303, %v446
      %v448 = vpop.f32.mrf.mxu0
      %v449 = vadd.f32 %v307, %v448
      %v450 = vpop.f32.mrf.mxu0
      %v451 = vadd.f32 %v303, %v450
      %v452 = vpop.f32.mrf.mxu0
      %v453 = vadd.f32 %v307, %v452
      %454 = vdwg.mxu0
      %v455 = vmax.f32 %v437, 0.0
      %v456 = vmax.f32 %v439, 0.0
      %v457 = vmax.f32 %v441, 0.0
      %v458 = vmax.f32 %v443, 0.0
      %v459 = vmax.f32 %v447, 0.0
      %v460 = vmax.f32 %v449, 0.0
      %v461 = vmax.f32 %v451, 0.0
      %v462 = vmax.f32 %v453, 0.0
      %v463 = vpack.c.bf16 %v457, %v455
      %v464 = vpack.c.bf16 %v458, %v456
      %v465 = vpack.c.bf16 %v461, %v459
      %v466 = vpack.c.bf16 %v462, %v460
      %v471 = vunpack.c.l.b16 %v463
      %v472 = vunpack.c.l.b16 %v464
      %v473 = vunpack.c.h.b16 %v463
      %v474 = vunpack.c.h.b16 %v464
      %v475 = vunpack.c.l.b16 %v465
      %v476 = vunpack.c.l.b16 %v466
      %v477 = vunpack.c.h.b16 %v465
      %v478 = vunpack.c.h.b16 %v466
      %v479 = vpack.c.b16 %v472, %v471
      %v480 = vpack.c.b16 %v474, %v473
      %v481 = vpack.c.b16 %v476, %v475
      %v482 = vpack.c.b16 %v478, %v477
      %487 = vst [vmem:[%s274] sm:$0xff] %v479
      %488 = vst [vmem:[%s274 + $0x8] sm:$0xff] %v480
      %489 = vst [vmem:[%s274 + $0x10] sm:$0xff] %v481
      %490 = vst [vmem:[%s274 + $0x18] sm:$0xff] %v482
      %s491 = smul.u32 4, %s19
      %s492 = smul.u32 2, %s20
      %p493 = scmp.lt.s32.totalorder %s491, 7
      %s494 = scalar_select %p493, %s491, 7
      %p495 = scmp.lt.s32.totalorder %s492, 1
      %s496 = scalar_select %p495, %s492, 1
      %s497 = smul.addr %s494, 2
      %s498 = sadd.s32 %s496, %s497
      %s499 = smul.addr %s498, 4
      %s500 = scalar_lea.vmem %s3, %s499
      // Predicated region
      $region33: #{transformer_forward.14} parent=31 // pred_check
        %p501 = pneg %p135
      $region34: #{transformer_forward.14} parent=31 // pred_check_branch
        %503 = sbr.rel (%p501) target = $region36
      $region35: #{transformer_forward.14} parent=31 // pred_region
        %s504 = smul.u32 4, %s19
        %s505 = smul.u32 2, %s20
      $region36: #{transformer_forward.14} parent=31 // pred_fallthru
        _
    $region32: #{transformer_forward.14} parent=5 // pred_fallthru
      _
    %p506 = scmp.le.s32.totalorder 2, %s9
    // Predicated region
    $region37: #{transformer_forward.14} parent=5 // pred_check
      %p507 = pneg %p506
    $region38: #{transformer_forward.14} parent=5 // pred_check_branch
      %509 = sbr.rel (%p507) target = $region40
    $region39: #{transformer_forward.14} parent=5 // pred_region
      %s510 = ssub.s32 %s9, 2
      // Predicated region
      $region41: #{transformer_forward.14} parent=39 // pred_check
        %p511 = pneg %p141
      $region42: #{transformer_forward.14} parent=39 // pred_check_branch
        %513 = sbr.rel (%p511) target = $region44
      $region43: #{transformer_forward.14} parent=39 // pred_region
        %s514 = smul.u32 4, %s22
        %s515 = smul.u32 2, %s23
        %p516 = scmp.lt.s32.totalorder %s514, 7
        %s517 = scalar_select %p516, %s514, 7
        %p518 = scmp.lt.s32.totalorder %s515, 1
        %s519 = scalar_select %p518, %s515, 1
        %s520 = smul.addr %s517, 2
        %s521 = sadd.s32 %s519, %s520
        %s522 = smul.addr %s521, 4
        %s523 = scalar_lea.vmem %s3, %s522
      $region44: #{transformer_forward.14} parent=39 // pred_fallthru
        _
    $region40: #{transformer_forward.14} parent=5 // pred_fallthru
      _
  $region6: #{transformer_forward.14} parent=0 // loop_footer
    %s13 = sadd.s32 1, %s9
  $region7: #{transformer_forward.14} parent=0 // loop_footer_branch
    %8 = sbr.rel target = $region3
  $region8: #{transformer_forward.14} parent=0 // loop_exit
    _

// kernel: transformer_forward.21
$region0: #{transformer_forward.21}
  #allocation0 [shape = 'u32[]', space=smem, size = 0x4, offset = 0x4, fixed_abs, tag = 'smem constant byte address 0x4 - core index']
  #allocation1 [shape = 'u32[144,128]{1,0:T(1,128)}', space=vmem, size = 0x12000, scoped, tag = 'internal scratch']
  %s0 = inlined_call_operand.vmem [shape: bf16[64,128], index: 0, kind: input, shape index: {}]
  %s1 = inlined_call_operand.vmem [shape: bf16[128,256], index: 1, kind: input, shape index: {}]
  %s2 = inlined_call_operand.vmem [shape: f32[1,256], index: 2, kind: input, shape index: {}]
  %s3 = inlined_call_operand.vmem [shape: f32[64,256], index: 3, kind: output, shape index: {}]
  %s4 = sld [smem:[#allocation0]]
  $region45: #{transformer_forward.21} parent=0
    _
  %s6 = ssub.s32 1, %s4
  %s7 = scalar_select 0, %s6, %s4
  loop: start=0, step=1, limit=4
  $region2: #{transformer_forward.21} parent=0 // loop_pre_header
    _
  $region3: #{transformer_forward.21} parent=0 // loop_header
    %s9 = sphi 0, %s13
    %p10 = scmp.ge.s32.totalorder %s9, 4
    %s16 = sphi 0, %s35
    %s17 = sphi 0, %s31
    %s18 = sphi 0, %s27
    %s19 = sphi 0, %s16
    %s20 = sphi 0, %s17
    %s21 = sphi 0, %s18
    %s22 = sphi 0, %s19
    %s23 = sphi 0, %s20
    %s24 = sphi 0, %s21
    %s40 = sphi 0, %s42
    %s43 = sphi 0, %s40
    %s44 = sphi 0, %s43
    %s60 = sphi 0, %s44
    %s68 = sphi 0, %s70
    %s71 = sphi 0, %s68
    %s72 = sphi 0, %s71
    %s88 = sphi 0, %s72
    %s94 = sphi 0, %s96
    %s97 = sphi 0, %s94
    %s98 = sphi 0, %s97
    %s114 = sphi 0, %s98
    %s122 = sphi 0, %s124
    %s125 = sphi 0, %s122
    %s126 = sphi 0, %s125
    %s142 = sphi 0, %s126
  $region4: #{transformer_forward.21} parent=0 // loop_header_branch
    %12 = sbr.rel (%p10) target = $region8
  $region5: #{transformer_forward.21} parent=0 // loop_body
    %s14 = ssub.s32 %s9, 1
    %s15 = ssub.s32 %s9, 2
    %s25 = sadd.s32 1, %s18
    %p26 = scmp.ge.s32.totalorder %s25, 1
    %s27 = scalar_select %p26, 0, %s25
    %s28 = sadd.s32 1, %s17
    %s29 = scalar_select %p26, %s28, %s17
    %p30 = scmp.ge.s32.totalorder %s29, 1
    %s31 = scalar_select %p30, 0, %s29
    %s32 = sadd.s32 1, %s16
    %s33 = scalar_select %p30, %s32, %s16
    %p34 = scmp.ge.s32.totalorder %s33, 2
    %s35 = scalar_select %p34, 0, %s33
    %s36 = ssub.s32 %s16, %s35
    %s37 = ssub.s32 %s18, %s27
    %s38 = sor.u32 %s36, %s37
    %p39 = scmp.eq.s32.totalorder %s38, 0
    %s41 = sadd.s32 %s40, 1
    %s42 = scalar_select %p39, %s40, %s41
    %p45 = pneg %p39
    %p46 = scmp.eq.s32.totalorder %s9, 1
    %p47 = por %p45, %p46
    %p48 = scmp.ne.s32.totalorder %s40, %s43
    %p49 = scmp.eq.s32.totalorder %s9, 0
    %p50 = por %p48, %p49
    %p51 = scmp.ne.s32.totalorder %s40, %s43
    %p52 = scmp.eq.s32.totalorder %s14, 1
    %p53 = por %p51, %p52
    %p54 = scmp.ne.s32.totalorder %s43, %s44
    %p55 = scmp.eq.s32.totalorder %s14, 0
    %p56 = por %p54, %p55
    %p57 = scmp.ne.s32.totalorder %s43, %s44
    %p58 = scmp.eq.s32.totalorder %s15, 1
    %p59 = por %p57, %p58
    %p61 = scmp.ne.s32.totalorder %s44, %s60
    %p62 = scmp.eq.s32.totalorder %s15, 0
    %p63 = por %p61, %p62
    %s64 = ssub.s32 %s18, %s27
    %s65 = ssub.s32 %s17, %s31
    %s66 = sor.u32 %s64, %s65
    %p67 = scmp.eq.s32.totalorder %s66, 0
    %s69 = sadd.s32 %s68, 1
    %s70 = scalar_select %p67, %s68, %s69
    %p73 = pneg %p67
    %p74 = scmp.eq.s32.totalorder %s9, 1
    %p75 = por %p73, %p74
    %p76 = scmp.ne.s32.totalorder %s68, %s71
    %p77 = scmp.eq.s32.totalorder %s9, 0
    %p78 = por %p76, %p77
    %p79 = scmp.ne.s32.totalorder %s68, %s71
    %p80 = scmp.eq.s32.totalorder %s14, 1
    %p81 = por %p79, %p80
    %p82 = scmp.ne.s32.totalorder %s71, %s72
    %p83 = scmp.eq.s32.totalorder %s14, 0
    %p84 = por %p82, %p83
    %p85 = scmp.ne.s32.totalorder %s71, %s72
    %p86 = scmp.eq.s32.totalorder %s15, 1
    %p87 = por %p85, %p86
    %p89 = scmp.ne.s32.totalorder %s72, %s88
    %p90 = scmp.eq.s32.totalorder %s15, 0
    %p91 = por %p89, %p90
    %s92 = ssub.s32 %s17, %s31
    %p93 = scmp.eq.s32.totalorder %s92, 0
    %s95 = sadd.s32 %s94, 1
    %s96 = scalar_select %p93, %s94, %s95
    %p99 = pneg %p93
    %p100 = scmp.eq.s32.totalorder %s9, 1
    %p101 = por %p99, %p100
    %p102 = scmp.ne.s32.totalorder %s94, %s97
    %p103 = scmp.eq.s32.totalorder %s9, 0
    %p104 = por %p102, %p103
    %p105 = scmp.ne.s32.totalorder %s94, %s97
    %p106 = scmp.eq.s32.totalorder %s14, 1
    %p107 = por %p105, %p106
    %p108 = scmp.ne.s32.totalorder %s97, %s98
    %p109 = scmp.eq.s32.totalorder %s14, 0
    %p110 = por %p108, %p109
    %p111 = scmp.ne.s32.totalorder %s97, %s98
    %p112 = scmp.eq.s32.totalorder %s15, 1
    %p113 = por %p111, %p112
    %p115 = scmp.ne.s32.totalorder %s98, %s114
    %p116 = scmp.eq.s32.totalorder %s15, 0
    %p117 = por %p115, %p116
    %s118 = ssub.s32 %s16, %s35
    %s119 = ssub.s32 %s17, %s31
    %s120 = sor.u32 %s118, %s119
    %p121 = scmp.eq.s32.totalorder %s120, 0
    %s123 = sadd.s32 %s122, 1
    %s124 = scalar_select %p121, %s122, %s123
    %p127 = pneg %p121
    %p128 = scmp.eq.s32.totalorder %s9, 1
    %p129 = por %p127, %p128
    %p130 = scmp.ne.s32.totalorder %s122, %s125
    %p131 = scmp.eq.s32.totalorder %s9, 0
    %p132 = por %p130, %p131
    %p133 = scmp.ne.s32.totalorder %s122, %s125
    %p134 = scmp.eq.s32.totalorder %s14, 1
    %p135 = por %p133, %p134
    %p136 = scmp.ne.s32.totalorder %s125, %s126
    %p137 = scmp.eq.s32.totalorder %s14, 0
    %p138 = por %p136, %p137
    %p139 = scmp.ne.s32.totalorder %s125, %s126
    %p140 = scmp.eq.s32.totalorder %s15, 1
    %p141 = por %p139, %p140
    %p143 = scmp.ne.s32.totalorder %s126, %s142
    %p144 = scmp.eq.s32.totalorder %s15, 0
    %p145 = por %p143, %p144
    %p146 = scmp.le.s32.totalorder 1, %s9
    %p147 = scmp.lt.s32.totalorder %s9, 3
    %p148 = pnand %p146, %p147
    %p149 = pneg %p148
    // Predicated region
    $region9: #{transformer_forward.21} parent=5 // pred_check
      _
    $region10: #{transformer_forward.21} parent=5 // pred_check_branch
      %151 = sbr.rel (%p148) target = $region12
    $region11: #{transformer_forward.21} parent=5 // pred_region
      %s152 = ssub.s32 %s9, 1
      // Predicated region
      $region13: #{transformer_forward.21} parent=11 // pred_check
        %p153 = pneg %p84
      $region14: #{transformer_forward.21} parent=11 // pred_check_branch
        %155 = sbr.rel (%p153) target = $region16
      $region15: #{transformer_forward.21} parent=11 // pred_region
        %s156 = smul.u32 16, %s21
        %s157 = smul.u32 2, %s20
        %p158 = scmp.lt.s32.totalorder %s156, 15
        %s159 = scalar_select %p158, %s156, 15
        %p160 = scmp.lt.s32.totalorder %s157, 1
        %s161 = scalar_select %p160, %s157, 1
        %s162 = smul.addr %s159, 2
        %s163 = sadd.s32 %s161, %s162
        %s164 = smul.addr %s163, 4
        %s165 = scalar_lea.vmem %s1, %s164
        %s166 = smul.u32 16, %s21
        %s167 = smul.u32 2, %s20
      $region16: #{transformer_forward.21} parent=11 // pred_fallthru
        _
      // Predicated region
      $region17: #{transformer_forward.21} parent=11 // pred_check
        %p168 = pneg %p110
      $region18: #{transformer_forward.21} parent=11 // pred_check_branch
        %170 = sbr.rel (%p168) target = $region20
      $region19: #{transformer_forward.21} parent=11 // pred_region
        %s171 = smul.u32 2, %s20
        %p172 = scmp.lt.s32.totalorder %s171, 1
        %s173 = scalar_select %p172, %s171, 1
        %s174 = scalar_lea.vmem %s2, %s173
        %s175 = smul.u32 2, %s20
      $region20: #{transformer_forward.21} parent=11 // pred_fallthru
        _
    $region12: #{transformer_forward.21} parent=5 // pred_fallthru
      _
    %p176 = scmp.lt.s32.totalorder %s9, 2
    // Predicated region
    $region21: #{transformer_forward.21} parent=5 // pred_check
      %p177 = pneg %p176
    $region22: #{transformer_forward.21} parent=5 // pred_check_branch
      %179 = sbr.rel (%p177) target = $region24
    $region23: #{transformer_forward.21} parent=5 // pred_region
      // Predicated region
      $region25: #{transformer_forward.21} parent=23 // pred_check
        %p180 = pneg %p50
      $region26: #{transformer_forward.21} parent=23 // pred_check_branch
        %182 = sbr.rel (%p180) target = $region28
      $region27: #{transformer_forward.21} parent=23 // pred_region
        %s183 = smul.u32 4, %s16
        %p184 = scmp.lt.s32.totalorder %s183, 7
        %s185 = scalar_select %p184, %s183, 7
        %p186 = scmp.lt.s32.totalorder %s18, 0
        %s187 = scalar_select %p186, %s18, 0
        %s188 = sadd.s32 %s187, %s185
        %s189 = smul.addr %s188, 4
        %s190 = scalar_lea.vmem %s0, %s189
        %s191 = smul.u32 4, %s16
      $region28: #{transformer_forward.21} parent=23 // pred_fallthru
        _
    $region24: #{transformer_forward.21} parent=5 // pred_fallthru
      _
    %p192 = scmp.le.s32.totalorder 1, %s9
    %p193 = scmp.lt.s32.totalorder %s9, 3
    %p194 = pnand %p192, %p193
    %p195 = pneg %p194
    // Predicated region
    $region29: #{transformer_forward.21} parent=5 // pred_check
      _
    $region30: #{transformer_forward.21} parent=5 // pred_check_branch
      %197 = sbr.rel (%p194) target = $region32
    $region31: #{transformer_forward.21} parent=5 // pred_region
      %s198 = ssub.s32 %s9, 1
      %s199 = smul.u32 4, %s19
      %p200 = scmp.lt.s32.totalorder %s199, 7
      %s201 = scalar_select %p200, %s199, 7
      %p202 = scmp.lt.s32.totalorder %s21, 0
      %s203 = scalar_select %p202, %s21, 0
      %s204 = sadd.s32 %s203, %s201
      %s205 = smul.addr %s204, 4
      %s206 = scalar_lea.vmem %s0, %s205
      %p207 = pneg %p56
      %p208 = pneg %p53
      %s209 = smul.u32 16, %s21
      %s210 = smul.u32 2, %s20
      %p211 = scmp.lt.s32.totalorder %s209, 15
      %s212 = scalar_select %p211, %s209, 15
      %p213 = scmp.lt.s32.totalorder %s210, 1
      %s214 = scalar_select %p213, %s210, 1
      %s215 = smul.addr %s212, 2
      %s216 = sadd.s32 %s214, %s215
      %s217 = smul.addr %s216, 4
      %s218 = scalar_lea.vmem %s1, %s217
      %p219 = pneg %p84
      %p220 = pneg %p81
      %s221 = smul.u32 2, %s20
      %p222 = scmp.lt.s32.totalorder %s221, 1
      %s223 = scalar_select %p222, %s221, 1
      %s224 = scalar_lea.vmem %s2, %s223
      %p225 = pneg %p110
      %p226 = pneg %p107
      %p227 = pneg %p138
      %p228 = pneg %p135
      %s229 = smul.u32 4, %s19
      %s230 = smul.u32 2, %s20
      %p231 = scmp.lt.s32.totalorder %s229, 7
      %s232 = scalar_select %p231, %s229, 7
      %p233 = scmp.lt.s32.totalorder %s230, 1
      %s234 = scalar_select %p233, %s230, 1
      %s235 = smul.addr %s232, 2
      %s236 = sadd.s32 %s234, %s235
      %s237 = smul.addr %s236, 8
      %s238 = scalar_lea.vmem %s3, %s237
      %s239 = smul.u32 4, %s19
      %p240 = scmp.lt.s32.totalorder %s239, 7
      %s241 = scalar_select %p240, %s239, 7
      %p242 = scmp.lt.s32.totalorder %s21, 0
      %s243 = scalar_select %p242, %s21, 0
      %s244 = sadd.s32 %s243, %s241
      %s245 = smul.addr %s244, 4
      %s246 = scalar_lea.vmem %s0, %s245
      %s247 = smul.u32 4, %s19
      %s248 = smul.u32 16, %s21
      %s249 = smul.u32 2, %s20
      %p250 = scmp.lt.s32.totalorder %s248, 15
      %s251 = scalar_select %p250, %s248, 15
      %p252 = scmp.lt.s32.totalorder %s249, 1
      %s253 = scalar_select %p252, %s249, 1
      %s254 = smul.addr %s251, 2
      %s255 = sadd.s32 %s253, %s254
      %s256 = smul.addr %s255, 4
      %s257 = scalar_lea.vmem %s1, %s256
      %s258 = smul.u32 16, %s21
      %s259 = smul.u32 2, %s20
      %s260 = smul.u32 2, %s20
      %p261 = scmp.lt.s32.totalorder %s260, 1
      %s262 = scalar_select %p261, %s260, 1
      %s263 = scalar_lea.vmem %s2, %s262
      %s264 = smul.u32 2, %s20
      %s265 = smul.u32 4, %s19
      %s266 = smul.u32 2, %s20
      %p267 = scmp.lt.s32.totalorder %s265, 7
      %s268 = scalar_select %p267, %s265, 7
      %p269 = scmp.lt.s32.totalorder %s266, 1
      %s270 = scalar_select %p269, %s266, 1
      %s271 = smul.addr %s268, 2
      %s272 = sadd.s32 %s270, %s271
      %s273 = smul.addr %s272, 8
      %s274 = scalar_lea.vmem %s3, %s273
      %s275 = smul.u32 4, %s19
      %s276 = smul.u32 2, %s20
      %v278 = vld [vmem:[%s246] sm:$0xf]
      %v279 = vld [vmem:[%s246 + $0x4] sm:$0xf]
      %v280 = vld [vmem:[%s246 + $0x8] sm:$0xf]
      %v281 = vld [vmem:[%s246 + $0xc] sm:$0xf]
      %v282 = vld [vmem:[%s257] sm:$0xff]
      %v283 = vld [vmem:[%s257 + $0x8] sm:$0xff]
      %v284 = vld [vmem:[%s257 + $0x10] sm:$0xff]
      %v285 = vld [vmem:[%s257 + $0x18] sm:$0xff]
      %v286 = vld [vmem:[%s257 + $0x20] sm:$0xff]
      %v287 = vld [vmem:[%s257 + $0x28] sm:$0xff]
      %v288 = vld [vmem:[%s257 + $0x30] sm:$0xff]
      %v289 = vld [vmem:[%s257 + $0x38] sm:$0xff]
      %v290 = vld [vmem:[%s257 + $0x40] sm:$0xff]
      %v291 = vld [vmem:[%s257 + $0x48] sm:$0xff]
      %v292 = vld [vmem:[%s257 + $0x50] sm:$0xff]
      %v293 = vld [vmem:[%s257 + $0x58] sm:$0xff]
      %v294 = vld [vmem:[%s257 + $0x60] sm:$0xff]
      %v295 = vld [vmem:[%s257 + $0x68] sm:$0xff]
      %v296 = vld [vmem:[%s257 + $0x70] sm:$0xff]
      %v297 = vld [vmem:[%s257 + $0x78] sm:$0xff]
      %v298 = vld [vmem:[%s263] sm:$0x3]
      %v300 = vlaneseq
      %v301 = vshrl.u32 %v300, 7
      %v302 = vsub.s32 0, %v301
      %v303 = vrot.slane %v298, %v302
      %v304 = vlaneseq
      %v305 = vshrl.u32 %v304, 7
      %v306 = vsub.s32 1, %v305
      %v307 = vrot.slane %v298, %v306
      %v314 = vunpack.c.l.b16 %v278
      %v315 = vunpack.c.l.b16 %v279
      %v316 = vunpack.c.l.b16 %v280
      %v317 = vunpack.c.l.b16 %v281
      %v318 = vpack.c.b16 %v315, %v314
      %v319 = vpack.c.b16 %v317, %v316
      %v338 = vunpack.c.l.b16 %v282
      %v339 = vunpack.c.h.b16 %v282
      %v340 = vunpack.c.l.b16 %v283
      %v341 = vunpack.c.h.b16 %v283
      %v342 = vunpack.c.l.b16 %v284
      %v343 = vunpack.c.h.b16 %v284
      %v344 = vunpack.c.l.b16 %v285
      %v345 = vunpack.c.h.b16 %v285
      %v346 = vunpack.c.l.b16 %v286
      %v347 = vunpack.c.h.b16 %v286
      %v348 = vunpack.c.l.b16 %v287
      %v349 = vunpack.c.h.b16 %v287
      %v350 = vunpack.c.l.b16 %v288
      %v351 = vunpack.c.h.b16 %v288
      %v352 = vunpack.c.l.b16 %v289
      %v353 = vunpack.c.h.b16 %v289
      %v354 = vunpack.c.l.b16 %v290
      %v355 = vunpack.c.h.b16 %v290
      %v356 = vunpack.c.l.b16 %v291
      %v357 = vunpack.c.h.b16 %v291
      %v358 = vunpack.c.l.b16 %v292
      %v359 = vunpack.c.h.b16 %v292
      %v360 = vunpack.c.l.b16 %v293
      %v361 = vunpack.c.h.b16 %v293
      %v362 = vunpack.c.l.b16 %v294
      %v363 = vunpack.c.h.b16 %v294
      %v364 = vunpack.c.l.b16 %v295
      %v365 = vunpack.c.h.b16 %v295
      %v366 = vunpack.c.l.b16 %v296
      %v367 = vunpack.c.h.b16 %v296
      %v368 = vunpack.c.l.b16 %v297
      %v369 = vunpack.c.h.b16 %v297
      %v370 = vpack.c.b16 %v340, %v338
      %v371 = vpack.c.b16 %v341, %v339
      %v372 = vpack.c.b16 %v344, %v342
      %v373 = vpack.c.b16 %v345, %v343
      %v374 = vpack.c.b16 %v348, %v346
      %v375 = vpack.c.b16 %v349, %v347
      %v376 = vpack.c.b16 %v352, %v350
      %v377 = vpack.c.b16 %v353, %v351
      %v378 = vpack.c.b16 %v356, %v354
      %v379 = vpack.c.b16 %v357, %v355
      %v380 = vpack.c.b16 %v360, %v358
      %v381 = vpack.c.b16 %v361, %v359
      %v382 = vpack.c.b16 %v364, %v362
      %v383 = vpack.c.b16 %v365, %v363
      %v384 = vpack.c.b16 %v368, %v366
      %v385 = vpack.c.b16 %v369, %v367
      %402 = vmatprep.subr.bf16.mxu0 %v385
      %403 = vmatpush1.bf16.msra.mxu0 %v384
      %404 = vmatprep.subr.bf16.mxu0 %v383
      %405 = vmatpush1.bf16.msra.mxu0 %v382
      %406 = vmatprep.subr.bf16.mxu0 %v381
      %407 = vmatpush1.bf16.msra.mxu0 %v380
      %408 = vmatprep.subr.bf16.mxu0 %v379
      %409 = vmatpush1.bf16.msra.mxu0 %v378
      %410 = vmatprep.subr.bf16.mxu0 %v377
      %411 = vmatpush1.bf16.msra.mxu0 %v376
      %412 = vmatprep.subr.bf16.mxu0 %v375
      %413 = vmatpush1.bf16.msra.mxu0 %v374
      %414 = vmatprep.subr.bf16.mxu0 %v373
      %415 = vmatpush1.bf16.msra.mxu0 %v372
      %416 = vmatprep.subr.bf16.mxu0 %v371
      %417 = vmatpush1.bf16.msra.mxu0 %v370
      %418 = vmatprep.subr.bf16.mxu0 0
      %419 = vmatpush2.bf16.msra.mxu0 0
      %420 = vmatprep.subr.bf16.mxu0 0
      %421 = vmatpush2.bf16.msra.mxu0 0
      %422 = vmatprep.subr.bf16.mxu0 0
      %423 = vmatpush2.bf16.msra.mxu0 0
      %424 = vmatprep.subr.bf16.mxu0 0
      %425 = vmatpush2.bf16.msra.mxu0 0
      %426 = vmatprep.subr.bf16.mxu0 0
      %427 = vmatpush2.bf16.msra.mxu0 0
      %428 = vmatprep.subr.bf16.mxu0 0
      %429 = vmatpush2.bf16.msra.mxu0 0
      %430 = vmatprep.subr.bf16.mxu0 0
      %431 = vmatpush2.bf16.msra.mxu0 0
      %432 = vmatprep.subr.bf16.mxu0 0
      %433 = vmatpush2.bf16.msra.mxu0 0
      %434 = vmatprep.mubr.bf16.mxu0 0
      %435 = vmatmul.mubr.bf16.gmra.mxu0 %v318
      %v436 = vpop.f32.mrf.mxu0
      %v437 = vadd.f32 %v303, %v436
      %v438 = vpop.f32.mrf.mxu0
      %v439 = vadd.f32 %v307, %v438
      %v440 = vpop.f32.mrf.mxu0
      %v441 = vadd.f32 %v303, %v440
      %v442 = vpop.f32.mrf.mxu0
      %v443 = vadd.f32 %v307, %v442
      %444 = vmatprep.mubr.bf16.mxu0 0
      %445 = vmatmul.mubr.bf16.gmra.mxu0 %v319
      %v446 = vpop.f32.mrf.mxu0
      %v447 = vadd.f32 %v303, %v446
      %v448 = vpop.f32.mrf.mxu0
      %v449 = vadd.f32 %v307, %v448
      %v450 = vpop.f32.mrf.mxu0
      %v451 = vadd.f32 %v303, %v450
      %v452 = vpop.f32.mrf.mxu0
      %v453 = vadd.f32 %v307, %v452
      %454 = vdwg.mxu0
      %v455 = vmax.f32 %v437, %v439
      %456 = vmax.xlane.f32.xlu0 %v455
      %v457 = vpop.xlane.xlu0 %456
      %v458 = vmax.f32 %v441, %v443
      %459 = vmax.xlane.f32.xlu0 %v458
      %v460 = vpop.xlane.xlu0 %459
      %v461 = vmax.f32 %v447, %v449
      %462 = vmax.xlane.f32.xlu0 %v461
      %v463 = vpop.xlane.xlu0 %462
      %v464 = vmax.f32 %v451, %v453
      %465 = vmax.xlane.f32.xlu0 %v464
      %v466 = vpop.xlane.xlu0 %465
      %v467 = vsub.f32 %v437, %v457
      %v468 = vsub.f32 %v439, %v457
      %v469 = vsub.f32 %v441, %v460
      %v470 = vsub.f32 %v443, %v460
      %v471 = vsub.f32 %v447, %v463
      %v472 = vsub.f32 %v449, %v463
      %v473 = vsub.f32 %v451, %v466
      %v474 = vsub.f32 %v453, %v466
      %v475 = vmul.f32 %v467, 1.442695
      %v476 = vpow.pop %v475
      %v477 = vmul.f32 %v468, 1.442695
      %v478 = vpow.pop %v477
      %v479 = vmul.f32 %v469, 1.442695
      %v480 = vpow.pop %v479
      %v481 = vmul.f32 %v470, 1.442695
      %v482 = vpow.pop %v481
      %v483 = vmul.f32 %v471, 1.442695
      %v484 = vpow.pop %v483
      %v485 = vmul.f32 %v472, 1.442695
      %v486 = vpow.pop %v485
      %v487 = vmul.f32 %v473, 1.442695
      %v488 = vpow.pop %v487
      %v489 = vmul.f32 %v474, 1.442695
      %v490 = vpow.pop %v489
      %v491 = vadd.f32 %v476, %v478
      %492 = vadd.xlane.f32.xlu0 %v491
      %v493 = vpop.xlane.xlu0 %492
      %v494 = vadd.f32 %v480, %v482
      %495 = vadd.xlane.f32.xlu0 %v494
      %v496 = vpop.xlane.xlu0 %495
      %v497 = vadd.f32 %v484, %v486
      %498 = vadd.xlane.f32.xlu0 %v497
      %v499 = vpop.xlane.xlu0 %498
      %v500 = vadd.f32 %v488, %v490
      %501 = vadd.xlane.f32.xlu0 %v500
      %v502 = vpop.xlane.xlu0 %501
      %v503 = vlog2.pop %v493
      %v504 = vmul.f32 %v503, 0.6931472
      %v505 = vlog2.pop %v496
      %v506 = vmul.f32 %v505, 0.6931472
      %v507 = vlog2.pop %v499
      %v508 = vmul.f32 %v507, 0.6931472
      %v509 = vlog2.pop %v502
      %v510 = vmul.f32 %v509, 0.6931472
      %v511 = vsub.f32 %v467, %v504
      %v512 = vsub.f32 %v468, %v504
      %v513 = vsub.f32 %v469, %v506
      %v514 = vsub.f32 %v470, %v506
      %v515 = vsub.f32 %v471, %v508
      %v516 = vsub.f32 %v472, %v508
      %v517 = vsub.f32 %v473, %v510
      %v518 = vsub.f32 %v474, %v510
      %519 = vst [vmem:[%s274] sm:$0xff] %v511
      %520 = vst [vmem:[%s274 + $0x8] sm:$0xff] %v512
      %521 = vst [vmem:[%s274 + $0x10] sm:$0xff] %v513
      %522 = vst [vmem:[%s274 + $0x18] sm:$0xff] %v514
      %523 = vst [vmem:[%s274 + $0x20] sm:$0xff] %v515
      %524 = vst [vmem:[%s274 + $0x28] sm:$0xff] %v516
      %525 = vst [vmem:[%s274 + $0x30] sm:$0xff] %v517
      %526 = vst [vmem:[%s274 + $0x38] sm:$0xff] %v518
      %s527 = smul.u32 4, %s19
      %s528 = smul.u32 2, %s20
      %p529 = scmp.lt.s32.totalorder %s527, 7
      %s530 = scalar_select %p529, %s527, 7
      %p531 = scmp.lt.s32.totalorder %s528, 1
      %s532 = scalar_select %p531, %s528, 1
      %s533 = smul.addr %s530, 2
      %s534 = sadd.s32 %s532, %s533
      %s535 = smul.addr %s534, 8
      %s536 = scalar_lea.vmem %s3, %s535
      // Predicated region
      $region33: #{transformer_forward.21} parent=31 // pred_check
        %p537 = pneg %p135
      $region34: #{transformer_forward.21} parent=31 // pred_check_branch
        %539 = sbr.rel (%p537) target = $region36
      $region35: #{transformer_forward.21} parent=31 // pred_region
        %s540 = smul.u32 4, %s19
        %s541 = smul.u32 2, %s20
      $region36: #{transformer_forward.21} parent=31 // pred_fallthru
        _
    $region32: #{transformer_forward.21} parent=5 // pred_fallthru
      _
    %p542 = scmp.le.s32.totalorder 2, %s9
    // Predicated region
    $region37: #{transformer_forward.21} parent=5 // pred_check
      %p543 = pneg %p542
    $region38: #{transformer_forward.21} parent=5 // pred_check_branch
      %545 = sbr.rel (%p543) target = $region40
    $region39: #{transformer_forward.21} parent=5 // pred_region
      %s546 = ssub.s32 %s9, 2
      // Predicated region
      $region41: #{transformer_forward.21} parent=39 // pred_check
        %p547 = pneg %p141
      $region42: #{transformer_forward.21} parent=39 // pred_check_branch
        %549 = sbr.rel (%p547) target = $region44
      $region43: #{transformer_forward.21} parent=39 // pred_region
        %s550 = smul.u32 4, %s22
        %s551 = smul.u32 2, %s23
        %p552 = scmp.lt.s32.totalorder %s550, 7
        %s553 = scalar_select %p552, %s550, 7
        %p554 = scmp.lt.s32.totalorder %s551, 1
        %s555 = scalar_select %p554, %s551, 1
        %s556 = smul.addr %s553, 2
        %s557 = sadd.s32 %s555, %s556
        %s558 = smul.addr %s557, 8
        %s559 = scalar_lea.vmem %s3, %s558
      $region44: #{transformer_forward.21} parent=39 // pred_fallthru
        _
    $region40: #{transformer_forward.21} parent=5 // pred_fallthru
      _
  $region6: #{transformer_forward.21} parent=0 // loop_footer
    %s13 = sadd.s32 1, %s9
  $region7: #{transformer_forward.21} parent=0 // loop_footer_branch
    %8 = sbr.rel target = $region3
  $region8: #{transformer_forward.21} parent=0 // loop_exit
    _

// kernel: transformer_forward.15
$region0: #{transformer_forward.15}
  #allocation0 [shape = 'u32[]', space=smem, size = 0x4, offset = 0x4, fixed_abs, tag = 'smem constant byte address 0x4 - core index']
  #allocation1 [shape = 'u32[144,128]{1,0:T(1,128)}', space=vmem, size = 0x12000, scoped, tag = 'internal scratch']
  %s0 = inlined_call_operand.vmem [shape: bf16[64,256], index: 0, kind: input, shape index: {}]
  %s1 = inlined_call_operand.vmem [shape: bf16[256,128], index: 1, kind: input, shape index: {}]
  %s2 = inlined_call_operand.vmem [shape: f32[1,128], index: 2, kind: input, shape index: {}]
  %s3 = inlined_call_operand.vmem [shape: bf16[64,128], index: 3, kind: input, shape index: {}]
  %s4 = inlined_call_operand.vmem [shape: f32[1,128], index: 4, kind: input, shape index: {}]
  %s5 = inlined_call_operand.vmem [shape: f32[1,128], index: 5, kind: input, shape index: {}]
  %s6 = inlined_call_operand.vmem [shape: bf16[64,128], index: 6, kind: output, shape index: {}]
  %s7 = sld [smem:[#allocation0]]
  $region57: #{transformer_forward.15} parent=0
    _
  %s9 = ssub.s32 1, %s7
  %s10 = scalar_select 0, %s9, %s7
  loop: start=0, step=1, limit=4
  $region2: #{transformer_forward.15} parent=0 // loop_pre_header
    _
  $region3: #{transformer_forward.15} parent=0 // loop_header
    %s12 = sphi 0, %s16
    %p13 = scmp.ge.s32.totalorder %s12, 4
    %s19 = sphi 0, %s38
    %s20 = sphi 0, %s34
    %s21 = sphi 0, %s30
    %s22 = sphi 0, %s19
    %s23 = sphi 0, %s20
    %s24 = sphi 0, %s21
    %s25 = sphi 0, %s22
    %s26 = sphi 0, %s23
    %s27 = sphi 0, %s24
    %s43 = sphi 0, %s45
    %s46 = sphi 0, %s43
    %s47 = sphi 0, %s46
    %s63 = sphi 0, %s47
    %s71 = sphi 0, %s73
    %s74 = sphi 0, %s71
    %s75 = sphi 0, %s74
    %s91 = sphi 0, %s75
    %s97 = sphi 0, %s99
    %s100 = sphi 0, %s97
    %s101 = sphi 0, %s100
    %s117 = sphi 0, %s101
    %s125 = sphi 0, %s127
    %s128 = sphi 0, %s125
    %s129 = sphi 0, %s128
    %s145 = sphi 0, %s129
    %s151 = sphi 0, %s153
    %s154 = sphi 0, %s151
    %s155 = sphi 0, %s154
    %s171 = sphi 0, %s155
    %s177 = sphi 0, %s179
    %s180 = sphi 0, %s177
    %s181 = sphi 0, %s180
    %s197 = sphi 0, %s181
    %s205 = sphi 0, %s207
    %s208 = sphi 0, %s205
    %s209 = sphi 0, %s208
    %s225 = sphi 0, %s209
  $region4: #{transformer_forward.15} parent=0 // loop_header_branch
    %15 = sbr.rel (%p13) target = $region8
  $region5: #{transformer_forward.15} parent=0 // loop_body
    %s17 = ssub.s32 %s12, 1
    %s18 = ssub.s32 %s12, 2
    %s28 = sadd.s32 1, %s21
    %p29 = scmp.ge.s32.totalorder %s28, 1
    %s30 = scalar_select %p29, 0, %s28
    %s31 = sadd.s32 1, %s20
    %s32 = scalar_select %p29, %s31, %s20
    %p33 = scmp.ge.s32.totalorder %s32, 1
    %s34 = scalar_select %p33, 0, %s32
    %s35 = sadd.s32 1, %s19
    %s36 = scalar_select %p33, %s35, %s19
    %p37 = scmp.ge.s32.totalorder %s36, 2
    %s38 = scalar_select %p37, 0, %s36
    %s39 = ssub.s32 %s19, %s38
    %s40 = ssub.s32 %s21, %s30
    %s41 = sor.u32 %s39, %s40
    %p42 = scmp.eq.s32.totalorder %s41, 0
    %s44 = sadd.s32 %s43, 1
    %s45 = scalar_select %p42, %s43, %s44
    %p48 = pneg %p42
    %p49 = scmp.eq.s32.totalorder %s12, 1
    %p50 = por %p48, %p49
    %p51 = scmp.ne.s32.totalorder %s43, %s46
    %p52 = scmp.eq.s32.totalorder %s12, 0
    %p53 = por %p51, %p52
    %p54 = scmp.ne.s32.totalorder %s43, %s46
    %p55 = scmp.eq.s32.totalorder %s17, 1
    %p56 = por %p54, %p55
    %p57 = scmp.ne.s32.totalorder %s46, %s47
    %p58 = scmp.eq.s32.totalorder %s17, 0
    %p59 = por %p57, %p58
    %p60 = scmp.ne.s32.totalorder %s46, %s47
    %p61 = scmp.eq.s32.totalorder %s18, 1
    %p62 = por %p60, %p61
    %p64 = scmp.ne.s32.totalorder %s47, %s63
    %p65 = scmp.eq.s32.totalorder %s18, 0
    %p66 = por %p64, %p65
    %s67 = ssub.s32 %s21, %s30
    %s68 = ssub.s32 %s20, %s34
    %s69 = sor.u32 %s67, %s68
    %p70 = scmp.eq.s32.totalorder %s69, 0
    %s72 = sadd.s32 %s71, 1
    %s73 = scalar_select %p70, %s71, %s72
    %p76 = pneg %p70
    %p77 = scmp.eq.s32.totalorder %s12, 1
    %p78 = por %p76, %p77
    %p79 = scmp.ne.s32.totalorder %s71, %s74
    %p80 = scmp.eq.s32.totalorder %s12, 0
    %p81 = por %p79, %p80
    %p82 = scmp.ne.s32.totalorder %s71, %s74
    %p83 = scmp.eq.s32.totalorder %s17, 1
    %p84 = por %p82, %p83
    %p85 = scmp.ne.s32.totalorder %s74, %s75
    %p86 = scmp.eq.s32.totalorder %s17, 0
    %p87 = por %p85, %p86
    %p88 = scmp.ne.s32.totalorder %s74, %s75
    %p89 = scmp.eq.s32.totalorder %s18, 1
    %p90 = por %p88, %p89
    %p92 = scmp.ne.s32.totalorder %s75, %s91
    %p93 = scmp.eq.s32.totalorder %s18, 0
    %p94 = por %p92, %p93
    %s95 = ssub.s32 %s20, %s34
    %p96 = scmp.eq.s32.totalorder %s95, 0
    %s98 = sadd.s32 %s97, 1
    %s99 = scalar_select %p96, %s97, %s98
    %p102 = pneg %p96
    %p103 = scmp.eq.s32.totalorder %s12, 1
    %p104 = por %p102, %p103
    %p105 = scmp.ne.s32.totalorder %s97, %s100
    %p106 = scmp.eq.s32.totalorder %s12, 0
    %p107 = por %p105, %p106
    %p108 = scmp.ne.s32.totalorder %s97, %s100
    %p109 = scmp.eq.s32.totalorder %s17, 1
    %p110 = por %p108, %p109
    %p111 = scmp.ne.s32.totalorder %s100, %s101
    %p112 = scmp.eq.s32.totalorder %s17, 0
    %p113 = por %p111, %p112
    %p114 = scmp.ne.s32.totalorder %s100, %s101
    %p115 = scmp.eq.s32.totalorder %s18, 1
    %p116 = por %p114, %p115
    %p118 = scmp.ne.s32.totalorder %s101, %s117
    %p119 = scmp.eq.s32.totalorder %s18, 0
    %p120 = por %p118, %p119
    %s121 = ssub.s32 %s19, %s38
    %s122 = ssub.s32 %s20, %s34
    %s123 = sor.u32 %s121, %s122
    %p124 = scmp.eq.s32.totalorder %s123, 0
    %s126 = sadd.s32 %s125, 1
    %s127 = scalar_select %p124, %s125, %s126
    %p130 = pneg %p124
    %p131 = scmp.eq.s32.totalorder %s12, 1
    %p132 = por %p130, %p131
    %p133 = scmp.ne.s32.totalorder %s125, %s128
    %p134 = scmp.eq.s32.totalorder %s12, 0
    %p135 = por %p133, %p134
    %p136 = scmp.ne.s32.totalorder %s125, %s128
    %p137 = scmp.eq.s32.totalorder %s17, 1
    %p138 = por %p136, %p137
    %p139 = scmp.ne.s32.totalorder %s128, %s129
    %p140 = scmp.eq.s32.totalorder %s17, 0
    %p141 = por %p139, %p140
    %p142 = scmp.ne.s32.totalorder %s128, %s129
    %p143 = scmp.eq.s32.totalorder %s18, 1
    %p144 = por %p142, %p143
    %p146 = scmp.ne.s32.totalorder %s129, %s145
    %p147 = scmp.eq.s32.totalorder %s18, 0
    %p148 = por %p146, %p147
    %s149 = ssub.s32 %s20, %s34
    %p150 = scmp.eq.s32.totalorder %s149, 0
    %s152 = sadd.s32 %s151, 1
    %s153 = scalar_select %p150, %s151, %s152
    %p156 = pneg %p150
    %p157 = scmp.eq.s32.totalorder %s12, 1
    %p158 = por %p156, %p157
    %p159 = scmp.ne.s32.totalorder %s151, %s154
    %p160 = scmp.eq.s32.totalorder %s12, 0
    %p161 = por %p159, %p160
    %p162 = scmp.ne.s32.totalorder %s151, %s154
    %p163 = scmp.eq.s32.totalorder %s17, 1
    %p164 = por %p162, %p163
    %p165 = scmp.ne.s32.totalorder %s154, %s155
    %p166 = scmp.eq.s32.totalorder %s17, 0
    %p167 = por %p165, %p166
    %p168 = scmp.ne.s32.totalorder %s154, %s155
    %p169 = scmp.eq.s32.totalorder %s18, 1
    %p170 = por %p168, %p169
    %p172 = scmp.ne.s32.totalorder %s155, %s171
    %p173 = scmp.eq.s32.totalorder %s18, 0
    %p174 = por %p172, %p173
    %s175 = ssub.s32 %s20, %s34
    %p176 = scmp.eq.s32.totalorder %s175, 0
    %s178 = sadd.s32 %s177, 1
    %s179 = scalar_select %p176, %s177, %s178
    %p182 = pneg %p176
    %p183 = scmp.eq.s32.totalorder %s12, 1
    %p184 = por %p182, %p183
    %p185 = scmp.ne.s32.totalorder %s177, %s180
    %p186 = scmp.eq.s32.totalorder %s12, 0
    %p187 = por %p185, %p186
    %p188 = scmp.ne.s32.totalorder %s177, %s180
    %p189 = scmp.eq.s32.totalorder %s17, 1
    %p190 = por %p188, %p189
    %p191 = scmp.ne.s32.totalorder %s180, %s181
    %p192 = scmp.eq.s32.totalorder %s17, 0
    %p193 = por %p191, %p192
    %p194 = scmp.ne.s32.totalorder %s180, %s181
    %p195 = scmp.eq.s32.totalorder %s18, 1
    %p196 = por %p194, %p195
    %p198 = scmp.ne.s32.totalorder %s181, %s197
    %p199 = scmp.eq.s32.totalorder %s18, 0
    %p200 = por %p198, %p199
    %s201 = ssub.s32 %s19, %s38
    %s202 = ssub.s32 %s20, %s34
    %s203 = sor.u32 %s201, %s202
    %p204 = scmp.eq.s32.totalorder %s203, 0
    %s206 = sadd.s32 %s205, 1
    %s207 = scalar_select %p204, %s205, %s206
    %p210 = pneg %p204
    %p211 = scmp.eq.s32.totalorder %s12, 1
    %p212 = por %p210, %p211
    %p213 = scmp.ne.s32.totalorder %s205, %s208
    %p214 = scmp.eq.s32.totalorder %s12, 0
    %p215 = por %p213, %p214
    %p216 = scmp.ne.s32.totalorder %s205, %s208
    %p217 = scmp.eq.s32.totalorder %s17, 1
    %p218 = por %p216, %p217
    %p219 = scmp.ne.s32.totalorder %s208, %s209
    %p220 = scmp.eq.s32.totalorder %s17, 0
    %p221 = por %p219, %p220
    %p222 = scmp.ne.s32.totalorder %s208, %s209
    %p223 = scmp.eq.s32.totalorder %s18, 1
    %p224 = por %p222, %p223
    %p226 = scmp.ne.s32.totalorder %s209, %s225
    %p227 = scmp.eq.s32.totalorder %s18, 0
    %p228 = por %p226, %p227
    %p229 = scmp.le.s32.totalorder 1, %s12
    %p230 = scmp.lt.s32.totalorder %s12, 3
    %p231 = pnand %p229, %p230
    %p232 = pneg %p231
    // Predicated region
    $region9: #{transformer_forward.15} parent=5 // pred_check
      _
    $region10: #{transformer_forward.15} parent=5 // pred_check_branch
      %234 = sbr.rel (%p231) target = $region12
    $region11: #{transformer_forward.15} parent=5 // pred_region
      %s235 = ssub.s32 %s12, 1
      // Predicated region
      $region13: #{transformer_forward.15} parent=11 // pred_check
        %p236 = pneg %p87
      $region14: #{transformer_forward.15} parent=11 // pred_check_branch
        %238 = sbr.rel (%p236) target = $region16
      $region15: #{transformer_forward.15} parent=11 // pred_region
        %s239 = smul.u32 32, %s24
        %p240 = scmp.lt.s32.totalorder %s239, 31
        %s241 = scalar_select %p240, %s239, 31
        %p242 = scmp.lt.s32.totalorder %s23, 0
        %s243 = scalar_select %p242, %s23, 0
        %s244 = sadd.s32 %s243, %s241
        %s245 = smul.addr %s244, 4
        %s246 = scalar_lea.vmem %s1, %s245
        %s247 = smul.u32 32, %s24
      $region16: #{transformer_forward.15} parent=11 // pred_fallthru
        _
      // Predicated region
      $region17: #{transformer_forward.15} parent=11 // pred_check
        %p248 = pneg %p113
      $region18: #{transformer_forward.15} parent=11 // pred_check_branch
        %250 = sbr.rel (%p248) target = $region20
      $region19: #{transformer_forward.15} parent=11 // pred_region
        %p251 = scmp.lt.s32.totalorder %s23, 0
        %s252 = scalar_select %p251, %s23, 0
        %s253 = scalar_lea.vmem %s2, %s252
      $region20: #{transformer_forward.15} parent=11 // pred_fallthru
        _
      // Predicated region
      $region21: #{transformer_forward.15} parent=11 // pred_check
        %p254 = pneg %p167
      $region22: #{transformer_forward.15} parent=11 // pred_check_branch
        %256 = sbr.rel (%p254) target = $region24
      $region23: #{transformer_forward.15} parent=11 // pred_region
        %p257 = scmp.lt.s32.totalorder %s23, 0
        %s258 = scalar_select %p257, %s23, 0
        %s259 = scalar_lea.vmem %s4, %s258
      $region24: #{transformer_forward.15} parent=11 // pred_fallthru
        _
      // Predicated region
      $region25: #{transformer_forward.15} parent=11 // pred_check
        %p260 = pneg %p193
      $region26: #{transformer_forward.15} parent=11 // pred_check_branch
        %262 = sbr.rel (%p260) target = $region28
      $region27: #{transformer_forward.15} parent=11 // pred_region
        %p263 = scmp.lt.s32.totalorder %s23, 0
        %s264 = scalar_select %p263, %s23, 0
        %s265 = scalar_lea.vmem %s5, %s264
      $region28: #{transformer_forward.15} parent=11 // pred_fallthru
        _
    $region12: #{transformer_forward.15} parent=5 // pred_fallthru
      _
    %p266 = scmp.lt.s32.totalorder %s12, 2
    // Predicated region
    $region29: #{transformer_forward.15} parent=5 // pred_check
      %p267 = pneg %p266
    $region30: #{transformer_forward.15} parent=5 // pred_check_branch
      %269 = sbr.rel (%p267) target = $region32
    $region31: #{transformer_forward.15} parent=5 // pred_region
      // Predicated region
      $region33: #{transformer_forward.15} parent=31 // pred_check
        %p270 = pneg %p53
      $region34: #{transformer_forward.15} parent=31 // pred_check_branch
        %272 = sbr.rel (%p270) target = $region36
      $region35: #{transformer_forward.15} parent=31 // pred_region
        %s273 = smul.u32 4, %s19
        %s274 = smul.u32 2, %s21
        %p275 = scmp.lt.s32.totalorder %s273, 7
        %s276 = scalar_select %p275, %s273, 7
        %p277 = scmp.lt.s32.totalorder %s274, 1
        %s278 = scalar_select %p277, %s274, 1
        %s279 = smul.addr %s276, 2
        %s280 = sadd.s32 %s278, %s279
        %s281 = smul.addr %s280, 4
        %s282 = scalar_lea.vmem %s0, %s281
        %s283 = smul.u32 4, %s19
        %s284 = smul.u32 2, %s21
      $region36: #{transformer_forward.15} parent=31 // pred_fallthru
        _
      // Predicated region
      $region37: #{transformer_forward.15} parent=31 // pred_check
        %p285 = pneg %p135
      $region38: #{transformer_forward.15} parent=31 // pred_check_branch
        %287 = sbr.rel (%p285) target = $region40
      $region39: #{transformer_forward.15} parent=31 // pred_region
        %s288 = smul.u32 4, %s19
        %p289 = scmp.lt.s32.totalorder %s288, 7
        %s290 = scalar_select %p289, %s288, 7
        %p291 = scmp.lt.s32.totalorder %s20, 0
        %s292 = scalar_select %p291, %s20, 0
        %s293 = sadd.s32 %s292, %s290
        %s294 = smul.addr %s293, 4
        %s295 = scalar_lea.vmem %s3, %s294
        %s296 = smul.u32 4, %s19
      $region40: #{transformer_forward.15} parent=31 // pred_fallthru
        _
    $region32: #{transformer_forward.15} parent=5 // pred_fallthru
      _
    %p297 = scmp.le.s32.totalorder 1, %s12
    %p298 = scmp.lt.s32.totalorder %s12, 3
    %p299 = pnand %p297, %p298
    %p300 = pneg %p299
    // Predicated region
    $region41: #{transformer_forward.15} parent=5 // pred_check
      _
    $region42: #{transformer_forward.15} parent=5 // pred_check_branch
      %302 = sbr.rel (%p299) target = $region44
    $region43: #{transformer_forward.15} parent=5 // pred_region
      %s303 = ssub.s32 %s12, 1
      %s304 = smul.u32 4, %s22
      %s305 = smul.u32 2, %s24
      %p306 = scmp.lt.s32.totalorder %s304, 7
      %s307 = scalar_select %p306, %s304, 7
      %p308 = scmp.lt.s32.totalorder %s305, 1
      %s309 = scalar_select %p308, %s305, 1
      %s310 = smul.addr %s307, 2
      %s311 = sadd.s32 %s309, %s310
      %s312 = smul.addr %s311, 4
      %s313 = scalar_lea.vmem %s0, %s312
      %p314 = pneg %p59
      %p315 = pneg %p56
      %s316 = smul.u32 32, %s24
      %p317 = scmp.lt.s32.totalorder %s316, 31
      %s318 = scalar_select %p317, %s316, 31
      %p319 = scmp.lt.s32.totalorder %s23, 0
      %s320 = scalar_select %p319, %s23, 0
      %s321 = sadd.s32 %s320, %s318
      %s322 = smul.addr %s321, 4
      %s323 = scalar_lea.vmem %s1, %s322
      %p324 = pneg %p87
      %p325 = pneg %p84
      %p326 = scmp.lt.s32.totalorder %s23, 0
      %s327 = scalar_select %p326, %s23, 0
      %s328 = scalar_lea.vmem %s2, %s327
      %p329 = pneg %p113
      %p330 = pneg %p110
      %s331 = smul.u32 4, %s22
      %p332 = scmp.lt.s32.totalorder %s331, 7
      %s333 = scalar_select %p332, %s331, 7
      %p334 = scmp.lt.s32.totalorder %s23, 0
      %s335 = scalar_select %p334, %s23, 0
      %s336 = sadd.s32 %s335, %s333
      %s337 = smul.addr %s336, 4
      %s338 = scalar_lea.vmem %s3, %s337
      %p339 = pneg %p141
      %p340 = pneg %p138
      %p341 = scmp.lt.s32.totalorder %s23, 0
      %s342 = scalar_select %p341, %s23, 0
      %s343 = scalar_lea.vmem %s4, %s342
      %p344 = pneg %p167
      %p345 = pneg %p164
      %p346 = scmp.lt.s32.totalorder %s23, 0
      %s347 = scalar_select %p346, %s23, 0
      %s348 = scalar_lea.vmem %s5, %s347
      %p349 = pneg %p193
      %p350 = pneg %p190
      %p351 = pneg %p221
      %p352 = pneg %p218
      %s353 = smul.u32 4, %s22
      %p354 = scmp.lt.s32.totalorder %s353, 7
      %s355 = scalar_select %p354, %s353, 7
      %p356 = scmp.lt.s32.totalorder %s23, 0
      %s357 = scalar_select %p356, %s23, 0
      %s358 = sadd.s32 %s357, %s355
      %s359 = smul.addr %s358, 4
      %s360 = scalar_lea.vmem %s6, %s359
      %s361 = smul.u32 4, %s22
      %s362 = smul.u32 2, %s24
      %p363 = scmp.lt.s32.totalorder %s361, 7
      %s364 = scalar_select %p363, %s361, 7
      %p365 = scmp.lt.s32.totalorder %s362, 1
      %s366 = scalar_select %p365, %s362, 1
      %s367 = smul.addr %s364, 2
      %s368 = sadd.s32 %s366, %s367
      %s369 = smul.addr %s368, 4
      %s370 = scalar_lea.vmem %s0, %s369
      %s371 = smul.u32 4, %s22
      %s372 = smul.u32 2, %s24
      %s373 = smul.u32 32, %s24
      %p374 = scmp.lt.s32.totalorder %s373, 31
      %s375 = scalar_select %p374, %s373, 31
      %p376 = scmp.lt.s32.totalorder %s23, 0
      %s377 = scalar_select %p376, %s23, 0
      %s378 = sadd.s32 %s377, %s375
      %s379 = smul.addr %s378, 4
      %s380 = scalar_lea.vmem %s1, %s379
      %s381 = smul.u32 32, %s24
      %p382 = scmp.lt.s32.totalorder %s23, 0
      %s383 = scalar_select %p382, %s23, 0
      %s384 = scalar_lea.vmem %s2, %s383
      %s385 = smul.u32 4, %s22
      %p386 = scmp.lt.s32.totalorder %s385, 7
      %s387 = scalar_select %p386, %s385, 7
      %p388 = scmp.lt.s32.totalorder %s23, 0
      %s389 = scalar_select %p388, %s23, 0
      %s390 = sadd.s32 %s389, %s387
      %s391 = smul.addr %s390, 4
      %s392 = scalar_lea.vmem %s3, %s391
      %s393 = smul.u32 4, %s22
      %p394 = scmp.lt.s32.totalorder %s23, 0
      %s395 = scalar_select %p394, %s23, 0
      %s396 = scalar_lea.vmem %s4, %s395
      %p397 = scmp.lt.s32.totalorder %s23, 0
      %s398 = scalar_select %p397, %s23, 0
      %s399 = scalar_lea.vmem %s5, %s398
      %s400 = smul.u32 4, %s22
      %p401 = scmp.lt.s32.totalorder %s400, 7
      %s402 = scalar_select %p401, %s400, 7
      %p403 = scmp.lt.s32.totalorder %s23, 0
      %s404 = scalar_select %p403, %s23, 0
      %s405 = sadd.s32 %s404, %s402
      %s406 = smul.addr %s405, 4
      %s407 = scalar_lea.vmem %s6, %s406
      %s408 = smul.u32 4, %s22
      %v410 = vld [vmem:[%s370] sm:$0xff]
      %v411 = vld [vmem:[%s370 + $0x8] sm:$0xff]
      %v412 = vld [vmem:[%s370 + $0x10] sm:$0xff]
      %v413 = vld [vmem:[%s370 + $0x18] sm:$0xff]
      %v414 = vld [vmem:[%s380] sm:$0xf]
      %v415 = vld [vmem:[%s380 + $0x4] sm:$0xf]
      %v416 = vld [vmem:[%s380 + $0x8] sm:$0xf]
      %v417 = vld [vmem:[%s380 + $0xc] sm:$0xf]
      %v418 = vld [vmem:[%s380 + $0x10] sm:$0xf]
      %v419 = vld [vmem:[%s380 + $0x14] sm:$0xf]
      %v420 = vld [vmem:[%s380 + $0x18] sm:$0xf]
      %v421 = vld [vmem:[%s380 + $0x1c] sm:$0xf]
      %v422 = vld [vmem:[%s380 + $0x20] sm:$0xf]
      %v423 = vld [vmem:[%s380 + $0x24] sm:$0xf]
      %v424 = vld [vmem:[%s380 + $0x28] sm:$0xf]
      %v425 = vld [vmem:[%s380 + $0x2c] sm:$0xf]
      %v426 = vld [vmem:[%s380 + $0x30] sm:$0xf]
      %v427 = vld [vmem:[%s380 + $0x34] sm:$0xf]
      %v428 = vld [vmem:[%s380 + $0x38] sm:$0xf]
      %v429 = vld [vmem:[%s380 + $0x3c] sm:$0xf]
      %v430 = vld [vmem:[%s380 + $0x40] sm:$0xf]
      %v431 = vld [vmem:[%s380 + $0x44] sm:$0xf]
      %v432 = vld [vmem:[%s380 + $0x48] sm:$0xf]
      %v433 = vld [vmem:[%s380 + $0x4c] sm:$0xf]
      %v434 = vld [vmem:[%s380 + $0x50] sm:$0xf]
      %v435 = vld [vmem:[%s380 + $0x54] sm:$0xf]
      %v436 = vld [vmem:[%s380 + $0x58] sm:$0xf]
      %v437 = vld [vmem:[%s380 + $0x5c] sm:$0xf]
      %v438 = vld [vmem:[%s380 + $0x60] sm:$0xf]
      %v439 = vld [vmem:[%s380 + $0x64] sm:$0xf]
      %v440 = vld [vmem:[%s380 + $0x68] sm:$0xf]
      %v441 = vld [vmem:[%s380 + $0x6c] sm:$0xf]
      %v442 = vld [vmem:[%s380 + $0x70] sm:$0xf]
      %v443 = vld [vmem:[%s380 + $0x74] sm:$0xf]
      %v444 = vld [vmem:[%s380 + $0x78] sm:$0xf]
      %v445 = vld [vmem:[%s380 + $0x7c] sm:$0xf]
      %v446 = vld [vmem:[%s384] sm:$0x1]
      %v448 = vlaneseq
      %v449 = vshrl.u32 %v448, 7
      %v450 = vsub.s32 0, %v449
      %v451 = vrot.slane %v446, %v450
      %v457 = vunpack.c.l.b16 %v410
      %v458 = vunpack.c.h.b16 %v410
      %v459 = vunpack.c.l.b16 %v411
      %v460 = vunpack.c.h.b16 %v411
      %v461 = vunpack.c.l.b16 %v412
      %v462 = vunpack.c.h.b16 %v412
      %v463 = vunpack.c.l.b16 %v413
      %v464 = vunpack.c.h.b16 %v413
      %v465 = vpack.c.b16 %v459, %v457
      %v466 = vpack.c.b16 %v460, %v458
      %v467 = vpack.c.b16 %v463, %v461
      %v468 = vpack.c.b16 %v464, %v462
      %v505 = vunpack.c.l.b16 %v414
      %v506 = vunpack.c.l.b16 %v415
      %v507 = vunpack.c.l.b16 %v416
      %v508 = vunpack.c.l.b16 %v417
      %v509 = vunpack.c.l.b16 %v418
      %v510 = vunpack.c.l.b16 %v419
      %v511 = vunpack.c.l.b16 %v420
      %v512 = vunpack.c.l.b16 %v421
      %v513 = vunpack.c.l.b16 %v422
      %v514 = vunpack.c.l.b16 %v423
      %v515 = vunpack.c.l.b16 %v424
      %v516 = vunpack.c.l.b16 %v425
      %v517 = vunpack.c.l.b16 %v426
      %v518 = vunpack.c.l.b16 %v427
      %v519 = vunpack.c.l.b16 %v428
      %v520 = vunpack.c.l.b16 %v429
      %v521 = vunpack.c.l.b16 %v430
      %v522 = vunpack.c.l.b16 %v431
      %v523 = vunpack.c.l.b16 %v432
      %v524 = vunpack.c.l.b16 %v433
      %v525 = vunpack.c.l.b16 %v434
      %v526 = vunpack.c.l.b16 %v435
      %v527 = vunpack.c.l.b16 %v436
      %v528 = vunpack.c.l.b16 %v437
      %v529 = vunpack.c.l.b16 %v438
      %v530 = vunpack.c.l.b16 %v439
      %v531 = vunpack.c.l.b16 %v440
      %v532 = vunpack.c.l.b16 %v441
      %v533 = vunpack.c.l.b16 %v442
      %v534 = vunpack.c.l.b16 %v443
      %v535 = vunpack.c.l.b16 %v444
      %v536 = vunpack.c.l.b16 %v445
      %v537 = vpack.c.b16 %v506, %v505
      %v538 = vpack.c.b16 %v508, %v507
      %v539 = vpack.c.b16 %v510, %v509
      %v540 = vpack.c.b16 %v512, %v511
      %v541 = vpack.c.b16 %v514, %v513
      %v542 = vpack.c.b16 %v516, %v515
      %v543 = vpack.c.b16 %v518, %v517
      %v544 = vpack.c.b16 %v520, %v519
      %v545 = vpack.c.b16 %v522, %v521
      %v546 = vpack.c.b16 %v524, %v523
      %v547 = vpack.c.b16 %v526, %v525
      %v548 = vpack.c.b16 %v528, %v527
      %v549 = vpack.c.b16 %v530, %v529
      %v550 = vpack.c.b16 %v532, %v531
      %v551 = vpack.c.b16 %v534, %v533
      %v552 = vpack.c.b16 %v536, %v535
      %569 = vmatprep.subr.bf16.mxu0 0
      %570 = vmatpush1.bf16.msra.mxu0 %v544
      %571 = vmatprep.subr.bf16.mxu0 0
      %572 = vmatpush1.bf16.msra.mxu0 %v543
      %573 = vmatprep.subr.bf16.mxu0 0
      %574 = vmatpush1.bf16.msra.mxu0 %v542
      %575 = vmatprep.subr.bf16.mxu0 0
      %576 = vmatpush1.bf16.msra.mxu0 %v541
      %577 = vmatprep.subr.bf16.mxu0 0
      %578 = vmatpush1.bf16.msra.mxu0 %v540
      %579 = vmatprep.subr.bf16.mxu0 0
      %580 = vmatpush1.bf16.msra.mxu0 %v539
      %581 = vmatprep.subr.bf16.mxu0 0
      %582 = vmatpush1.bf16.msra.mxu0 %v538
      %583 = vmatprep.subr.bf16.mxu0 0
      %584 = vmatpush1.bf16.msra.mxu0 %v537
      %585 = vmatprep.subr.bf16.mxu0 0
      %586 = vmatpush2.bf16.msra.mxu0 %v552
      %587 = vmatprep.subr.bf16.mxu0 0
      %588 = vmatpush2.bf16.msra.mxu0 %v551
      %589 = vmatprep.subr.bf16.mxu0 0
      %590 = vmatpush2.bf16.msra.mxu0 %v550
      %591 = vmatprep.subr.bf16.mxu0 0
      %592 = vmatpush2.bf16.msra.mxu0 %v549
      %593 = vmatprep.subr.bf16.mxu0 0
      %594 = vmatpush2.bf16.msra.mxu0 %v548
      %595 = vmatprep.subr.bf16.mxu0 0
      %596 = vmatpush2.bf16.msra.mxu0 %v547
      %597 = vmatprep.subr.bf16.mxu0 0
      %598 = vmatpush2.bf16.msra.mxu0 %v546
      %599 = vmatprep.subr.bf16.mxu0 0
      %600 = vmatpush2.bf16.msra.mxu0 %v545
      %601 = vmatprep.mubr.bf16.mxu0 %v466
      %602 = vmatmul.mubr.bf16.gmra.mxu0 %v465
      %v603 = vpop.f32.mrf.mxu0
      %v604 = vadd.f32 %v451, %v603
      %v605 = vpop.f32.mrf.mxu0
      %v606 = vpop.f32.mrf.mxu0
      %v607 = vadd.f32 %v451, %v606
      %v608 = vpop.f32.mrf.mxu0
      %609 = vmatprep.mubr.bf16.mxu0 %v468
      %610 = vmatmul.mubr.bf16.gmra.mxu0 %v467
      %v611 = vpop.f32.mrf.mxu0
      %v612 = vadd.f32 %v451, %v611
      %v613 = vpop.f32.mrf.mxu0
      %v614 = vpop.f32.mrf.mxu0
      %v615 = vadd.f32 %v451, %v614
      %v616 = vpop.f32.mrf.mxu0
      %617 = vdwg.mxu0
      %v618 = vld [vmem:[%s392] sm:$0xf]
      %v619 = vld [vmem:[%s392 + $0x4] sm:$0xf]
      %v620 = vld [vmem:[%s392 + $0x8] sm:$0xf]
      %v621 = vld [vmem:[%s392 + $0xc] sm:$0xf]
      %v622 = vunpack.c.l.bf16 %v618
      %v623 = vunpack.c.l.bf16 %v619
      %v624 = vunpack.c.l.bf16 %v620
      %v625 = vunpack.c.l.bf16 %v621
      %v626 = vadd.f32 %v604, %v622
      %v627 = vadd.f32 %v607, %v623
      %v628 = vadd.f32 %v612, %v624
      %v629 = vadd.f32 %v615, %v625
      %630 = vadd.xlane.f32.xlu0 %v626
      %v631 = vpop.xlane.xlu0 %630
      %632 = vadd.xlane.f32.xlu0 %v627
      %v633 = vpop.xlane.xlu0 %632
      %634 = vadd.xlane.f32.xlu0 %v628
      %v635 = vpop.xlane.xlu0 %634
      %636 = vadd.xlane.f32.xlu0 %v629
      %v637 = vpop.xlane.xlu0 %636
      %v638 = vrcp.pop 128.0
      %v639 = vmul.f32 %v631, %v638
      %v640 = vmul.f32 %v633, %v638
      %v641 = vmul.f32 %v635, %v638
      %v642 = vmul.f32 %v637, %v638
      %v643 = vsub.f32 %v626, %v639
      %v644 = vsub.f32 %v627, %v640
      %v645 = vsub.f32 %v628, %v641
      %v646 = vsub.f32 %v629, %v642
      %v647 = vmul.f32 %v643, %v643
      %v648 = vmul.f32 %v644, %v644
      %v649 = vmul.f32 %v645, %v645
      %v650 = vmul.f32 %v646, %v646
      %651 = vadd.xlane.f32.xlu0 %v647
      %v652 = vpop.xlane.xlu0 %651
      %653 = vadd.xlane.f32.xlu0 %v648
      %v654 = vpop.xlane.xlu0 %653
      %655 = vadd.xlane.f32.xlu0 %v649
      %v656 = vpop.xlane.xlu0 %655
      %657 = vadd.xlane.f32.xlu0 %v650
      %v658 = vpop.xlane.xlu0 %657
      %v659 = vmul.f32 %v652, %v638
      %v660 = vmul.f32 %v654, %v638
      %v661 = vmul.f32 %v656, %v638
      %v662 = vmul.f32 %v658, %v638
      %v663 = vadd.f32 %v659, 1e-05
      %v664 = vadd.f32 %v660, 1e-05
      %v665 = vadd.f32 %v661, 1e-05
      %v666 = vadd.f32 %v662, 1e-05
      %v667 = vrsqrt.pop %v663
      %v668 = vrsqrt.pop %v664
      %v669 = vrsqrt.pop %v665
      %v670 = vrsqrt.pop %v666
      %v671 = vmul.f32 %v643, %v667
      %v672 = vmul.f32 %v644, %v668
      %v673 = vmul.f32 %v645, %v669
      %v674 = vmul.f32 %v646, %v670
      %v675 = vld [vmem:[%s396] sm:$0x1]
      %v677 = vlaneseq
      %v678 = vshrl.u32 %v677, 7
      %v679 = vsub.s32 0, %v678
      %v680 = vrot.slane %v675, %v679
      %v682 = vmul.f32 %v671, %v680
      %v683 = vmul.f32 %v672, %v680
      %v684 = vmul.f32 %v673, %v680
      %v685 = vmul.f32 %v674, %v680
      %v686 = vld [vmem:[%s399] sm:$0x1]
      %v688 = vlaneseq
      %v689 = vshrl.u32 %v688, 7
      %v690 = vsub.s32 0, %v689
      %v691 = vrot.slane %v686, %v690
      %v693 = vadd.f32 %v682, %v691
      %v694 = vadd.f32 %v683, %v691
      %v695 = vadd.f32 %v684, %v691
      %v696 = vadd.f32 %v685, %v691
      %v697 = vpack.c.bf16 %v694, %v693
      %v698 = vpack.c.bf16 %v696, %v695
      %v701 = vunpack.c.l.b16 %v697
      %v702 = vunpack.c.h.b16 %v697
      %v703 = vunpack.c.l.b16 %v698
      %v704 = vunpack.c.h.b16 %v698
      %v705 = vpack.c.b16 %v701, %v701
      %v706 = vpack.c.b16 %v702, %v702
      %v707 = vpack.c.b16 %v703, %v703
      %v708 = vpack.c.b16 %v704, %v704
      %713 = vst [vmem:[%s407] sm:$0xf] %v705
      %714 = vst [vmem:[%s407 + $0x4] sm:$0xf] %v706
      %715 = vst [vmem:[%s407 + $0x8] sm:$0xf] %v707
      %716 = vst [vmem:[%s407 + $0xc] sm:$0xf] %v708
      %s717 = smul.u32 4, %s22
      %p718 = scmp.lt.s32.totalorder %s717, 7
      %s719 = scalar_select %p718, %s717, 7
      %p720 = scmp.lt.s32.totalorder %s23, 0
      %s721 = scalar_select %p720, %s23, 0
      %s722 = sadd.s32 %s721, %s719
      %s723 = smul.addr %s722, 4
      %s724 = scalar_lea.vmem %s6, %s723
      // Predicated region
      $region45: #{transformer_forward.15} parent=43 // pred_check
        %p725 = pneg %p218
      $region46: #{transformer_forward.15} parent=43 // pred_check_branch
        %727 = sbr.rel (%p725) target = $region48
      $region47: #{transformer_forward.15} parent=43 // pred_region
        %s728 = smul.u32 4, %s22
      $region48: #{transformer_forward.15} parent=43 // pred_fallthru
        _
    $region44: #{transformer_forward.15} parent=5 // pred_fallthru
      _
    %p729 = scmp.le.s32.totalorder 2, %s12
    // Predicated region
    $region49: #{transformer_forward.15} parent=5 // pred_check
      %p730 = pneg %p729
    $region50: #{transformer_forward.15} parent=5 // pred_check_branch
      %732 = sbr.rel (%p730) target = $region52
    $region51: #{transformer_forward.15} parent=5 // pred_region
      %s733 = ssub.s32 %s12, 2
      // Predicated region
      $region53: #{transformer_forward.15} parent=51 // pred_check
        %p734 = pneg %p224
      $region54: #{transformer_forward.15} parent=51 // pred_check_branch
        %736 = sbr.rel (%p734) target = $region56
      $region55: #{transformer_forward.15} parent=51 // pred_region
        %s737 = smul.u32 4, %s25
        %p738 = scmp.lt.s32.totalorder %s737, 7
        %s739 = scalar_select %p738, %s737, 7
        %p740 = scmp.lt.s32.totalorder %s26, 0
        %s741 = scalar_select %p740, %s26, 0
        %s742 = sadd.s32 %s741, %s739
        %s743 = smul.addr %s742, 4
        %s744 = scalar_lea.vmem %s6, %s743
      $region56: #{transformer_forward.15} parent=51 // pred_fallthru
        _
    $region52: #{transformer_forward.15} parent=5 // pred_fallthru
      _
  $region6: #{transformer_forward.15} parent=0 // loop_footer
    %s16 = sadd.s32 1, %s12
  $region7: #{transformer_forward.15} parent=0 // loop_footer_branch
    %11 = sbr.rel target = $region3
  $region8: #{transformer_forward.15} parent=0 // loop_exit
    _

</llo_original>
